<compile_context>
chip_gen: v7x
topology: tpu7x:2x2x1
jax: 0.10.0
libtpu: 0.0.40
codegen_flags: <defaults>
</compile_context>

<pallas_src>
import functools

import jax
import jax.numpy as jnp
from jax.experimental import pallas as pl
from jax.experimental.pallas import tpu as pltpu

KSIZE = 7
PAD = KSIZE // 2  # 3


def _round_up(a, b):
    return (a + b - 1) // b * b


def spatial_attention_kernel(x_ref, w_ref, o_ref, pad_ref, *, H, W, C, NB, WP, WL):
    # x_ref  : (NB, C, H*W)   lane-dense input block (VMEM)
    # w_ref  : (98,)          flat conv weights in SMEM (index = c*49 + dy*7 + dx)
    # o_ref  : (NB, 1, H, W)  sigmoid(conv) output block
    # pad_ref: (2, HpS, WL)   zero-padded, image-packed avg/max conv slab (VMEM)
    HW = H * W

    # Hoist the 98 SMEM scalar weight loads out of the image / tap loops.
    wts = [w_ref[i] for i in range(2 * KSIZE * KSIZE)]

    # Zero the slab every step: halo rows/lanes and the inter-image gaps must
    # read 0 (this reproduces the Conv2d zero padding). ~6 vreg stores, and it
    # stays megacore-safe on v7x (no program_id==0 guard).
    pad_ref[...] = jnp.zeros_like(pad_ref)

    inv_c = jnp.float32(1.0 / C)
    CCH = 8  # channel chunk (sublanes) per accumulation step

    for b in range(NB):
        # --- channel mean / max on the lane-dense (C, H*W) slab --------------
        s = None
        m = None
        for c0 in range(0, C, CCH):
            cc = min(CCH, C - c0)
            xc = x_ref[b, c0:c0 + cc, :].astype(jnp.float32)      # (cc, HW)
            ps = jnp.sum(xc, axis=0, keepdims=True)               # (1, HW)
            pm = jnp.max(xc, axis=0, keepdims=True)               # (1, HW)
            s = ps if s is None else s + ps
            m = pm if m is None else jnp.maximum(m, pm)
        avg = s * inv_c                                           # (1, HW)

        # --- scatter the two tiny maps into the packed padded conv slab ------
        # Image b's interior occupies lanes [b*WP+PAD, b*WP+PAD+W); the PAD
        # lanes on each side (and all unwritten lanes) stay zero.
        off = b * WP + PAD
        for h in range(H):
            row = slice(h * W, (h + 1) * W)
            pad_ref[0, PAD + h:PAD + h + 1, off:off + W] = avg[:, row]
            pad_ref[1, PAD + h:PAD + h + 1, off:off + W] = m[:, row]

    # --- 2x7x7 conv taps, run ONCE per grid step over the packed slab --------
    # 4 independent partial accumulators fill the 4 VALU slots.
    accs = [jnp.zeros((H, WL), jnp.float32) for _ in range(4)]
    for c in range(2):                                            # [avg, max]
        f = pad_ref[c]                                            # (HpS, WL)
        # Hoisted lane shifts (XLU rolls). shifted[dx][r, l] == f[r, l+dx-PAD];
        # the roll wrap-around only corrupts lanes that are never interior
        # output lanes, so the zero halo / zero gaps do the conv padding.
        shifted = [
            f if dx == PAD else pltpu.roll(f, shift=(PAD - dx) % WL, axis=1)
            for dx in range(KSIZE)
        ]
        for dy in range(KSIZE):
            for dx in range(KSIZE):
                wv = wts[c * KSIZE * KSIZE + dy * KSIZE + dx]     # hoisted sreg
                k = (dy * KSIZE + dx) % 4
                accs[k] = accs[k] + wv * shifted[dx][dy:dy + H, :]
    acc = (accs[0] + accs[1]) + (accs[2] + accs[3])               # (H, WL)

    # sigmoid = 1 / (1 + exp(-x)): exp on the EUP; exact reciprocal to match
    # the f32 reference (use approx=True if ~1e-3 rel error is acceptable).
    y = pl.reciprocal(1.0 + jnp.exp(-acc), approx=False)

    for b in range(NB):
        off = b * WP + PAD
        o_ref[b, 0] = y[:, off:off + W].astype(o_ref.dtype)


def spatial_attention(x, w):
    """x: (N, C, H, W), w: (1, 2, 7, 7) -> (N, 1, H, W)."""
    N, C, H, W = x.shape
    assert w.shape == (1, 2, KSIZE, KSIZE)
    HW = H * W
    WP = W + 2 * PAD                       # per-image lane stride in the slab
    HpS = _round_up(H + 2 * PAD, 8)        # sublane-padded slab height

    itemsize = jnp.dtype(x.dtype).itemsize
    sub = {4: 8, 2: 16, 1: 32}.get(itemsize, 8)
    HWL = _round_up(HW, 128)               # lane-padded flattened row

    # --- per-generation VMEM budget (v7x: 64 MiB phys; v5e/v6e: 128 MiB) -----
    try:
        info = pltpu.get_tpu_info()
        vmem_cap = int(getattr(info, "vmem_capacity_bytes", 0)) or 64 * 1024 * 1024
    except Exception:
        vmem_cap = 64 * 1024 * 1024
    vmem_limit = min(vmem_cap // 2, 64 * 1024 * 1024)
    budget = int(vmem_limit * 0.8)

    def est_bytes(nb):
        # Padded-layout accounting: double-buffered in/out blocks + scratch +
        # in-kernel f32 temporaries (shifted slabs, accumulators, chunk cast).
        wl = _round_up(nb * WP, 128)
        in_blk = nb * _round_up(C, sub) * HWL * itemsize
        out_blk = nb * _round_up(H, 8) * _round_up(W, 128) * itemsize
        pad_scr = 2 * HpS * wl * 4
        temps = (7 * HpS * wl + 4 * _round_up(H, 8) * wl + 3 * 8 * HWL) * 4
        return 2 * (in_blk + out_blk) + pad_scr + temps

    # Images packed per grid step: divisor of N, fits VMEM, bounded unroll,
    # and (when possible) grid >= 2 so both v7x TensorCores get work.
    max_pack = max(1, min(2048 // WP, 16))
    divisors = [d for d in range(1, N + 1) if N % d == 0]
    feasible = [d for d in divisors if d <= max_pack and est_bytes(d) <= budget]
    if not feasible:
        feasible = [1]
    pref = [d for d in feasible if N // d >= 2] or feasible
    nb = max(pref)
    WL = _round_up(nb * WP, 128)           # packed slab lane width

    w_flat = w.reshape(-1).astype(jnp.float32)     # (98,) SMEM scalar taps
    x_flat = x.reshape(N, C, HW)                   # lane-dense channel slabs

    kern = functools.partial(spatial_attention_kernel,
                             H=H, W=W, C=C, NB=nb, WP=WP, WL=WL)
    return pl.pallas_call(
        kern,
        out_shape=jax.ShapeDtypeStruct((N, 1, H, W), x.dtype),
        grid_spec=pltpu.PrefetchScalarGridSpec(
            num_scalar_prefetch=0,
            grid=(N // nb,),
            in_specs=[
                pl.BlockSpec((nb, C, HW), lambda n: (n, 0, 0)),
                pl.BlockSpec(memory_space=pltpu.MemorySpace.SMEM),
            ],
            out_specs=pl.BlockSpec((nb, 1, H, W), lambda n: (n, 0, 0, 0)),
            scratch_shapes=[pltpu.VMEM((2, HpS, WL), jnp.float32)],
        ),
        compiler_params=pltpu.CompilerParams(
            dimension_semantics=("parallel",),
            vmem_limit_bytes=vmem_limit),
    )(x_flat, w_flat)


def spatial_attention_reference(x, w):
    avg = jnp.mean(x, axis=1, keepdims=True)
    mx = jnp.max(x, axis=1, keepdims=True)
    f = jnp.concatenate([avg, mx], axis=1)
    y = jax.lax.conv_general_dilated(
        f, w, window_strides=(1, 1),
        padding=((PAD, PAD), (PAD, PAD)),
        dimension_numbers=("NCHW", "OIHW", "NCHW"))
    return jax.nn.sigmoid(y)


if __name__ == "__main__":
    key = jax.random.PRNGKey(0)
    kx, kw = jax.random.split(key)

    # N=4 so the kernel runs with nb=2 (two images packed per conv slab) and
    # grid=2 (exercises the megacore-friendly split).
    N, C, H, W = 4, 4, 16, 16
    x = jax.random.normal(kx, (N, C, H, W), dtype=jnp.float32)
    # Deterministic "kaiming-ish" init for Conv2d(2, 1, 7, bias=False): (O,I,kH,kW)
    fan_in = 2 * KSIZE * KSIZE
    w = jax.random.normal(kw, (1, 2, KSIZE, KSIZE), dtype=jnp.float32) / jnp.sqrt(fan_in)

    out = jax.block_until_ready(spatial_attention(x, w))

    ref = spatial_attention_reference(x, w)
    if not jnp.allclose(out, ref, atol=1e-5, rtol=1e-5):
        raise AssertionError("Pallas kernel does not match reference")

    print("KERNEL_OK")
</pallas_src>

<mosaic_0001>
module attributes {stable_mosaic.version = 11 : i64} {
  func.func @spatial_attention_kernel(%arg0: i32, %arg1: memref<2x4x256xf32, #tpu.memory_space<vmem>>, %arg2: memref<98xf32, #tpu.memory_space<smem>>, %arg3: memref<2x1x16x16xf32, #tpu.memory_space<vmem>>, %arg4: memref<2x24x128xf32, #tpu.memory_space<vmem>>) attributes {dimension_semantics = [#tpu.dimension_semantics<parallel>], iteration_bounds = array<i64: 2>, scalar_prefetch = 0 : i64, scratch_operands = 1 : i64, tpu.core_type = #tpu.core_type<tc>, window_params = [{transform_indices = @transform_0, window_bounds = array<i64: 2, 4, 256>}, {transform_indices = @transform_1, window_bounds = array<i64: 98>}, {transform_indices = @transform_2, window_bounds = array<i64: 2, 1, 16, 16>}]} {
    %c0 = arith.constant 0 : index
    %0 = memref.load %arg2[%c0] : memref<98xf32, #tpu.memory_space<smem>>
    %c1 = arith.constant 1 : index
    %1 = memref.load %arg2[%c1] : memref<98xf32, #tpu.memory_space<smem>>
    %c2 = arith.constant 2 : index
    %2 = memref.load %arg2[%c2] : memref<98xf32, #tpu.memory_space<smem>>
    %c3 = arith.constant 3 : index
    %3 = memref.load %arg2[%c3] : memref<98xf32, #tpu.memory_space<smem>>
    %c4 = arith.constant 4 : index
    %4 = memref.load %arg2[%c4] : memref<98xf32, #tpu.memory_space<smem>>
    %c5 = arith.constant 5 : index
    %5 = memref.load %arg2[%c5] : memref<98xf32, #tpu.memory_space<smem>>
    %c6 = arith.constant 6 : index
    %6 = memref.load %arg2[%c6] : memref<98xf32, #tpu.memory_space<smem>>
    %c7 = arith.constant 7 : index
    %7 = memref.load %arg2[%c7] : memref<98xf32, #tpu.memory_space<smem>>
    %c8 = arith.constant 8 : index
    %8 = memref.load %arg2[%c8] : memref<98xf32, #tpu.memory_space<smem>>
    %c9 = arith.constant 9 : index
    %9 = memref.load %arg2[%c9] : memref<98xf32, #tpu.memory_space<smem>>
    %c10 = arith.constant 10 : index
    %10 = memref.load %arg2[%c10] : memref<98xf32, #tpu.memory_space<smem>>
    %c11 = arith.constant 11 : index
    %11 = memref.load %arg2[%c11] : memref<98xf32, #tpu.memory_space<smem>>
    %c12 = arith.constant 12 : index
    %12 = memref.load %arg2[%c12] : memref<98xf32, #tpu.memory_space<smem>>
    %c13 = arith.constant 13 : index
    %13 = memref.load %arg2[%c13] : memref<98xf32, #tpu.memory_space<smem>>
    %c14 = arith.constant 14 : index
    %14 = memref.load %arg2[%c14] : memref<98xf32, #tpu.memory_space<smem>>
    %c15 = arith.constant 15 : index
    %15 = memref.load %arg2[%c15] : memref<98xf32, #tpu.memory_space<smem>>
    %c16 = arith.constant 16 : index
    %16 = memref.load %arg2[%c16] : memref<98xf32, #tpu.memory_space<smem>>
    %c17 = arith.constant 17 : index
    %17 = memref.load %arg2[%c17] : memref<98xf32, #tpu.memory_space<smem>>
    %c18 = arith.constant 18 : index
    %18 = memref.load %arg2[%c18] : memref<98xf32, #tpu.memory_space<smem>>
    %c19 = arith.constant 19 : index
    %19 = memref.load %arg2[%c19] : memref<98xf32, #tpu.memory_space<smem>>
    %c20 = arith.constant 20 : index
    %20 = memref.load %arg2[%c20] : memref<98xf32, #tpu.memory_space<smem>>
    %c21 = arith.constant 21 : index
    %21 = memref.load %arg2[%c21] : memref<98xf32, #tpu.memory_space<smem>>
    %c22 = arith.constant 22 : index
    %22 = memref.load %arg2[%c22] : memref<98xf32, #tpu.memory_space<smem>>
    %c23 = arith.constant 23 : index
    %23 = memref.load %arg2[%c23] : memref<98xf32, #tpu.memory_space<smem>>
    %c24 = arith.constant 24 : index
    %24 = memref.load %arg2[%c24] : memref<98xf32, #tpu.memory_space<smem>>
    %c25 = arith.constant 25 : index
    %25 = memref.load %arg2[%c25] : memref<98xf32, #tpu.memory_space<smem>>
    %c26 = arith.constant 26 : index
    %26 = memref.load %arg2[%c26] : memref<98xf32, #tpu.memory_space<smem>>
    %c27 = arith.constant 27 : index
    %27 = memref.load %arg2[%c27] : memref<98xf32, #tpu.memory_space<smem>>
    %c28 = arith.constant 28 : index
    %28 = memref.load %arg2[%c28] : memref<98xf32, #tpu.memory_space<smem>>
    %c29 = arith.constant 29 : index
    %29 = memref.load %arg2[%c29] : memref<98xf32, #tpu.memory_space<smem>>
    %c30 = arith.constant 30 : index
    %30 = memref.load %arg2[%c30] : memref<98xf32, #tpu.memory_space<smem>>
    %c31 = arith.constant 31 : index
    %31 = memref.load %arg2[%c31] : memref<98xf32, #tpu.memory_space<smem>>
    %c32 = arith.constant 32 : index
    %32 = memref.load %arg2[%c32] : memref<98xf32, #tpu.memory_space<smem>>
    %c33 = arith.constant 33 : index
    %33 = memref.load %arg2[%c33] : memref<98xf32, #tpu.memory_space<smem>>
    %c34 = arith.constant 34 : index
    %34 = memref.load %arg2[%c34] : memref<98xf32, #tpu.memory_space<smem>>
    %c35 = arith.constant 35 : index
    %35 = memref.load %arg2[%c35] : memref<98xf32, #tpu.memory_space<smem>>
    %c36 = arith.constant 36 : index
    %36 = memref.load %arg2[%c36] : memref<98xf32, #tpu.memory_space<smem>>
    %c37 = arith.constant 37 : index
    %37 = memref.load %arg2[%c37] : memref<98xf32, #tpu.memory_space<smem>>
    %c38 = arith.constant 38 : index
    %38 = memref.load %arg2[%c38] : memref<98xf32, #tpu.memory_space<smem>>
    %c39 = arith.constant 39 : index
    %39 = memref.load %arg2[%c39] : memref<98xf32, #tpu.memory_space<smem>>
    %c40 = arith.constant 40 : index
    %40 = memref.load %arg2[%c40] : memref<98xf32, #tpu.memory_space<smem>>
    %c41 = arith.constant 41 : index
    %41 = memref.load %arg2[%c41] : memref<98xf32, #tpu.memory_space<smem>>
    %c42 = arith.constant 42 : index
    %42 = memref.load %arg2[%c42] : memref<98xf32, #tpu.memory_space<smem>>
    %c43 = arith.constant 43 : index
    %43 = memref.load %arg2[%c43] : memref<98xf32, #tpu.memory_space<smem>>
    %c44 = arith.constant 44 : index
    %44 = memref.load %arg2[%c44] : memref<98xf32, #tpu.memory_space<smem>>
    %c45 = arith.constant 45 : index
    %45 = memref.load %arg2[%c45] : memref<98xf32, #tpu.memory_space<smem>>
    %c46 = arith.constant 46 : index
    %46 = memref.load %arg2[%c46] : memref<98xf32, #tpu.memory_space<smem>>
    %c47 = arith.constant 47 : index
    %47 = memref.load %arg2[%c47] : memref<98xf32, #tpu.memory_space<smem>>
    %c48 = arith.constant 48 : index
    %48 = memref.load %arg2[%c48] : memref<98xf32, #tpu.memory_space<smem>>
    %c49 = arith.constant 49 : index
    %49 = memref.load %arg2[%c49] : memref<98xf32, #tpu.memory_space<smem>>
    %c50 = arith.constant 50 : index
    %50 = memref.load %arg2[%c50] : memref<98xf32, #tpu.memory_space<smem>>
    %c51 = arith.constant 51 : index
    %51 = memref.load %arg2[%c51] : memref<98xf32, #tpu.memory_space<smem>>
    %c52 = arith.constant 52 : index
    %52 = memref.load %arg2[%c52] : memref<98xf32, #tpu.memory_space<smem>>
    %c53 = arith.constant 53 : index
    %53 = memref.load %arg2[%c53] : memref<98xf32, #tpu.memory_space<smem>>
    %c54 = arith.constant 54 : index
    %54 = memref.load %arg2[%c54] : memref<98xf32, #tpu.memory_space<smem>>
    %c55 = arith.constant 55 : index
    %55 = memref.load %arg2[%c55] : memref<98xf32, #tpu.memory_space<smem>>
    %c56 = arith.constant 56 : index
    %56 = memref.load %arg2[%c56] : memref<98xf32, #tpu.memory_space<smem>>
    %c57 = arith.constant 57 : index
    %57 = memref.load %arg2[%c57] : memref<98xf32, #tpu.memory_space<smem>>
    %c58 = arith.constant 58 : index
    %58 = memref.load %arg2[%c58] : memref<98xf32, #tpu.memory_space<smem>>
    %c59 = arith.constant 59 : index
    %59 = memref.load %arg2[%c59] : memref<98xf32, #tpu.memory_space<smem>>
    %c60 = arith.constant 60 : index
    %60 = memref.load %arg2[%c60] : memref<98xf32, #tpu.memory_space<smem>>
    %c61 = arith.constant 61 : index
    %61 = memref.load %arg2[%c61] : memref<98xf32, #tpu.memory_space<smem>>
    %c62 = arith.constant 62 : index
    %62 = memref.load %arg2[%c62] : memref<98xf32, #tpu.memory_space<smem>>
    %c63 = arith.constant 63 : index
    %63 = memref.load %arg2[%c63] : memref<98xf32, #tpu.memory_space<smem>>
    %c64 = arith.constant 64 : index
    %64 = memref.load %arg2[%c64] : memref<98xf32, #tpu.memory_space<smem>>
    %c65 = arith.constant 65 : index
    %65 = memref.load %arg2[%c65] : memref<98xf32, #tpu.memory_space<smem>>
    %c66 = arith.constant 66 : index
    %66 = memref.load %arg2[%c66] : memref<98xf32, #tpu.memory_space<smem>>
    %c67 = arith.constant 67 : index
    %67 = memref.load %arg2[%c67] : memref<98xf32, #tpu.memory_space<smem>>
    %c68 = arith.constant 68 : index
    %68 = memref.load %arg2[%c68] : memref<98xf32, #tpu.memory_space<smem>>
    %c69 = arith.constant 69 : index
    %69 = memref.load %arg2[%c69] : memref<98xf32, #tpu.memory_space<smem>>
    %c70 = arith.constant 70 : index
    %70 = memref.load %arg2[%c70] : memref<98xf32, #tpu.memory_space<smem>>
    %c71 = arith.constant 71 : index
    %71 = memref.load %arg2[%c71] : memref<98xf32, #tpu.memory_space<smem>>
    %c72 = arith.constant 72 : index
    %72 = memref.load %arg2[%c72] : memref<98xf32, #tpu.memory_space<smem>>
    %c73 = arith.constant 73 : index
    %73 = memref.load %arg2[%c73] : memref<98xf32, #tpu.memory_space<smem>>
    %c74 = arith.constant 74 : index
    %74 = memref.load %arg2[%c74] : memref<98xf32, #tpu.memory_space<smem>>
    %c75 = arith.constant 75 : index
    %75 = memref.load %arg2[%c75] : memref<98xf32, #tpu.memory_space<smem>>
    %c76 = arith.constant 76 : index
    %76 = memref.load %arg2[%c76] : memref<98xf32, #tpu.memory_space<smem>>
    %c77 = arith.constant 77 : index
    %77 = memref.load %arg2[%c77] : memref<98xf32, #tpu.memory_space<smem>>
    %c78 = arith.constant 78 : index
    %78 = memref.load %arg2[%c78] : memref<98xf32, #tpu.memory_space<smem>>
    %c79 = arith.constant 79 : index
    %79 = memref.load %arg2[%c79] : memref<98xf32, #tpu.memory_space<smem>>
    %c80 = arith.constant 80 : index
    %80 = memref.load %arg2[%c80] : memref<98xf32, #tpu.memory_space<smem>>
    %c81 = arith.constant 81 : index
    %81 = memref.load %arg2[%c81] : memref<98xf32, #tpu.memory_space<smem>>
    %c82 = arith.constant 82 : index
    %82 = memref.load %arg2[%c82] : memref<98xf32, #tpu.memory_space<smem>>
    %c83 = arith.constant 83 : index
    %83 = memref.load %arg2[%c83] : memref<98xf32, #tpu.memory_space<smem>>
    %c84 = arith.constant 84 : index
    %84 = memref.load %arg2[%c84] : memref<98xf32, #tpu.memory_space<smem>>
    %c85 = arith.constant 85 : index
    %85 = memref.load %arg2[%c85] : memref<98xf32, #tpu.memory_space<smem>>
    %c86 = arith.constant 86 : index
    %86 = memref.load %arg2[%c86] : memref<98xf32, #tpu.memory_space<smem>>
    %c87 = arith.constant 87 : index
    %87 = memref.load %arg2[%c87] : memref<98xf32, #tpu.memory_space<smem>>
    %c88 = arith.constant 88 : index
    %88 = memref.load %arg2[%c88] : memref<98xf32, #tpu.memory_space<smem>>
    %c89 = arith.constant 89 : index
    %89 = memref.load %arg2[%c89] : memref<98xf32, #tpu.memory_space<smem>>
    %c90 = arith.constant 90 : index
    %90 = memref.load %arg2[%c90] : memref<98xf32, #tpu.memory_space<smem>>
    %c91 = arith.constant 91 : index
    %91 = memref.load %arg2[%c91] : memref<98xf32, #tpu.memory_space<smem>>
    %c92 = arith.constant 92 : index
    %92 = memref.load %arg2[%c92] : memref<98xf32, #tpu.memory_space<smem>>
    %c93 = arith.constant 93 : index
    %93 = memref.load %arg2[%c93] : memref<98xf32, #tpu.memory_space<smem>>
    %c94 = arith.constant 94 : index
    %94 = memref.load %arg2[%c94] : memref<98xf32, #tpu.memory_space<smem>>
    %c95 = arith.constant 95 : index
    %95 = memref.load %arg2[%c95] : memref<98xf32, #tpu.memory_space<smem>>
    %c96 = arith.constant 96 : index
    %96 = memref.load %arg2[%c96] : memref<98xf32, #tpu.memory_space<smem>>
    %c97 = arith.constant 97 : index
    %97 = memref.load %arg2[%c97] : memref<98xf32, #tpu.memory_space<smem>>
    %cst = arith.constant 0.000000e+00 : f32
    %98 = vector.broadcast %cst : f32 to vector<2x24x128xf32>
    %c0_0 = arith.constant 0 : index
    %c0_1 = arith.constant 0 : index
    %c0_2 = arith.constant 0 : index
    %99 = vector.load %arg4[%c0_0, %c0_1, %c0_2] : memref<2x24x128xf32, #tpu.memory_space<vmem>>, vector<2x24x128xf32>
    tpu.vector_store %arg4[%c0_0, %c0_1, %c0_2], %98 {strides = array<i32>} : memref<2x24x128xf32, #tpu.memory_space<vmem>>, vector<2x24x128xf32>,
    %c0_3 = arith.constant 0 : index
    %c0_4 = arith.constant 0 : index
    %c0_5 = arith.constant 0 : index
    %100 = vector.load %arg1[%c0_3, %c0_4, %c0_5] : memref<2x4x256xf32, #tpu.memory_space<vmem>>, vector<1x4x256xf32>
    %101 = vector.shape_cast %100 : vector<1x4x256xf32> to vector<4x256xf32>
    %cst_6 = arith.constant dense<0.000000e+00> : vector<256xf32>
    %102 = vector.multi_reduction <add>, %101, %cst_6 [0] : vector<4x256xf32> to vector<256xf32>
    %103 = vector.shape_cast %102 : vector<256xf32> to vector<1x256xf32>
    %cst_7 = arith.constant dense<0xFF800000> : vector<256xf32>
    %104 = vector.multi_reduction <maximumf>, %101, %cst_7 [0] : vector<4x256xf32> to vector<256xf32>
    %105 = vector.shape_cast %104 : vector<256xf32> to vector<1x256xf32>
    %cst_8 = arith.constant 2.500000e-01 : f32
    %106 = vector.broadcast %cst_8 : f32 to vector<1x256xf32>
    %107 = arith.mulf %103, %106 : vector<1x256xf32>
    %108 = vector.extract_strided_slice %107 {offsets = [0, 0], sizes = [1, 16], strides = [1, 1]} : vector<1x256xf32> to vector<1x16xf32>
    %c0_9 = arith.constant 0 : index
    %c3_10 = arith.constant 3 : index
    %c3_11 = arith.constant 3 : index
    %109 = vector.load %arg4[%c0_9, %c3_10, %c3_11] : memref<2x24x128xf32, #tpu.memory_space<vmem>>, vector<1x1x16xf32>
    %110 = vector.shape_cast %109 : vector<1x1x16xf32> to vector<1x16xf32>
    %111 = vector.shape_cast %108 : vector<1x16xf32> to vector<1x1x16xf32>
    tpu.vector_store %arg4[%c0_9, %c3_10, %c3_11], %111 {strides = array<i32>} : memref<2x24x128xf32, #tpu.memory_space<vmem>>, vector<1x1x16xf32>,
    %112 = vector.extract_strided_slice %105 {offsets = [0, 0], sizes = [1, 16], strides = [1, 1]} : vector<1x256xf32> to vector<1x16xf32>
    %c1_12 = arith.constant 1 : index
    %c3_13 = arith.constant 3 : index
    %c3_14 = arith.constant 3 : index
    %113 = vector.load %arg4[%c1_12, %c3_13, %c3_14] : memref<2x24x128xf32, #tpu.memory_space<vmem>>, vector<1x1x16xf32>
    %114 = vector.shape_cast %113 : vector<1x1x16xf32> to vector<1x16xf32>
    %115 = vector.shape_cast %112 : vector<1x16xf32> to vector<1x1x16xf32>
    tpu.vector_store %arg4[%c1_12, %c3_13, %c3_14], %115 {strides = array<i32>} : memref<2x24x128xf32, #tpu.memory_space<vmem>>, vector<1x1x16xf32>,
    %116 = vector.extract_strided_slice %107 {offsets = [0, 16], sizes = [1, 16], strides = [1, 1]} : vector<1x256xf32> to vector<1x16xf32>
    %c0_15 = arith.constant 0 : index
    %c4_16 = arith.constant 4 : index
    %c3_17 = arith.constant 3 : index
    %117 = vector.load %arg4[%c0_15, %c4_16, %c3_17] : memref<2x24x128xf32, #tpu.memory_space<vmem>>, vector<1x1x16xf32>
    %118 = vector.shape_cast %117 : vector<1x1x16xf32> to vector<1x16xf32>
    %119 = vector.shape_cast %116 : vector<1x16xf32> to vector<1x1x16xf32>
    tpu.vector_store %arg4[%c0_15, %c4_16, %c3_17], %119 {strides = array<i32>} : memref<2x24x128xf32, #tpu.memory_space<vmem>>, vector<1x1x16xf32>,
    %120 = vector.extract_strided_slice %105 {offsets = [0, 16], sizes = [1, 16], strides = [1, 1]} : vector<1x256xf32> to vector<1x16xf32>
    %c1_18 = arith.constant 1 : index
    %c4_19 = arith.constant 4 : index
    %c3_20 = arith.constant 3 : index
    %121 = vector.load %arg4[%c1_18, %c4_19, %c3_20] : memref<2x24x128xf32, #tpu.memory_space<vmem>>, vector<1x1x16xf32>
    %122 = vector.shape_cast %121 : vector<1x1x16xf32> to vector<1x16xf32>
    %123 = vector.shape_cast %120 : vector<1x16xf32> to vector<1x1x16xf32>
    tpu.vector_store %arg4[%c1_18, %c4_19, %c3_20], %123 {strides = array<i32>} : memref<2x24x128xf32, #tpu.memory_space<vmem>>, vector<1x1x16xf32>,
    %124 = vector.extract_strided_slice %107 {offsets = [0, 32], sizes = [1, 16], strides = [1, 1]} : vector<1x256xf32> to vector<1x16xf32>
    %c0_21 = arith.constant 0 : index
    %c5_22 = arith.constant 5 : index
    %c3_23 = arith.constant 3 : index
    %125 = vector.load %arg4[%c0_21, %c5_22, %c3_23] : memref<2x24x128xf32, #tpu.memory_space<vmem>>, vector<1x1x16xf32>
    %126 = vector.shape_cast %125 : vector<1x1x16xf32> to vector<1x16xf32>
    %127 = vector.shape_cast %124 : vector<1x16xf32> to vector<1x1x16xf32>
    tpu.vector_store %arg4[%c0_21, %c5_22, %c3_23], %127 {strides = array<i32>} : memref<2x24x128xf32, #tpu.memory_space<vmem>>, vector<1x1x16xf32>,
    %128 = vector.extract_strided_slice %105 {offsets = [0, 32], sizes = [1, 16], strides = [1, 1]} : vector<1x256xf32> to vector<1x16xf32>
    %c1_24 = arith.constant 1 : index
    %c5_25 = arith.constant 5 : index
    %c3_26 = arith.constant 3 : index
    %129 = vector.load %arg4[%c1_24, %c5_25, %c3_26] : memref<2x24x128xf32, #tpu.memory_space<vmem>>, vector<1x1x16xf32>
    %130 = vector.shape_cast %129 : vector<1x1x16xf32> to vector<1x16xf32>
    %131 = vector.shape_cast %128 : vector<1x16xf32> to vector<1x1x16xf32>
    tpu.vector_store %arg4[%c1_24, %c5_25, %c3_26], %131 {strides = array<i32>} : memref<2x24x128xf32, #tpu.memory_space<vmem>>, vector<1x1x16xf32>,
    %132 = vector.extract_strided_slice %107 {offsets = [0, 48], sizes = [1, 16], strides = [1, 1]} : vector<1x256xf32> to vector<1x16xf32>
    %c0_27 = arith.constant 0 : index
    %c6_28 = arith.constant 6 : index
    %c3_29 = arith.constant 3 : index
    %133 = vector.load %arg4[%c0_27, %c6_28, %c3_29] : memref<2x24x128xf32, #tpu.memory_space<vmem>>, vector<1x1x16xf32>
    %134 = vector.shape_cast %133 : vector<1x1x16xf32> to vector<1x16xf32>
    %135 = vector.shape_cast %132 : vector<1x16xf32> to vector<1x1x16xf32>
    tpu.vector_store %arg4[%c0_27, %c6_28, %c3_29], %135 {strides = array<i32>} : memref<2x24x128xf32, #tpu.memory_space<vmem>>, vector<1x1x16xf32>,
    %136 = vector.extract_strided_slice %105 {offsets = [0, 48], sizes = [1, 16], strides = [1, 1]} : vector<1x256xf32> to vector<1x16xf32>
    %c1_30 = arith.constant 1 : index
    %c6_31 = arith.constant 6 : index
    %c3_32 = arith.constant 3 : index
    %137 = vector.load %arg4[%c1_30, %c6_31, %c3_32] : memref<2x24x128xf32, #tpu.memory_space<vmem>>, vector<1x1x16xf32>
    %138 = vector.shape_cast %137 : vector<1x1x16xf32> to vector<1x16xf32>
    %139 = vector.shape_cast %136 : vector<1x16xf32> to vector<1x1x16xf32>
    tpu.vector_store %arg4[%c1_30, %c6_31, %c3_32], %139 {strides = array<i32>} : memref<2x24x128xf32, #tpu.memory_space<vmem>>, vector<1x1x16xf32>,
    %140 = vector.extract_strided_slice %107 {offsets = [0, 64], sizes = [1, 16], strides = [1, 1]} : vector<1x256xf32> to vector<1x16xf32>
    %c0_33 = arith.constant 0 : index
    %c7_34 = arith.constant 7 : index
    %c3_35 = arith.constant 3 : index
    %141 = vector.load %arg4[%c0_33, %c7_34, %c3_35] : memref<2x24x128xf32, #tpu.memory_space<vmem>>, vector<1x1x16xf32>
    %142 = vector.shape_cast %141 : vector<1x1x16xf32> to vector<1x16xf32>
    %143 = vector.shape_cast %140 : vector<1x16xf32> to vector<1x1x16xf32>
    tpu.vector_store %arg4[%c0_33, %c7_34, %c3_35], %143 {strides = array<i32>} : memref<2x24x128xf32, #tpu.memory_space<vmem>>, vector<1x1x16xf32>,
    %144 = vector.extract_strided_slice %105 {offsets = [0, 64], sizes = [1, 16], strides = [1, 1]} : vector<1x256xf32> to vector<1x16xf32>
    %c1_36 = arith.constant 1 : index
    %c7_37 = arith.constant 7 : index
    %c3_38 = arith.constant 3 : index
    %145 = vector.load %arg4[%c1_36, %c7_37, %c3_38] : memref<2x24x128xf32, #tpu.memory_space<vmem>>, vector<1x1x16xf32>
    %146 = vector.shape_cast %145 : vector<1x1x16xf32> to vector<1x16xf32>
    %147 = vector.shape_cast %144 : vector<1x16xf32> to vector<1x1x16xf32>
    tpu.vector_store %arg4[%c1_36, %c7_37, %c3_38], %147 {strides = array<i32>} : memref<2x24x128xf32, #tpu.memory_space<vmem>>, vector<1x1x16xf32>,
    %148 = vector.extract_strided_slice %107 {offsets = [0, 80], sizes = [1, 16], strides = [1, 1]} : vector<1x256xf32> to vector<1x16xf32>
    %c0_39 = arith.constant 0 : index
    %c8_40 = arith.constant 8 : index
    %c3_41 = arith.constant 3 : index
    %149 = vector.load %arg4[%c0_39, %c8_40, %c3_41] : memref<2x24x128xf32, #tpu.memory_space<vmem>>, vector<1x1x16xf32>
    %150 = vector.shape_cast %149 : vector<1x1x16xf32> to vector<1x16xf32>
    %151 = vector.shape_cast %148 : vector<1x16xf32> to vector<1x1x16xf32>
    tpu.vector_store %arg4[%c0_39, %c8_40, %c3_41], %151 {strides = array<i32>} : memref<2x24x128xf32, #tpu.memory_space<vmem>>, vector<1x1x16xf32>,
    %152 = vector.extract_strided_slice %105 {offsets = [0, 80], sizes = [1, 16], strides = [1, 1]} : vector<1x256xf32> to vector<1x16xf32>
    %c1_42 = arith.constant 1 : index
    %c8_43 = arith.constant 8 : index
    %c3_44 = arith.constant 3 : index
    %153 = vector.load %arg4[%c1_42, %c8_43, %c3_44] : memref<2x24x128xf32, #tpu.memory_space<vmem>>, vector<1x1x16xf32>
    %154 = vector.shape_cast %153 : vector<1x1x16xf32> to vector<1x16xf32>
    %155 = vector.shape_cast %152 : vector<1x16xf32> to vector<1x1x16xf32>
    tpu.vector_store %arg4[%c1_42, %c8_43, %c3_44], %155 {strides = array<i32>} : memref<2x24x128xf32, #tpu.memory_space<vmem>>, vector<1x1x16xf32>,
    %156 = vector.extract_strided_slice %107 {offsets = [0, 96], sizes = [1, 16], strides = [1, 1]} : vector<1x256xf32> to vector<1x16xf32>
    %c0_45 = arith.constant 0 : index
    %c9_46 = arith.constant 9 : index
    %c3_47 = arith.constant 3 : index
    %157 = vector.load %arg4[%c0_45, %c9_46, %c3_47] : memref<2x24x128xf32, #tpu.memory_space<vmem>>, vector<1x1x16xf32>
    %158 = vector.shape_cast %157 : vector<1x1x16xf32> to vector<1x16xf32>
    %159 = vector.shape_cast %156 : vector<1x16xf32> to vector<1x1x16xf32>
    tpu.vector_store %arg4[%c0_45, %c9_46, %c3_47], %159 {strides = array<i32>} : memref<2x24x128xf32, #tpu.memory_space<vmem>>, vector<1x1x16xf32>,
    %160 = vector.extract_strided_slice %105 {offsets = [0, 96], sizes = [1, 16], strides = [1, 1]} : vector<1x256xf32> to vector<1x16xf32>
    %c1_48 = arith.constant 1 : index
    %c9_49 = arith.constant 9 : index
    %c3_50 = arith.constant 3 : index
    %161 = vector.load %arg4[%c1_48, %c9_49, %c3_50] : memref<2x24x128xf32, #tpu.memory_space<vmem>>, vector<1x1x16xf32>
    %162 = vector.shape_cast %161 : vector<1x1x16xf32> to vector<1x16xf32>
    %163 = vector.shape_cast %160 : vector<1x16xf32> to vector<1x1x16xf32>
    tpu.vector_store %arg4[%c1_48, %c9_49, %c3_50], %163 {strides = array<i32>} : memref<2x24x128xf32, #tpu.memory_space<vmem>>, vector<1x1x16xf32>,
    %164 = vector.extract_strided_slice %107 {offsets = [0, 112], sizes = [1, 16], strides = [1, 1]} : vector<1x256xf32> to vector<1x16xf32>
    %c0_51 = arith.constant 0 : index
    %c10_52 = arith.constant 10 : index
    %c3_53 = arith.constant 3 : index
    %165 = vector.load %arg4[%c0_51, %c10_52, %c3_53] : memref<2x24x128xf32, #tpu.memory_space<vmem>>, vector<1x1x16xf32>
    %166 = vector.shape_cast %165 : vector<1x1x16xf32> to vector<1x16xf32>
    %167 = vector.shape_cast %164 : vector<1x16xf32> to vector<1x1x16xf32>
    tpu.vector_store %arg4[%c0_51, %c10_52, %c3_53], %167 {strides = array<i32>} : memref<2x24x128xf32, #tpu.memory_space<vmem>>, vector<1x1x16xf32>,
    %168 = vector.extract_strided_slice %105 {offsets = [0, 112], sizes = [1, 16], strides = [1, 1]} : vector<1x256xf32> to vector<1x16xf32>
    %c1_54 = arith.constant 1 : index
    %c10_55 = arith.constant 10 : index
    %c3_56 = arith.constant 3 : index
    %169 = vector.load %arg4[%c1_54, %c10_55, %c3_56] : memref<2x24x128xf32, #tpu.memory_space<vmem>>, vector<1x1x16xf32>
    %170 = vector.shape_cast %169 : vector<1x1x16xf32> to vector<1x16xf32>
    %171 = vector.shape_cast %168 : vector<1x16xf32> to vector<1x1x16xf32>
    tpu.vector_store %arg4[%c1_54, %c10_55, %c3_56], %171 {strides = array<i32>} : memref<2x24x128xf32, #tpu.memory_space<vmem>>, vector<1x1x16xf32>,
    %172 = vector.extract_strided_slice %107 {offsets = [0, 128], sizes = [1, 16], strides = [1, 1]} : vector<1x256xf32> to vector<1x16xf32>
    %c0_57 = arith.constant 0 : index
    %c11_58 = arith.constant 11 : index
    %c3_59 = arith.constant 3 : index
    %173 = vector.load %arg4[%c0_57, %c11_58, %c3_59] : memref<2x24x128xf32, #tpu.memory_space<vmem>>, vector<1x1x16xf32>
    %174 = vector.shape_cast %173 : vector<1x1x16xf32> to vector<1x16xf32>
    %175 = vector.shape_cast %172 : vector<1x16xf32> to vector<1x1x16xf32>
    tpu.vector_store %arg4[%c0_57, %c11_58, %c3_59], %175 {strides = array<i32>} : memref<2x24x128xf32, #tpu.memory_space<vmem>>, vector<1x1x16xf32>,
    %176 = vector.extract_strided_slice %105 {offsets = [0, 128], sizes = [1, 16], strides = [1, 1]} : vector<1x256xf32> to vector<1x16xf32>
    %c1_60 = arith.constant 1 : index
    %c11_61 = arith.constant 11 : index
    %c3_62 = arith.constant 3 : index
    %177 = vector.load %arg4[%c1_60, %c11_61, %c3_62] : memref<2x24x128xf32, #tpu.memory_space<vmem>>, vector<1x1x16xf32>
    %178 = vector.shape_cast %177 : vector<1x1x16xf32> to vector<1x16xf32>
    %179 = vector.shape_cast %176 : vector<1x16xf32> to vector<1x1x16xf32>
    tpu.vector_store %arg4[%c1_60, %c11_61, %c3_62], %179 {strides = array<i32>} : memref<2x24x128xf32, #tpu.memory_space<vmem>>, vector<1x1x16xf32>,
    %180 = vector.extract_strided_slice %107 {offsets = [0, 144], sizes = [1, 16], strides = [1, 1]} : vector<1x256xf32> to vector<1x16xf32>
    %c0_63 = arith.constant 0 : index
    %c12_64 = arith.constant 12 : index
    %c3_65 = arith.constant 3 : index
    %181 = vector.load %arg4[%c0_63, %c12_64, %c3_65] : memref<2x24x128xf32, #tpu.memory_space<vmem>>, vector<1x1x16xf32>
    %182 = vector.shape_cast %181 : vector<1x1x16xf32> to vector<1x16xf32>
    %183 = vector.shape_cast %180 : vector<1x16xf32> to vector<1x1x16xf32>
    tpu.vector_store %arg4[%c0_63, %c12_64, %c3_65], %183 {strides = array<i32>} : memref<2x24x128xf32, #tpu.memory_space<vmem>>, vector<1x1x16xf32>,
    %184 = vector.extract_strided_slice %105 {offsets = [0, 144], sizes = [1, 16], strides = [1, 1]} : vector<1x256xf32> to vector<1x16xf32>
    %c1_66 = arith.constant 1 : index
    %c12_67 = arith.constant 12 : index
    %c3_68 = arith.constant 3 : index
    %185 = vector.load %arg4[%c1_66, %c12_67, %c3_68] : memref<2x24x128xf32, #tpu.memory_space<vmem>>, vector<1x1x16xf32>
    %186 = vector.shape_cast %185 : vector<1x1x16xf32> to vector<1x16xf32>
    %187 = vector.shape_cast %184 : vector<1x16xf32> to vector<1x1x16xf32>
    tpu.vector_store %arg4[%c1_66, %c12_67, %c3_68], %187 {strides = array<i32>} : memref<2x24x128xf32, #tpu.memory_space<vmem>>, vector<1x1x16xf32>,
    %188 = vector.extract_strided_slice %107 {offsets = [0, 160], sizes = [1, 16], strides = [1, 1]} : vector<1x256xf32> to vector<1x16xf32>
    %c0_69 = arith.constant 0 : index
    %c13_70 = arith.constant 13 : index
    %c3_71 = arith.constant 3 : index
    %189 = vector.load %arg4[%c0_69, %c13_70, %c3_71] : memref<2x24x128xf32, #tpu.memory_space<vmem>>, vector<1x1x16xf32>
    %190 = vector.shape_cast %189 : vector<1x1x16xf32> to vector<1x16xf32>
    %191 = vector.shape_cast %188 : vector<1x16xf32> to vector<1x1x16xf32>
    tpu.vector_store %arg4[%c0_69, %c13_70, %c3_71], %191 {strides = array<i32>} : memref<2x24x128xf32, #tpu.memory_space<vmem>>, vector<1x1x16xf32>,
    %192 = vector.extract_strided_slice %105 {offsets = [0, 160], sizes = [1, 16], strides = [1, 1]} : vector<1x256xf32> to vector<1x16xf32>
    %c1_72 = arith.constant 1 : index
    %c13_73 = arith.constant 13 : index
    %c3_74 = arith.constant 3 : index
    %193 = vector.load %arg4[%c1_72, %c13_73, %c3_74] : memref<2x24x128xf32, #tpu.memory_space<vmem>>, vector<1x1x16xf32>
    %194 = vector.shape_cast %193 : vector<1x1x16xf32> to vector<1x16xf32>
    %195 = vector.shape_cast %192 : vector<1x16xf32> to vector<1x1x16xf32>
    tpu.vector_store %arg4[%c1_72, %c13_73, %c3_74], %195 {strides = array<i32>} : memref<2x24x128xf32, #tpu.memory_space<vmem>>, vector<1x1x16xf32>,
    %196 = vector.extract_strided_slice %107 {offsets = [0, 176], sizes = [1, 16], strides = [1, 1]} : vector<1x256xf32> to vector<1x16xf32>
    %c0_75 = arith.constant 0 : index
    %c14_76 = arith.constant 14 : index
    %c3_77 = arith.constant 3 : index
    %197 = vector.load %arg4[%c0_75, %c14_76, %c3_77] : memref<2x24x128xf32, #tpu.memory_space<vmem>>, vector<1x1x16xf32>
    %198 = vector.shape_cast %197 : vector<1x1x16xf32> to vector<1x16xf32>
    %199 = vector.shape_cast %196 : vector<1x16xf32> to vector<1x1x16xf32>
    tpu.vector_store %arg4[%c0_75, %c14_76, %c3_77], %199 {strides = array<i32>} : memref<2x24x128xf32, #tpu.memory_space<vmem>>, vector<1x1x16xf32>,
    %200 = vector.extract_strided_slice %105 {offsets = [0, 176], sizes = [1, 16], strides = [1, 1]} : vector<1x256xf32> to vector<1x16xf32>
    %c1_78 = arith.constant 1 : index
    %c14_79 = arith.constant 14 : index
    %c3_80 = arith.constant 3 : index
    %201 = vector.load %arg4[%c1_78, %c14_79, %c3_80] : memref<2x24x128xf32, #tpu.memory_space<vmem>>, vector<1x1x16xf32>
    %202 = vector.shape_cast %201 : vector<1x1x16xf32> to vector<1x16xf32>
    %203 = vector.shape_cast %200 : vector<1x16xf32> to vector<1x1x16xf32>
    tpu.vector_store %arg4[%c1_78, %c14_79, %c3_80], %203 {strides = array<i32>} : memref<2x24x128xf32, #tpu.memory_space<vmem>>, vector<1x1x16xf32>,
    %204 = vector.extract_strided_slice %107 {offsets = [0, 192], sizes = [1, 16], strides = [1, 1]} : vector<1x256xf32> to vector<1x16xf32>
    %c0_81 = arith.constant 0 : index
    %c15_82 = arith.constant 15 : index
    %c3_83 = arith.constant 3 : index
    %205 = vector.load %arg4[%c0_81, %c15_82, %c3_83] : memref<2x24x128xf32, #tpu.memory_space<vmem>>, vector<1x1x16xf32>
    %206 = vector.shape_cast %205 : vector<1x1x16xf32> to vector<1x16xf32>
    %207 = vector.shape_cast %204 : vector<1x16xf32> to vector<1x1x16xf32>
    tpu.vector_store %arg4[%c0_81, %c15_82, %c3_83], %207 {strides = array<i32>} : memref<2x24x128xf32, #tpu.memory_space<vmem>>, vector<1x1x16xf32>,
    %208 = vector.extract_strided_slice %105 {offsets = [0, 192], sizes = [1, 16], strides = [1, 1]} : vector<1x256xf32> to vector<1x16xf32>
    %c1_84 = arith.constant 1 : index
    %c15_85 = arith.constant 15 : index
    %c3_86 = arith.constant 3 : index
    %209 = vector.load %arg4[%c1_84, %c15_85, %c3_86] : memref<2x24x128xf32, #tpu.memory_space<vmem>>, vector<1x1x16xf32>
    %210 = vector.shape_cast %209 : vector<1x1x16xf32> to vector<1x16xf32>
    %211 = vector.shape_cast %208 : vector<1x16xf32> to vector<1x1x16xf32>
    tpu.vector_store %arg4[%c1_84, %c15_85, %c3_86], %211 {strides = array<i32>} : memref<2x24x128xf32, #tpu.memory_space<vmem>>, vector<1x1x16xf32>,
    %212 = vector.extract_strided_slice %107 {offsets = [0, 208], sizes = [1, 16], strides = [1, 1]} : vector<1x256xf32> to vector<1x16xf32>
    %c0_87 = arith.constant 0 : index
    %c16_88 = arith.constant 16 : index
    %c3_89 = arith.constant 3 : index
    %213 = vector.load %arg4[%c0_87, %c16_88, %c3_89] : memref<2x24x128xf32, #tpu.memory_space<vmem>>, vector<1x1x16xf32>
    %214 = vector.shape_cast %213 : vector<1x1x16xf32> to vector<1x16xf32>
    %215 = vector.shape_cast %212 : vector<1x16xf32> to vector<1x1x16xf32>
    tpu.vector_store %arg4[%c0_87, %c16_88, %c3_89], %215 {strides = array<i32>} : memref<2x24x128xf32, #tpu.memory_space<vmem>>, vector<1x1x16xf32>,
    %216 = vector.extract_strided_slice %105 {offsets = [0, 208], sizes = [1, 16], strides = [1, 1]} : vector<1x256xf32> to vector<1x16xf32>
    %c1_90 = arith.constant 1 : index
    %c16_91 = arith.constant 16 : index
    %c3_92 = arith.constant 3 : index
    %217 = vector.load %arg4[%c1_90, %c16_91, %c3_92] : memref<2x24x128xf32, #tpu.memory_space<vmem>>, vector<1x1x16xf32>
    %218 = vector.shape_cast %217 : vector<1x1x16xf32> to vector<1x16xf32>
    %219 = vector.shape_cast %216 : vector<1x16xf32> to vector<1x1x16xf32>
    tpu.vector_store %arg4[%c1_90, %c16_91, %c3_92], %219 {strides = array<i32>} : memref<2x24x128xf32, #tpu.memory_space<vmem>>, vector<1x1x16xf32>,
    %220 = vector.extract_strided_slice %107 {offsets = [0, 224], sizes = [1, 16], strides = [1, 1]} : vector<1x256xf32> to vector<1x16xf32>
    %c0_93 = arith.constant 0 : index
    %c17_94 = arith.constant 17 : index
    %c3_95 = arith.constant 3 : index
    %221 = vector.load %arg4[%c0_93, %c17_94, %c3_95] : memref<2x24x128xf32, #tpu.memory_space<vmem>>, vector<1x1x16xf32>
    %222 = vector.shape_cast %221 : vector<1x1x16xf32> to vector<1x16xf32>
    %223 = vector.shape_cast %220 : vector<1x16xf32> to vector<1x1x16xf32>
    tpu.vector_store %arg4[%c0_93, %c17_94, %c3_95], %223 {strides = array<i32>} : memref<2x24x128xf32, #tpu.memory_space<vmem>>, vector<1x1x16xf32>,
    %224 = vector.extract_strided_slice %105 {offsets = [0, 224], sizes = [1, 16], strides = [1, 1]} : vector<1x256xf32> to vector<1x16xf32>
    %c1_96 = arith.constant 1 : index
    %c17_97 = arith.constant 17 : index
    %c3_98 = arith.constant 3 : index
    %225 = vector.load %arg4[%c1_96, %c17_97, %c3_98] : memref<2x24x128xf32, #tpu.memory_space<vmem>>, vector<1x1x16xf32>
    %226 = vector.shape_cast %225 : vector<1x1x16xf32> to vector<1x16xf32>
    %227 = vector.shape_cast %224 : vector<1x16xf32> to vector<1x1x16xf32>
    tpu.vector_store %arg4[%c1_96, %c17_97, %c3_98], %227 {strides = array<i32>} : memref<2x24x128xf32, #tpu.memory_space<vmem>>, vector<1x1x16xf32>,
    %228 = vector.extract_strided_slice %107 {offsets = [0, 240], sizes = [1, 16], strides = [1, 1]} : vector<1x256xf32> to vector<1x16xf32>
    %c0_99 = arith.constant 0 : index
    %c18_100 = arith.constant 18 : index
    %c3_101 = arith.constant 3 : index
    %229 = vector.load %arg4[%c0_99, %c18_100, %c3_101] : memref<2x24x128xf32, #tpu.memory_space<vmem>>, vector<1x1x16xf32>
    %230 = vector.shape_cast %229 : vector<1x1x16xf32> to vector<1x16xf32>
    %231 = vector.shape_cast %228 : vector<1x16xf32> to vector<1x1x16xf32>
    tpu.vector_store %arg4[%c0_99, %c18_100, %c3_101], %231 {strides = array<i32>} : memref<2x24x128xf32, #tpu.memory_space<vmem>>, vector<1x1x16xf32>,
    %232 = vector.extract_strided_slice %105 {offsets = [0, 240], sizes = [1, 16], strides = [1, 1]} : vector<1x256xf32> to vector<1x16xf32>
    %c1_102 = arith.constant 1 : index
    %c18_103 = arith.constant 18 : index
    %c3_104 = arith.constant 3 : index
    %233 = vector.load %arg4[%c1_102, %c18_103, %c3_104] : memref<2x24x128xf32, #tpu.memory_space<vmem>>, vector<1x1x16xf32>
    %234 = vector.shape_cast %233 : vector<1x1x16xf32> to vector<1x16xf32>
    %235 = vector.shape_cast %232 : vector<1x16xf32> to vector<1x1x16xf32>
    tpu.vector_store %arg4[%c1_102, %c18_103, %c3_104], %235 {strides = array<i32>} : memref<2x24x128xf32, #tpu.memory_space<vmem>>, vector<1x1x16xf32>,
    %c1_105 = arith.constant 1 : index
    %c0_106 = arith.constant 0 : index
    %c0_107 = arith.constant 0 : index
    %236 = vector.load %arg1[%c1_105, %c0_106, %c0_107] : memref<2x4x256xf32, #tpu.memory_space<vmem>>, vector<1x4x256xf32>
    %237 = vector.shape_cast %236 : vector<1x4x256xf32> to vector<4x256xf32>
    %cst_108 = arith.constant dense<0.000000e+00> : vector<256xf32>
    %238 = vector.multi_reduction <add>, %237, %cst_108 [0] : vector<4x256xf32> to vector<256xf32>
    %239 = vector.shape_cast %238 : vector<256xf32> to vector<1x256xf32>
    %cst_109 = arith.constant dense<0xFF800000> : vector<256xf32>
    %240 = vector.multi_reduction <maximumf>, %237, %cst_109 [0] : vector<4x256xf32> to vector<256xf32>
    %241 = vector.shape_cast %240 : vector<256xf32> to vector<1x256xf32>
    %cst_110 = arith.constant 2.500000e-01 : f32
    %242 = vector.broadcast %cst_110 : f32 to vector<1x256xf32>
    %243 = arith.mulf %239, %242 : vector<1x256xf32>
    %244 = vector.extract_strided_slice %243 {offsets = [0, 0], sizes = [1, 16], strides = [1, 1]} : vector<1x256xf32> to vector<1x16xf32>
    %c0_111 = arith.constant 0 : index
    %c3_112 = arith.constant 3 : index
    %c25_113 = arith.constant 25 : index
    %245 = vector.load %arg4[%c0_111, %c3_112, %c25_113] : memref<2x24x128xf32, #tpu.memory_space<vmem>>, vector<1x1x16xf32>
    %246 = vector.shape_cast %245 : vector<1x1x16xf32> to vector<1x16xf32>
    %247 = vector.shape_cast %244 : vector<1x16xf32> to vector<1x1x16xf32>
    tpu.vector_store %arg4[%c0_111, %c3_112, %c25_113], %247 {strides = array<i32>} : memref<2x24x128xf32, #tpu.memory_space<vmem>>, vector<1x1x16xf32>,
    %248 = vector.extract_strided_slice %241 {offsets = [0, 0], sizes = [1, 16], strides = [1, 1]} : vector<1x256xf32> to vector<1x16xf32>
    %c1_114 = arith.constant 1 : index
    %c3_115 = arith.constant 3 : index
    %c25_116 = arith.constant 25 : index
    %249 = vector.load %arg4[%c1_114, %c3_115, %c25_116] : memref<2x24x128xf32, #tpu.memory_space<vmem>>, vector<1x1x16xf32>
    %250 = vector.shape_cast %249 : vector<1x1x16xf32> to vector<1x16xf32>
    %251 = vector.shape_cast %248 : vector<1x16xf32> to vector<1x1x16xf32>
    tpu.vector_store %arg4[%c1_114, %c3_115, %c25_116], %251 {strides = array<i32>} : memref<2x24x128xf32, #tpu.memory_space<vmem>>, vector<1x1x16xf32>,
    %252 = vector.extract_strided_slice %243 {offsets = [0, 16], sizes = [1, 16], strides = [1, 1]} : vector<1x256xf32> to vector<1x16xf32>
    %c0_117 = arith.constant 0 : index
    %c4_118 = arith.constant 4 : index
    %c25_119 = arith.constant 25 : index
    %253 = vector.load %arg4[%c0_117, %c4_118, %c25_119] : memref<2x24x128xf32, #tpu.memory_space<vmem>>, vector<1x1x16xf32>
    %254 = vector.shape_cast %253 : vector<1x1x16xf32> to vector<1x16xf32>
    %255 = vector.shape_cast %252 : vector<1x16xf32> to vector<1x1x16xf32>
    tpu.vector_store %arg4[%c0_117, %c4_118, %c25_119], %255 {strides = array<i32>} : memref<2x24x128xf32, #tpu.memory_space<vmem>>, vector<1x1x16xf32>,
    %256 = vector.extract_strided_slice %241 {offsets = [0, 16], sizes = [1, 16], strides = [1, 1]} : vector<1x256xf32> to vector<1x16xf32>
    %c1_120 = arith.constant 1 : index
    %c4_121 = arith.constant 4 : index
    %c25_122 = arith.constant 25 : index
    %257 = vector.load %arg4[%c1_120, %c4_121, %c25_122] : memref<2x24x128xf32, #tpu.memory_space<vmem>>, vector<1x1x16xf32>
    %258 = vector.shape_cast %257 : vector<1x1x16xf32> to vector<1x16xf32>
    %259 = vector.shape_cast %256 : vector<1x16xf32> to vector<1x1x16xf32>
    tpu.vector_store %arg4[%c1_120, %c4_121, %c25_122], %259 {strides = array<i32>} : memref<2x24x128xf32, #tpu.memory_space<vmem>>, vector<1x1x16xf32>,
    %260 = vector.extract_strided_slice %243 {offsets = [0, 32], sizes = [1, 16], strides = [1, 1]} : vector<1x256xf32> to vector<1x16xf32>
    %c0_123 = arith.constant 0 : index
    %c5_124 = arith.constant 5 : index
    %c25_125 = arith.constant 25 : index
    %261 = vector.load %arg4[%c0_123, %c5_124, %c25_125] : memref<2x24x128xf32, #tpu.memory_space<vmem>>, vector<1x1x16xf32>
    %262 = vector.shape_cast %261 : vector<1x1x16xf32> to vector<1x16xf32>
    %263 = vector.shape_cast %260 : vector<1x16xf32> to vector<1x1x16xf32>
    tpu.vector_store %arg4[%c0_123, %c5_124, %c25_125], %263 {strides = array<i32>} : memref<2x24x128xf32, #tpu.memory_space<vmem>>, vector<1x1x16xf32>,
    %264 = vector.extract_strided_slice %241 {offsets = [0, 32], sizes = [1, 16], strides = [1, 1]} : vector<1x256xf32> to vector<1x16xf32>
    %c1_126 = arith.constant 1 : index
    %c5_127 = arith.constant 5 : index
    %c25_128 = arith.constant 25 : index
    %265 = vector.load %arg4[%c1_126, %c5_127, %c25_128] : memref<2x24x128xf32, #tpu.memory_space<vmem>>, vector<1x1x16xf32>
    %266 = vector.shape_cast %265 : vector<1x1x16xf32> to vector<1x16xf32>
    %267 = vector.shape_cast %264 : vector<1x16xf32> to vector<1x1x16xf32>
    tpu.vector_store %arg4[%c1_126, %c5_127, %c25_128], %267 {strides = array<i32>} : memref<2x24x128xf32, #tpu.memory_space<vmem>>, vector<1x1x16xf32>,
    %268 = vector.extract_strided_slice %243 {offsets = [0, 48], sizes = [1, 16], strides = [1, 1]} : vector<1x256xf32> to vector<1x16xf32>
    %c0_129 = arith.constant 0 : index
    %c6_130 = arith.constant 6 : index
    %c25_131 = arith.constant 25 : index
    %269 = vector.load %arg4[%c0_129, %c6_130, %c25_131] : memref<2x24x128xf32, #tpu.memory_space<vmem>>, vector<1x1x16xf32>
    %270 = vector.shape_cast %269 : vector<1x1x16xf32> to vector<1x16xf32>
    %271 = vector.shape_cast %268 : vector<1x16xf32> to vector<1x1x16xf32>
    tpu.vector_store %arg4[%c0_129, %c6_130, %c25_131], %271 {strides = array<i32>} : memref<2x24x128xf32, #tpu.memory_space<vmem>>, vector<1x1x16xf32>,
    %272 = vector.extract_strided_slice %241 {offsets = [0, 48], sizes = [1, 16], strides = [1, 1]} : vector<1x256xf32> to vector<1x16xf32>
    %c1_132 = arith.constant 1 : index
    %c6_133 = arith.constant 6 : index
    %c25_134 = arith.constant 25 : index
    %273 = vector.load %arg4[%c1_132, %c6_133, %c25_134] : memref<2x24x128xf32, #tpu.memory_space<vmem>>, vector<1x1x16xf32>
    %274 = vector.shape_cast %273 : vector<1x1x16xf32> to vector<1x16xf32>
    %275 = vector.shape_cast %272 : vector<1x16xf32> to vector<1x1x16xf32>
    tpu.vector_store %arg4[%c1_132, %c6_133, %c25_134], %275 {strides = array<i32>} : memref<2x24x128xf32, #tpu.memory_space<vmem>>, vector<1x1x16xf32>,
    %276 = vector.extract_strided_slice %243 {offsets = [0, 64], sizes = [1, 16], strides = [1, 1]} : vector<1x256xf32> to vector<1x16xf32>
    %c0_135 = arith.constant 0 : index
    %c7_136 = arith.constant 7 : index
    %c25_137 = arith.constant 25 : index
    %277 = vector.load %arg4[%c0_135, %c7_136, %c25_137] : memref<2x24x128xf32, #tpu.memory_space<vmem>>, vector<1x1x16xf32>
    %278 = vector.shape_cast %277 : vector<1x1x16xf32> to vector<1x16xf32>
    %279 = vector.shape_cast %276 : vector<1x16xf32> to vector<1x1x16xf32>
    tpu.vector_store %arg4[%c0_135, %c7_136, %c25_137], %279 {strides = array<i32>} : memref<2x24x128xf32, #tpu.memory_space<vmem>>, vector<1x1x16xf32>,
    %280 = vector.extract_strided_slice %241 {offsets = [0, 64], sizes = [1, 16], strides = [1, 1]} : vector<1x256xf32> to vector<1x16xf32>
    %c1_138 = arith.constant 1 : index
    %c7_139 = arith.constant 7 : index
    %c25_140 = arith.constant 25 : index
    %281 = vector.load %arg4[%c1_138, %c7_139, %c25_140] : memref<2x24x128xf32, #tpu.memory_space<vmem>>, vector<1x1x16xf32>
    %282 = vector.shape_cast %281 : vector<1x1x16xf32> to vector<1x16xf32>
    %283 = vector.shape_cast %280 : vector<1x16xf32> to vector<1x1x16xf32>
    tpu.vector_store %arg4[%c1_138, %c7_139, %c25_140], %283 {strides = array<i32>} : memref<2x24x128xf32, #tpu.memory_space<vmem>>, vector<1x1x16xf32>,
    %284 = vector.extract_strided_slice %243 {offsets = [0, 80], sizes = [1, 16], strides = [1, 1]} : vector<1x256xf32> to vector<1x16xf32>
    %c0_141 = arith.constant 0 : index
    %c8_142 = arith.constant 8 : index
    %c25_143 = arith.constant 25 : index
    %285 = vector.load %arg4[%c0_141, %c8_142, %c25_143] : memref<2x24x128xf32, #tpu.memory_space<vmem>>, vector<1x1x16xf32>
    %286 = vector.shape_cast %285 : vector<1x1x16xf32> to vector<1x16xf32>
    %287 = vector.shape_cast %284 : vector<1x16xf32> to vector<1x1x16xf32>
    tpu.vector_store %arg4[%c0_141, %c8_142, %c25_143], %287 {strides = array<i32>} : memref<2x24x128xf32, #tpu.memory_space<vmem>>, vector<1x1x16xf32>,
    %288 = vector.extract_strided_slice %241 {offsets = [0, 80], sizes = [1, 16], strides = [1, 1]} : vector<1x256xf32> to vector<1x16xf32>
    %c1_144 = arith.constant 1 : index
    %c8_145 = arith.constant 8 : index
    %c25_146 = arith.constant 25 : index
    %289 = vector.load %arg4[%c1_144, %c8_145, %c25_146] : memref<2x24x128xf32, #tpu.memory_space<vmem>>, vector<1x1x16xf32>
    %290 = vector.shape_cast %289 : vector<1x1x16xf32> to vector<1x16xf32>
    %291 = vector.shape_cast %288 : vector<1x16xf32> to vector<1x1x16xf32>
    tpu.vector_store %arg4[%c1_144, %c8_145, %c25_146], %291 {strides = array<i32>} : memref<2x24x128xf32, #tpu.memory_space<vmem>>, vector<1x1x16xf32>,
    %292 = vector.extract_strided_slice %243 {offsets = [0, 96], sizes = [1, 16], strides = [1, 1]} : vector<1x256xf32> to vector<1x16xf32>
    %c0_147 = arith.constant 0 : index
    %c9_148 = arith.constant 9 : index
    %c25_149 = arith.constant 25 : index
    %293 = vector.load %arg4[%c0_147, %c9_148, %c25_149] : memref<2x24x128xf32, #tpu.memory_space<vmem>>, vector<1x1x16xf32>
    %294 = vector.shape_cast %293 : vector<1x1x16xf32> to vector<1x16xf32>
    %295 = vector.shape_cast %292 : vector<1x16xf32> to vector<1x1x16xf32>
    tpu.vector_store %arg4[%c0_147, %c9_148, %c25_149], %295 {strides = array<i32>} : memref<2x24x128xf32, #tpu.memory_space<vmem>>, vector<1x1x16xf32>,
    %296 = vector.extract_strided_slice %241 {offsets = [0, 96], sizes = [1, 16], strides = [1, 1]} : vector<1x256xf32> to vector<1x16xf32>
    %c1_150 = arith.constant 1 : index
    %c9_151 = arith.constant 9 : index
    %c25_152 = arith.constant 25 : index
    %297 = vector.load %arg4[%c1_150, %c9_151, %c25_152] : memref<2x24x128xf32, #tpu.memory_space<vmem>>, vector<1x1x16xf32>
    %298 = vector.shape_cast %297 : vector<1x1x16xf32> to vector<1x16xf32>
    %299 = vector.shape_cast %296 : vector<1x16xf32> to vector<1x1x16xf32>
    tpu.vector_store %arg4[%c1_150, %c9_151, %c25_152], %299 {strides = array<i32>} : memref<2x24x128xf32, #tpu.memory_space<vmem>>, vector<1x1x16xf32>,
    %300 = vector.extract_strided_slice %243 {offsets = [0, 112], sizes = [1, 16], strides = [1, 1]} : vector<1x256xf32> to vector<1x16xf32>
    %c0_153 = arith.constant 0 : index
    %c10_154 = arith.constant 10 : index
    %c25_155 = arith.constant 25 : index
    %301 = vector.load %arg4[%c0_153, %c10_154, %c25_155] : memref<2x24x128xf32, #tpu.memory_space<vmem>>, vector<1x1x16xf32>
    %302 = vector.shape_cast %301 : vector<1x1x16xf32> to vector<1x16xf32>
    %303 = vector.shape_cast %300 : vector<1x16xf32> to vector<1x1x16xf32>
    tpu.vector_store %arg4[%c0_153, %c10_154, %c25_155], %303 {strides = array<i32>} : memref<2x24x128xf32, #tpu.memory_space<vmem>>, vector<1x1x16xf32>,
    %304 = vector.extract_strided_slice %241 {offsets = [0, 112], sizes = [1, 16], strides = [1, 1]} : vector<1x256xf32> to vector<1x16xf32>
    %c1_156 = arith.constant 1 : index
    %c10_157 = arith.constant 10 : index
    %c25_158 = arith.constant 25 : index
    %305 = vector.load %arg4[%c1_156, %c10_157, %c25_158] : memref<2x24x128xf32, #tpu.memory_space<vmem>>, vector<1x1x16xf32>
    %306 = vector.shape_cast %305 : vector<1x1x16xf32> to vector<1x16xf32>
    %307 = vector.shape_cast %304 : vector<1x16xf32> to vector<1x1x16xf32>
    tpu.vector_store %arg4[%c1_156, %c10_157, %c25_158], %307 {strides = array<i32>} : memref<2x24x128xf32, #tpu.memory_space<vmem>>, vector<1x1x16xf32>,
    %308 = vector.extract_strided_slice %243 {offsets = [0, 128], sizes = [1, 16], strides = [1, 1]} : vector<1x256xf32> to vector<1x16xf32>
    %c0_159 = arith.constant 0 : index
    %c11_160 = arith.constant 11 : index
    %c25_161 = arith.constant 25 : index
    %309 = vector.load %arg4[%c0_159, %c11_160, %c25_161] : memref<2x24x128xf32, #tpu.memory_space<vmem>>, vector<1x1x16xf32>
    %310 = vector.shape_cast %309 : vector<1x1x16xf32> to vector<1x16xf32>
    %311 = vector.shape_cast %308 : vector<1x16xf32> to vector<1x1x16xf32>
    tpu.vector_store %arg4[%c0_159, %c11_160, %c25_161], %311 {strides = array<i32>} : memref<2x24x128xf32, #tpu.memory_space<vmem>>, vector<1x1x16xf32>,
    %312 = vector.extract_strided_slice %241 {offsets = [0, 128], sizes = [1, 16], strides = [1, 1]} : vector<1x256xf32> to vector<1x16xf32>
    %c1_162 = arith.constant 1 : index
    %c11_163 = arith.constant 11 : index
    %c25_164 = arith.constant 25 : index
    %313 = vector.load %arg4[%c1_162, %c11_163, %c25_164] : memref<2x24x128xf32, #tpu.memory_space<vmem>>, vector<1x1x16xf32>
    %314 = vector.shape_cast %313 : vector<1x1x16xf32> to vector<1x16xf32>
    %315 = vector.shape_cast %312 : vector<1x16xf32> to vector<1x1x16xf32>
    tpu.vector_store %arg4[%c1_162, %c11_163, %c25_164], %315 {strides = array<i32>} : memref<2x24x128xf32, #tpu.memory_space<vmem>>, vector<1x1x16xf32>,
    %316 = vector.extract_strided_slice %243 {offsets = [0, 144], sizes = [1, 16], strides = [1, 1]} : vector<1x256xf32> to vector<1x16xf32>
    %c0_165 = arith.constant 0 : index
    %c12_166 = arith.constant 12 : index
    %c25_167 = arith.constant 25 : index
    %317 = vector.load %arg4[%c0_165, %c12_166, %c25_167] : memref<2x24x128xf32, #tpu.memory_space<vmem>>, vector<1x1x16xf32>
    %318 = vector.shape_cast %317 : vector<1x1x16xf32> to vector<1x16xf32>
    %319 = vector.shape_cast %316 : vector<1x16xf32> to vector<1x1x16xf32>
    tpu.vector_store %arg4[%c0_165, %c12_166, %c25_167], %319 {strides = array<i32>} : memref<2x24x128xf32, #tpu.memory_space<vmem>>, vector<1x1x16xf32>,
    %320 = vector.extract_strided_slice %241 {offsets = [0, 144], sizes = [1, 16], strides = [1, 1]} : vector<1x256xf32> to vector<1x16xf32>
    %c1_168 = arith.constant 1 : index
    %c12_169 = arith.constant 12 : index
    %c25_170 = arith.constant 25 : index
    %321 = vector.load %arg4[%c1_168, %c12_169, %c25_170] : memref<2x24x128xf32, #tpu.memory_space<vmem>>, vector<1x1x16xf32>
    %322 = vector.shape_cast %321 : vector<1x1x16xf32> to vector<1x16xf32>
    %323 = vector.shape_cast %320 : vector<1x16xf32> to vector<1x1x16xf32>
    tpu.vector_store %arg4[%c1_168, %c12_169, %c25_170], %323 {strides = array<i32>} : memref<2x24x128xf32, #tpu.memory_space<vmem>>, vector<1x1x16xf32>,
    %324 = vector.extract_strided_slice %243 {offsets = [0, 160], sizes = [1, 16], strides = [1, 1]} : vector<1x256xf32> to vector<1x16xf32>
    %c0_171 = arith.constant 0 : index
    %c13_172 = arith.constant 13 : index
    %c25_173 = arith.constant 25 : index
    %325 = vector.load %arg4[%c0_171, %c13_172, %c25_173] : memref<2x24x128xf32, #tpu.memory_space<vmem>>, vector<1x1x16xf32>
    %326 = vector.shape_cast %325 : vector<1x1x16xf32> to vector<1x16xf32>
    %327 = vector.shape_cast %324 : vector<1x16xf32> to vector<1x1x16xf32>
    tpu.vector_store %arg4[%c0_171, %c13_172, %c25_173], %327 {strides = array<i32>} : memref<2x24x128xf32, #tpu.memory_space<vmem>>, vector<1x1x16xf32>,
    %328 = vector.extract_strided_slice %241 {offsets = [0, 160], sizes = [1, 16], strides = [1, 1]} : vector<1x256xf32> to vector<1x16xf32>
    %c1_174 = arith.constant 1 : index
    %c13_175 = arith.constant 13 : index
    %c25_176 = arith.constant 25 : index
    %329 = vector.load %arg4[%c1_174, %c13_175, %c25_176] : memref<2x24x128xf32, #tpu.memory_space<vmem>>, vector<1x1x16xf32>
    %330 = vector.shape_cast %329 : vector<1x1x16xf32> to vector<1x16xf32>
    %331 = vector.shape_cast %328 : vector<1x16xf32> to vector<1x1x16xf32>
    tpu.vector_store %arg4[%c1_174, %c13_175, %c25_176], %331 {strides = array<i32>} : memref<2x24x128xf32, #tpu.memory_space<vmem>>, vector<1x1x16xf32>,
    %332 = vector.extract_strided_slice %243 {offsets = [0, 176], sizes = [1, 16], strides = [1, 1]} : vector<1x256xf32> to vector<1x16xf32>
    %c0_177 = arith.constant 0 : index
    %c14_178 = arith.constant 14 : index
    %c25_179 = arith.constant 25 : index
    %333 = vector.load %arg4[%c0_177, %c14_178, %c25_179] : memref<2x24x128xf32, #tpu.memory_space<vmem>>, vector<1x1x16xf32>
    %334 = vector.shape_cast %333 : vector<1x1x16xf32> to vector<1x16xf32>
    %335 = vector.shape_cast %332 : vector<1x16xf32> to vector<1x1x16xf32>
    tpu.vector_store %arg4[%c0_177, %c14_178, %c25_179], %335 {strides = array<i32>} : memref<2x24x128xf32, #tpu.memory_space<vmem>>, vector<1x1x16xf32>,
    %336 = vector.extract_strided_slice %241 {offsets = [0, 176], sizes = [1, 16], strides = [1, 1]} : vector<1x256xf32> to vector<1x16xf32>
    %c1_180 = arith.constant 1 : index
    %c14_181 = arith.constant 14 : index
    %c25_182 = arith.constant 25 : index
    %337 = vector.load %arg4[%c1_180, %c14_181, %c25_182] : memref<2x24x128xf32, #tpu.memory_space<vmem>>, vector<1x1x16xf32>
    %338 = vector.shape_cast %337 : vector<1x1x16xf32> to vector<1x16xf32>
    %339 = vector.shape_cast %336 : vector<1x16xf32> to vector<1x1x16xf32>
    tpu.vector_store %arg4[%c1_180, %c14_181, %c25_182], %339 {strides = array<i32>} : memref<2x24x128xf32, #tpu.memory_space<vmem>>, vector<1x1x16xf32>,
    %340 = vector.extract_strided_slice %243 {offsets = [0, 192], sizes = [1, 16], strides = [1, 1]} : vector<1x256xf32> to vector<1x16xf32>
    %c0_183 = arith.constant 0 : index
    %c15_184 = arith.constant 15 : index
    %c25_185 = arith.constant 25 : index
    %341 = vector.load %arg4[%c0_183, %c15_184, %c25_185] : memref<2x24x128xf32, #tpu.memory_space<vmem>>, vector<1x1x16xf32>
    %342 = vector.shape_cast %341 : vector<1x1x16xf32> to vector<1x16xf32>
    %343 = vector.shape_cast %340 : vector<1x16xf32> to vector<1x1x16xf32>
    tpu.vector_store %arg4[%c0_183, %c15_184, %c25_185], %343 {strides = array<i32>} : memref<2x24x128xf32, #tpu.memory_space<vmem>>, vector<1x1x16xf32>,
    %344 = vector.extract_strided_slice %241 {offsets = [0, 192], sizes = [1, 16], strides = [1, 1]} : vector<1x256xf32> to vector<1x16xf32>
    %c1_186 = arith.constant 1 : index
    %c15_187 = arith.constant 15 : index
    %c25_188 = arith.constant 25 : index
    %345 = vector.load %arg4[%c1_186, %c15_187, %c25_188] : memref<2x24x128xf32, #tpu.memory_space<vmem>>, vector<1x1x16xf32>
    %346 = vector.shape_cast %345 : vector<1x1x16xf32> to vector<1x16xf32>
    %347 = vector.shape_cast %344 : vector<1x16xf32> to vector<1x1x16xf32>
    tpu.vector_store %arg4[%c1_186, %c15_187, %c25_188], %347 {strides = array<i32>} : memref<2x24x128xf32, #tpu.memory_space<vmem>>, vector<1x1x16xf32>,
    %348 = vector.extract_strided_slice %243 {offsets = [0, 208], sizes = [1, 16], strides = [1, 1]} : vector<1x256xf32> to vector<1x16xf32>
    %c0_189 = arith.constant 0 : index
    %c16_190 = arith.constant 16 : index
    %c25_191 = arith.constant 25 : index
    %349 = vector.load %arg4[%c0_189, %c16_190, %c25_191] : memref<2x24x128xf32, #tpu.memory_space<vmem>>, vector<1x1x16xf32>
    %350 = vector.shape_cast %349 : vector<1x1x16xf32> to vector<1x16xf32>
    %351 = vector.shape_cast %348 : vector<1x16xf32> to vector<1x1x16xf32>
    tpu.vector_store %arg4[%c0_189, %c16_190, %c25_191], %351 {strides = array<i32>} : memref<2x24x128xf32, #tpu.memory_space<vmem>>, vector<1x1x16xf32>,
    %352 = vector.extract_strided_slice %241 {offsets = [0, 208], sizes = [1, 16], strides = [1, 1]} : vector<1x256xf32> to vector<1x16xf32>
    %c1_192 = arith.constant 1 : index
    %c16_193 = arith.constant 16 : index
    %c25_194 = arith.constant 25 : index
    %353 = vector.load %arg4[%c1_192, %c16_193, %c25_194] : memref<2x24x128xf32, #tpu.memory_space<vmem>>, vector<1x1x16xf32>
    %354 = vector.shape_cast %353 : vector<1x1x16xf32> to vector<1x16xf32>
    %355 = vector.shape_cast %352 : vector<1x16xf32> to vector<1x1x16xf32>
    tpu.vector_store %arg4[%c1_192, %c16_193, %c25_194], %355 {strides = array<i32>} : memref<2x24x128xf32, #tpu.memory_space<vmem>>, vector<1x1x16xf32>,
    %356 = vector.extract_strided_slice %243 {offsets = [0, 224], sizes = [1, 16], strides = [1, 1]} : vector<1x256xf32> to vector<1x16xf32>
    %c0_195 = arith.constant 0 : index
    %c17_196 = arith.constant 17 : index
    %c25_197 = arith.constant 25 : index
    %357 = vector.load %arg4[%c0_195, %c17_196, %c25_197] : memref<2x24x128xf32, #tpu.memory_space<vmem>>, vector<1x1x16xf32>
    %358 = vector.shape_cast %357 : vector<1x1x16xf32> to vector<1x16xf32>
    %359 = vector.shape_cast %356 : vector<1x16xf32> to vector<1x1x16xf32>
    tpu.vector_store %arg4[%c0_195, %c17_196, %c25_197], %359 {strides = array<i32>} : memref<2x24x128xf32, #tpu.memory_space<vmem>>, vector<1x1x16xf32>,
    %360 = vector.extract_strided_slice %241 {offsets = [0, 224], sizes = [1, 16], strides = [1, 1]} : vector<1x256xf32> to vector<1x16xf32>
    %c1_198 = arith.constant 1 : index
    %c17_199 = arith.constant 17 : index
    %c25_200 = arith.constant 25 : index
    %361 = vector.load %arg4[%c1_198, %c17_199, %c25_200] : memref<2x24x128xf32, #tpu.memory_space<vmem>>, vector<1x1x16xf32>
    %362 = vector.shape_cast %361 : vector<1x1x16xf32> to vector<1x16xf32>
    %363 = vector.shape_cast %360 : vector<1x16xf32> to vector<1x1x16xf32>
    tpu.vector_store %arg4[%c1_198, %c17_199, %c25_200], %363 {strides = array<i32>} : memref<2x24x128xf32, #tpu.memory_space<vmem>>, vector<1x1x16xf32>,
    %364 = vector.extract_strided_slice %243 {offsets = [0, 240], sizes = [1, 16], strides = [1, 1]} : vector<1x256xf32> to vector<1x16xf32>
    %c0_201 = arith.constant 0 : index
    %c18_202 = arith.constant 18 : index
    %c25_203 = arith.constant 25 : index
    %365 = vector.load %arg4[%c0_201, %c18_202, %c25_203] : memref<2x24x128xf32, #tpu.memory_space<vmem>>, vector<1x1x16xf32>
    %366 = vector.shape_cast %365 : vector<1x1x16xf32> to vector<1x16xf32>
    %367 = vector.shape_cast %364 : vector<1x16xf32> to vector<1x1x16xf32>
    tpu.vector_store %arg4[%c0_201, %c18_202, %c25_203], %367 {strides = array<i32>} : memref<2x24x128xf32, #tpu.memory_space<vmem>>, vector<1x1x16xf32>,
    %368 = vector.extract_strided_slice %241 {offsets = [0, 240], sizes = [1, 16], strides = [1, 1]} : vector<1x256xf32> to vector<1x16xf32>
    %c1_204 = arith.constant 1 : index
    %c18_205 = arith.constant 18 : index
    %c25_206 = arith.constant 25 : index
    %369 = vector.load %arg4[%c1_204, %c18_205, %c25_206] : memref<2x24x128xf32, #tpu.memory_space<vmem>>, vector<1x1x16xf32>
    %370 = vector.shape_cast %369 : vector<1x1x16xf32> to vector<1x16xf32>
    %371 = vector.shape_cast %368 : vector<1x16xf32> to vector<1x1x16xf32>
    tpu.vector_store %arg4[%c1_204, %c18_205, %c25_206], %371 {strides = array<i32>} : memref<2x24x128xf32, #tpu.memory_space<vmem>>, vector<1x1x16xf32>,
    %cst_207 = arith.constant 0.000000e+00 : f32
    %372 = vector.broadcast %cst_207 : f32 to vector<16x128xf32>
    %cst_208 = arith.constant 0.000000e+00 : f32
    %373 = vector.broadcast %cst_208 : f32 to vector<16x128xf32>
    %cst_209 = arith.constant 0.000000e+00 : f32
    %374 = vector.broadcast %cst_209 : f32 to vector<16x128xf32>
    %cst_210 = arith.constant 0.000000e+00 : f32
    %375 = vector.broadcast %cst_210 : f32 to vector<16x128xf32>
    %c0_211 = arith.constant 0 : index
    %c0_212 = arith.constant 0 : index
    %c0_213 = arith.constant 0 : index
    %376 = vector.load %arg4[%c0_211, %c0_212, %c0_213] : memref<2x24x128xf32, #tpu.memory_space<vmem>>, vector<1x24x128xf32>
    %377 = vector.shape_cast %376 : vector<1x24x128xf32> to vector<24x128xf32>
    %c3_i32 = arith.constant 3 : i32
    %378 = tpu.dynamic_rotate %377 by %c3_i32 dim 1 : vector<24x128xf32>, i32 -> vector<24x128xf32>
    %c2_i32 = arith.constant 2 : i32
    %379 = tpu.dynamic_rotate %377 by %c2_i32 dim 1 : vector<24x128xf32>, i32 -> vector<24x128xf32>
    %c1_i32 = arith.constant 1 : i32
    %380 = tpu.dynamic_rotate %377 by %c1_i32 dim 1 : vector<24x128xf32>, i32 -> vector<24x128xf32>
    %c127_i32 = arith.constant 127 : i32
    %381 = tpu.dynamic_rotate %377 by %c127_i32 dim 1 : vector<24x128xf32>, i32 -> vector<24x128xf32>
    %c126_i32 = arith.constant 126 : i32
    %382 = tpu.dynamic_rotate %377 by %c126_i32 dim 1 : vector<24x128xf32>, i32 -> vector<24x128xf32>
    %c125_i32 = arith.constant 125 : i32
    %383 = tpu.dynamic_rotate %377 by %c125_i32 dim 1 : vector<24x128xf32>, i32 -> vector<24x128xf32>
    %384 = vector.extract_strided_slice %378 {offsets = [0, 0], sizes = [16, 128], strides = [1, 1]} : vector<24x128xf32> to vector<16x128xf32>
    %385 = vector.broadcast %0 : f32 to vector<16x128xf32>
    %386 = arith.mulf %385, %384 : vector<16x128xf32>
    %387 = arith.addf %372, %386 : vector<16x128xf32>
    %388 = vector.extract_strided_slice %379 {offsets = [0, 0], sizes = [16, 128], strides = [1, 1]} : vector<24x128xf32> to vector<16x128xf32>
    %389 = vector.broadcast %1 : f32 to vector<16x128xf32>
    %390 = arith.mulf %389, %388 : vector<16x128xf32>
    %391 = arith.addf %373, %390 : vector<16x128xf32>
    %392 = vector.extract_strided_slice %380 {offsets = [0, 0], sizes = [16, 128], strides = [1, 1]} : vector<24x128xf32> to vector<16x128xf32>
    %393 = vector.broadcast %2 : f32 to vector<16x128xf32>
    %394 = arith.mulf %393, %392 : vector<16x128xf32>
    %395 = arith.addf %374, %394 : vector<16x128xf32>
    %396 = vector.extract_strided_slice %377 {offsets = [0, 0], sizes = [16, 128], strides = [1, 1]} : vector<24x128xf32> to vector<16x128xf32>
    %397 = vector.broadcast %3 : f32 to vector<16x128xf32>
    %398 = arith.mulf %397, %396 : vector<16x128xf32>
    %399 = arith.addf %375, %398 : vector<16x128xf32>
    %400 = vector.extract_strided_slice %381 {offsets = [0, 0], sizes = [16, 128], strides = [1, 1]} : vector<24x128xf32> to vector<16x128xf32>
    %401 = vector.broadcast %4 : f32 to vector<16x128xf32>
    %402 = arith.mulf %401, %400 : vector<16x128xf32>
    %403 = arith.addf %387, %402 : vector<16x128xf32>
    %404 = vector.extract_strided_slice %382 {offsets = [0, 0], sizes = [16, 128], strides = [1, 1]} : vector<24x128xf32> to vector<16x128xf32>
    %405 = vector.broadcast %5 : f32 to vector<16x128xf32>
    %406 = arith.mulf %405, %404 : vector<16x128xf32>
    %407 = arith.addf %391, %406 : vector<16x128xf32>
    %408 = vector.extract_strided_slice %383 {offsets = [0, 0], sizes = [16, 128], strides = [1, 1]} : vector<24x128xf32> to vector<16x128xf32>
    %409 = vector.broadcast %6 : f32 to vector<16x128xf32>
    %410 = arith.mulf %409, %408 : vector<16x128xf32>
    %411 = arith.addf %395, %410 : vector<16x128xf32>
    %412 = vector.extract_strided_slice %378 {offsets = [1, 0], sizes = [16, 128], strides = [1, 1]} : vector<24x128xf32> to vector<16x128xf32>
    %413 = vector.broadcast %7 : f32 to vector<16x128xf32>
    %414 = arith.mulf %413, %412 : vector<16x128xf32>
    %415 = arith.addf %399, %414 : vector<16x128xf32>
    %416 = vector.extract_strided_slice %379 {offsets = [1, 0], sizes = [16, 128], strides = [1, 1]} : vector<24x128xf32> to vector<16x128xf32>
    %417 = vector.broadcast %8 : f32 to vector<16x128xf32>
    %418 = arith.mulf %417, %416 : vector<16x128xf32>
    %419 = arith.addf %403, %418 : vector<16x128xf32>
    %420 = vector.extract_strided_slice %380 {offsets = [1, 0], sizes = [16, 128], strides = [1, 1]} : vector<24x128xf32> to vector<16x128xf32>
    %421 = vector.broadcast %9 : f32 to vector<16x128xf32>
    %422 = arith.mulf %421, %420 : vector<16x128xf32>
    %423 = arith.addf %407, %422 : vector<16x128xf32>
    %424 = vector.extract_strided_slice %377 {offsets = [1, 0], sizes = [16, 128], strides = [1, 1]} : vector<24x128xf32> to vector<16x128xf32>
    %425 = vector.broadcast %10 : f32 to vector<16x128xf32>
    %426 = arith.mulf %425, %424 : vector<16x128xf32>
    %427 = arith.addf %411, %426 : vector<16x128xf32>
    %428 = vector.extract_strided_slice %381 {offsets = [1, 0], sizes = [16, 128], strides = [1, 1]} : vector<24x128xf32> to vector<16x128xf32>
    %429 = vector.broadcast %11 : f32 to vector<16x128xf32>
    %430 = arith.mulf %429, %428 : vector<16x128xf32>
    %431 = arith.addf %415, %430 : vector<16x128xf32>
    %432 = vector.extract_strided_slice %382 {offsets = [1, 0], sizes = [16, 128], strides = [1, 1]} : vector<24x128xf32> to vector<16x128xf32>
    %433 = vector.broadcast %12 : f32 to vector<16x128xf32>
    %434 = arith.mulf %433, %432 : vector<16x128xf32>
    %435 = arith.addf %419, %434 : vector<16x128xf32>
    %436 = vector.extract_strided_slice %383 {offsets = [1, 0], sizes = [16, 128], strides = [1, 1]} : vector<24x128xf32> to vector<16x128xf32>
    %437 = vector.broadcast %13 : f32 to vector<16x128xf32>
    %438 = arith.mulf %437, %436 : vector<16x128xf32>
    %439 = arith.addf %423, %438 : vector<16x128xf32>
    %440 = vector.extract_strided_slice %378 {offsets = [2, 0], sizes = [16, 128], strides = [1, 1]} : vector<24x128xf32> to vector<16x128xf32>
    %441 = vector.broadcast %14 : f32 to vector<16x128xf32>
    %442 = arith.mulf %441, %440 : vector<16x128xf32>
    %443 = arith.addf %427, %442 : vector<16x128xf32>
    %444 = vector.extract_strided_slice %379 {offsets = [2, 0], sizes = [16, 128], strides = [1, 1]} : vector<24x128xf32> to vector<16x128xf32>
    %445 = vector.broadcast %15 : f32 to vector<16x128xf32>
    %446 = arith.mulf %445, %444 : vector<16x128xf32>
    %447 = arith.addf %431, %446 : vector<16x128xf32>
    %448 = vector.extract_strided_slice %380 {offsets = [2, 0], sizes = [16, 128], strides = [1, 1]} : vector<24x128xf32> to vector<16x128xf32>
    %449 = vector.broadcast %16 : f32 to vector<16x128xf32>
    %450 = arith.mulf %449, %448 : vector<16x128xf32>
    %451 = arith.addf %435, %450 : vector<16x128xf32>
    %452 = vector.extract_strided_slice %377 {offsets = [2, 0], sizes = [16, 128], strides = [1, 1]} : vector<24x128xf32> to vector<16x128xf32>
    %453 = vector.broadcast %17 : f32 to vector<16x128xf32>
    %454 = arith.mulf %453, %452 : vector<16x128xf32>
    %455 = arith.addf %439, %454 : vector<16x128xf32>
    %456 = vector.extract_strided_slice %381 {offsets = [2, 0], sizes = [16, 128], strides = [1, 1]} : vector<24x128xf32> to vector<16x128xf32>
    %457 = vector.broadcast %18 : f32 to vector<16x128xf32>
    %458 = arith.mulf %457, %456 : vector<16x128xf32>
    %459 = arith.addf %443, %458 : vector<16x128xf32>
    %460 = vector.extract_strided_slice %382 {offsets = [2, 0], sizes = [16, 128], strides = [1, 1]} : vector<24x128xf32> to vector<16x128xf32>
    %461 = vector.broadcast %19 : f32 to vector<16x128xf32>
    %462 = arith.mulf %461, %460 : vector<16x128xf32>
    %463 = arith.addf %447, %462 : vector<16x128xf32>
    %464 = vector.extract_strided_slice %383 {offsets = [2, 0], sizes = [16, 128], strides = [1, 1]} : vector<24x128xf32> to vector<16x128xf32>
    %465 = vector.broadcast %20 : f32 to vector<16x128xf32>
    %466 = arith.mulf %465, %464 : vector<16x128xf32>
    %467 = arith.addf %451, %466 : vector<16x128xf32>
    %468 = vector.extract_strided_slice %378 {offsets = [3, 0], sizes = [16, 128], strides = [1, 1]} : vector<24x128xf32> to vector<16x128xf32>
    %469 = vector.broadcast %21 : f32 to vector<16x128xf32>
    %470 = arith.mulf %469, %468 : vector<16x128xf32>
    %471 = arith.addf %455, %470 : vector<16x128xf32>
    %472 = vector.extract_strided_slice %379 {offsets = [3, 0], sizes = [16, 128], strides = [1, 1]} : vector<24x128xf32> to vector<16x128xf32>
    %473 = vector.broadcast %22 : f32 to vector<16x128xf32>
    %474 = arith.mulf %473, %472 : vector<16x128xf32>
    %475 = arith.addf %459, %474 : vector<16x128xf32>
    %476 = vector.extract_strided_slice %380 {offsets = [3, 0], sizes = [16, 128], strides = [1, 1]} : vector<24x128xf32> to vector<16x128xf32>
    %477 = vector.broadcast %23 : f32 to vector<16x128xf32>
    %478 = arith.mulf %477, %476 : vector<16x128xf32>
    %479 = arith.addf %463, %478 : vector<16x128xf32>
    %480 = vector.extract_strided_slice %377 {offsets = [3, 0], sizes = [16, 128], strides = [1, 1]} : vector<24x128xf32> to vector<16x128xf32>
    %481 = vector.broadcast %24 : f32 to vector<16x128xf32>
    %482 = arith.mulf %481, %480 : vector<16x128xf32>
    %483 = arith.addf %467, %482 : vector<16x128xf32>
    %484 = vector.extract_strided_slice %381 {offsets = [3, 0], sizes = [16, 128], strides = [1, 1]} : vector<24x128xf32> to vector<16x128xf32>
    %485 = vector.broadcast %25 : f32 to vector<16x128xf32>
    %486 = arith.mulf %485, %484 : vector<16x128xf32>
    %487 = arith.addf %471, %486 : vector<16x128xf32>
    %488 = vector.extract_strided_slice %382 {offsets = [3, 0], sizes = [16, 128], strides = [1, 1]} : vector<24x128xf32> to vector<16x128xf32>
    %489 = vector.broadcast %26 : f32 to vector<16x128xf32>
    %490 = arith.mulf %489, %488 : vector<16x128xf32>
    %491 = arith.addf %475, %490 : vector<16x128xf32>
    %492 = vector.extract_strided_slice %383 {offsets = [3, 0], sizes = [16, 128], strides = [1, 1]} : vector<24x128xf32> to vector<16x128xf32>
    %493 = vector.broadcast %27 : f32 to vector<16x128xf32>
    %494 = arith.mulf %493, %492 : vector<16x128xf32>
    %495 = arith.addf %479, %494 : vector<16x128xf32>
    %496 = vector.extract_strided_slice %378 {offsets = [4, 0], sizes = [16, 128], strides = [1, 1]} : vector<24x128xf32> to vector<16x128xf32>
    %497 = vector.broadcast %28 : f32 to vector<16x128xf32>
    %498 = arith.mulf %497, %496 : vector<16x128xf32>
    %499 = arith.addf %483, %498 : vector<16x128xf32>
    %500 = vector.extract_strided_slice %379 {offsets = [4, 0], sizes = [16, 128], strides = [1, 1]} : vector<24x128xf32> to vector<16x128xf32>
    %501 = vector.broadcast %29 : f32 to vector<16x128xf32>
    %502 = arith.mulf %501, %500 : vector<16x128xf32>
    %503 = arith.addf %487, %502 : vector<16x128xf32>
    %504 = vector.extract_strided_slice %380 {offsets = [4, 0], sizes = [16, 128], strides = [1, 1]} : vector<24x128xf32> to vector<16x128xf32>
    %505 = vector.broadcast %30 : f32 to vector<16x128xf32>
    %506 = arith.mulf %505, %504 : vector<16x128xf32>
    %507 = arith.addf %491, %506 : vector<16x128xf32>
    %508 = vector.extract_strided_slice %377 {offsets = [4, 0], sizes = [16, 128], strides = [1, 1]} : vector<24x128xf32> to vector<16x128xf32>
    %509 = vector.broadcast %31 : f32 to vector<16x128xf32>
    %510 = arith.mulf %509, %508 : vector<16x128xf32>
    %511 = arith.addf %495, %510 : vector<16x128xf32>
    %512 = vector.extract_strided_slice %381 {offsets = [4, 0], sizes = [16, 128], strides = [1, 1]} : vector<24x128xf32> to vector<16x128xf32>
    %513 = vector.broadcast %32 : f32 to vector<16x128xf32>
    %514 = arith.mulf %513, %512 : vector<16x128xf32>
    %515 = arith.addf %499, %514 : vector<16x128xf32>
    %516 = vector.extract_strided_slice %382 {offsets = [4, 0], sizes = [16, 128], strides = [1, 1]} : vector<24x128xf32> to vector<16x128xf32>
    %517 = vector.broadcast %33 : f32 to vector<16x128xf32>
    %518 = arith.mulf %517, %516 : vector<16x128xf32>
    %519 = arith.addf %503, %518 : vector<16x128xf32>
    %520 = vector.extract_strided_slice %383 {offsets = [4, 0], sizes = [16, 128], strides = [1, 1]} : vector<24x128xf32> to vector<16x128xf32>
    %521 = vector.broadcast %34 : f32 to vector<16x128xf32>
    %522 = arith.mulf %521, %520 : vector<16x128xf32>
    %523 = arith.addf %507, %522 : vector<16x128xf32>
    %524 = vector.extract_strided_slice %378 {offsets = [5, 0], sizes = [16, 128], strides = [1, 1]} : vector<24x128xf32> to vector<16x128xf32>
    %525 = vector.broadcast %35 : f32 to vector<16x128xf32>
    %526 = arith.mulf %525, %524 : vector<16x128xf32>
    %527 = arith.addf %511, %526 : vector<16x128xf32>
    %528 = vector.extract_strided_slice %379 {offsets = [5, 0], sizes = [16, 128], strides = [1, 1]} : vector<24x128xf32> to vector<16x128xf32>
    %529 = vector.broadcast %36 : f32 to vector<16x128xf32>
    %530 = arith.mulf %529, %528 : vector<16x128xf32>
    %531 = arith.addf %515, %530 : vector<16x128xf32>
    %532 = vector.extract_strided_slice %380 {offsets = [5, 0], sizes = [16, 128], strides = [1, 1]} : vector<24x128xf32> to vector<16x128xf32>
    %533 = vector.broadcast %37 : f32 to vector<16x128xf32>
    %534 = arith.mulf %533, %532 : vector<16x128xf32>
    %535 = arith.addf %519, %534 : vector<16x128xf32>
    %536 = vector.extract_strided_slice %377 {offsets = [5, 0], sizes = [16, 128], strides = [1, 1]} : vector<24x128xf32> to vector<16x128xf32>
    %537 = vector.broadcast %38 : f32 to vector<16x128xf32>
    %538 = arith.mulf %537, %536 : vector<16x128xf32>
    %539 = arith.addf %523, %538 : vector<16x128xf32>
    %540 = vector.extract_strided_slice %381 {offsets = [5, 0], sizes = [16, 128], strides = [1, 1]} : vector<24x128xf32> to vector<16x128xf32>
    %541 = vector.broadcast %39 : f32 to vector<16x128xf32>
    %542 = arith.mulf %541, %540 : vector<16x128xf32>
    %543 = arith.addf %527, %542 : vector<16x128xf32>
    %544 = vector.extract_strided_slice %382 {offsets = [5, 0], sizes = [16, 128], strides = [1, 1]} : vector<24x128xf32> to vector<16x128xf32>
    %545 = vector.broadcast %40 : f32 to vector<16x128xf32>
    %546 = arith.mulf %545, %544 : vector<16x128xf32>
    %547 = arith.addf %531, %546 : vector<16x128xf32>
    %548 = vector.extract_strided_slice %383 {offsets = [5, 0], sizes = [16, 128], strides = [1, 1]} : vector<24x128xf32> to vector<16x128xf32>
    %549 = vector.broadcast %41 : f32 to vector<16x128xf32>
    %550 = arith.mulf %549, %548 : vector<16x128xf32>
    %551 = arith.addf %535, %550 : vector<16x128xf32>
    %552 = vector.extract_strided_slice %378 {offsets = [6, 0], sizes = [16, 128], strides = [1, 1]} : vector<24x128xf32> to vector<16x128xf32>
    %553 = vector.broadcast %42 : f32 to vector<16x128xf32>
    %554 = arith.mulf %553, %552 : vector<16x128xf32>
    %555 = arith.addf %539, %554 : vector<16x128xf32>
    %556 = vector.extract_strided_slice %379 {offsets = [6, 0], sizes = [16, 128], strides = [1, 1]} : vector<24x128xf32> to vector<16x128xf32>
    %557 = vector.broadcast %43 : f32 to vector<16x128xf32>
    %558 = arith.mulf %557, %556 : vector<16x128xf32>
    %559 = arith.addf %543, %558 : vector<16x128xf32>
    %560 = vector.extract_strided_slice %380 {offsets = [6, 0], sizes = [16, 128], strides = [1, 1]} : vector<24x128xf32> to vector<16x128xf32>
    %561 = vector.broadcast %44 : f32 to vector<16x128xf32>
    %562 = arith.mulf %561, %560 : vector<16x128xf32>
    %563 = arith.addf %547, %562 : vector<16x128xf32>
    %564 = vector.extract_strided_slice %377 {offsets = [6, 0], sizes = [16, 128], strides = [1, 1]} : vector<24x128xf32> to vector<16x128xf32>
    %565 = vector.broadcast %45 : f32 to vector<16x128xf32>
    %566 = arith.mulf %565, %564 : vector<16x128xf32>
    %567 = arith.addf %551, %566 : vector<16x128xf32>
    %568 = vector.extract_strided_slice %381 {offsets = [6, 0], sizes = [16, 128], strides = [1, 1]} : vector<24x128xf32> to vector<16x128xf32>
    %569 = vector.broadcast %46 : f32 to vector<16x128xf32>
    %570 = arith.mulf %569, %568 : vector<16x128xf32>
    %571 = arith.addf %555, %570 : vector<16x128xf32>
    %572 = vector.extract_strided_slice %382 {offsets = [6, 0], sizes = [16, 128], strides = [1, 1]} : vector<24x128xf32> to vector<16x128xf32>
    %573 = vector.broadcast %47 : f32 to vector<16x128xf32>
    %574 = arith.mulf %573, %572 : vector<16x128xf32>
    %575 = arith.addf %559, %574 : vector<16x128xf32>
    %576 = vector.extract_strided_slice %383 {offsets = [6, 0], sizes = [16, 128], strides = [1, 1]} : vector<24x128xf32> to vector<16x128xf32>
    %577 = vector.broadcast %48 : f32 to vector<16x128xf32>
    %578 = arith.mulf %577, %576 : vector<16x128xf32>
    %579 = arith.addf %563, %578 : vector<16x128xf32>
    %c1_214 = arith.constant 1 : index
    %c0_215 = arith.constant 0 : index
    %c0_216 = arith.constant 0 : index
    %580 = vector.load %arg4[%c1_214, %c0_215, %c0_216] : memref<2x24x128xf32, #tpu.memory_space<vmem>>, vector<1x24x128xf32>
    %581 = vector.shape_cast %580 : vector<1x24x128xf32> to vector<24x128xf32>
    %c3_i32_217 = arith.constant 3 : i32
    %582 = tpu.dynamic_rotate %581 by %c3_i32_217 dim 1 : vector<24x128xf32>, i32 -> vector<24x128xf32>
    %c2_i32_218 = arith.constant 2 : i32
    %583 = tpu.dynamic_rotate %581 by %c2_i32_218 dim 1 : vector<24x128xf32>, i32 -> vector<24x128xf32>
    %c1_i32_219 = arith.constant 1 : i32
    %584 = tpu.dynamic_rotate %581 by %c1_i32_219 dim 1 : vector<24x128xf32>, i32 -> vector<24x128xf32>
    %c127_i32_220 = arith.constant 127 : i32
    %585 = tpu.dynamic_rotate %581 by %c127_i32_220 dim 1 : vector<24x128xf32>, i32 -> vector<24x128xf32>
    %c126_i32_221 = arith.constant 126 : i32
    %586 = tpu.dynamic_rotate %581 by %c126_i32_221 dim 1 : vector<24x128xf32>, i32 -> vector<24x128xf32>
    %c125_i32_222 = arith.constant 125 : i32
    %587 = tpu.dynamic_rotate %581 by %c125_i32_222 dim 1 : vector<24x128xf32>, i32 -> vector<24x128xf32>
    %588 = vector.extract_strided_slice %582 {offsets = [0, 0], sizes = [16, 128], strides = [1, 1]} : vector<24x128xf32> to vector<16x128xf32>
    %589 = vector.broadcast %49 : f32 to vector<16x128xf32>
    %590 = arith.mulf %589, %588 : vector<16x128xf32>
    %591 = arith.addf %579, %590 : vector<16x128xf32>
    %592 = vector.extract_strided_slice %583 {offsets = [0, 0], sizes = [16, 128], strides = [1, 1]} : vector<24x128xf32> to vector<16x128xf32>
    %593 = vector.broadcast %50 : f32 to vector<16x128xf32>
    %594 = arith.mulf %593, %592 : vector<16x128xf32>
    %595 = arith.addf %567, %594 : vector<16x128xf32>
    %596 = vector.extract_strided_slice %584 {offsets = [0, 0], sizes = [16, 128], strides = [1, 1]} : vector<24x128xf32> to vector<16x128xf32>
    %597 = vector.broadcast %51 : f32 to vector<16x128xf32>
    %598 = arith.mulf %597, %596 : vector<16x128xf32>
    %599 = arith.addf %571, %598 : vector<16x128xf32>
    %600 = vector.extract_strided_slice %581 {offsets = [0, 0], sizes = [16, 128], strides = [1, 1]} : vector<24x128xf32> to vector<16x128xf32>
    %601 = vector.broadcast %52 : f32 to vector<16x128xf32>
    %602 = arith.mulf %601, %600 : vector<16x128xf32>
    %603 = arith.addf %575, %602 : vector<16x128xf32>
    %604 = vector.extract_strided_slice %585 {offsets = [0, 0], sizes = [16, 128], strides = [1, 1]} : vector<24x128xf32> to vector<16x128xf32>
    %605 = vector.broadcast %53 : f32 to vector<16x128xf32>
    %606 = arith.mulf %605, %604 : vector<16x128xf32>
    %607 = arith.addf %591, %606 : vector<16x128xf32>
    %608 = vector.extract_strided_slice %586 {offsets = [0, 0], sizes = [16, 128], strides = [1, 1]} : vector<24x128xf32> to vector<16x128xf32>
    %609 = vector.broadcast %54 : f32 to vector<16x128xf32>
    %610 = arith.mulf %609, %608 : vector<16x128xf32>
    %611 = arith.addf %595, %610 : vector<16x128xf32>
    %612 = vector.extract_strided_slice %587 {offsets = [0, 0], sizes = [16, 128], strides = [1, 1]} : vector<24x128xf32> to vector<16x128xf32>
    %613 = vector.broadcast %55 : f32 to vector<16x128xf32>
    %614 = arith.mulf %613, %612 : vector<16x128xf32>
    %615 = arith.addf %599, %614 : vector<16x128xf32>
    %616 = vector.extract_strided_slice %582 {offsets = [1, 0], sizes = [16, 128], strides = [1, 1]} : vector<24x128xf32> to vector<16x128xf32>
    %617 = vector.broadcast %56 : f32 to vector<16x128xf32>
    %618 = arith.mulf %617, %616 : vector<16x128xf32>
    %619 = arith.addf %603, %618 : vector<16x128xf32>
    %620 = vector.extract_strided_slice %583 {offsets = [1, 0], sizes = [16, 128], strides = [1, 1]} : vector<24x128xf32> to vector<16x128xf32>
    %621 = vector.broadcast %57 : f32 to vector<16x128xf32>
    %622 = arith.mulf %621, %620 : vector<16x128xf32>
    %623 = arith.addf %607, %622 : vector<16x128xf32>
    %624 = vector.extract_strided_slice %584 {offsets = [1, 0], sizes = [16, 128], strides = [1, 1]} : vector<24x128xf32> to vector<16x128xf32>
    %625 = vector.broadcast %58 : f32 to vector<16x128xf32>
    %626 = arith.mulf %625, %624 : vector<16x128xf32>
    %627 = arith.addf %611, %626 : vector<16x128xf32>
    %628 = vector.extract_strided_slice %581 {offsets = [1, 0], sizes = [16, 128], strides = [1, 1]} : vector<24x128xf32> to vector<16x128xf32>
    %629 = vector.broadcast %59 : f32 to vector<16x128xf32>
    %630 = arith.mulf %629, %628 : vector<16x128xf32>
    %631 = arith.addf %615, %630 : vector<16x128xf32>
    %632 = vector.extract_strided_slice %585 {offsets = [1, 0], sizes = [16, 128], strides = [1, 1]} : vector<24x128xf32> to vector<16x128xf32>
    %633 = vector.broadcast %60 : f32 to vector<16x128xf32>
    %634 = arith.mulf %633, %632 : vector<16x128xf32>
    %635 = arith.addf %619, %634 : vector<16x128xf32>
    %636 = vector.extract_strided_slice %586 {offsets = [1, 0], sizes = [16, 128], strides = [1, 1]} : vector<24x128xf32> to vector<16x128xf32>
    %637 = vector.broadcast %61 : f32 to vector<16x128xf32>
    %638 = arith.mulf %637, %636 : vector<16x128xf32>
    %639 = arith.addf %623, %638 : vector<16x128xf32>
    %640 = vector.extract_strided_slice %587 {offsets = [1, 0], sizes = [16, 128], strides = [1, 1]} : vector<24x128xf32> to vector<16x128xf32>
    %641 = vector.broadcast %62 : f32 to vector<16x128xf32>
    %642 = arith.mulf %641, %640 : vector<16x128xf32>
    %643 = arith.addf %627, %642 : vector<16x128xf32>
    %644 = vector.extract_strided_slice %582 {offsets = [2, 0], sizes = [16, 128], strides = [1, 1]} : vector<24x128xf32> to vector<16x128xf32>
    %645 = vector.broadcast %63 : f32 to vector<16x128xf32>
    %646 = arith.mulf %645, %644 : vector<16x128xf32>
    %647 = arith.addf %631, %646 : vector<16x128xf32>
    %648 = vector.extract_strided_slice %583 {offsets = [2, 0], sizes = [16, 128], strides = [1, 1]} : vector<24x128xf32> to vector<16x128xf32>
    %649 = vector.broadcast %64 : f32 to vector<16x128xf32>
    %650 = arith.mulf %649, %648 : vector<16x128xf32>
    %651 = arith.addf %635, %650 : vector<16x128xf32>
    %652 = vector.extract_strided_slice %584 {offsets = [2, 0], sizes = [16, 128], strides = [1, 1]} : vector<24x128xf32> to vector<16x128xf32>
    %653 = vector.broadcast %65 : f32 to vector<16x128xf32>
    %654 = arith.mulf %653, %652 : vector<16x128xf32>
    %655 = arith.addf %639, %654 : vector<16x128xf32>
    %656 = vector.extract_strided_slice %581 {offsets = [2, 0], sizes = [16, 128], strides = [1, 1]} : vector<24x128xf32> to vector<16x128xf32>
    %657 = vector.broadcast %66 : f32 to vector<16x128xf32>
    %658 = arith.mulf %657, %656 : vector<16x128xf32>
    %659 = arith.addf %643, %658 : vector<16x128xf32>
    %660 = vector.extract_strided_slice %585 {offsets = [2, 0], sizes = [16, 128], strides = [1, 1]} : vector<24x128xf32> to vector<16x128xf32>
    %661 = vector.broadcast %67 : f32 to vector<16x128xf32>
    %662 = arith.mulf %661, %660 : vector<16x128xf32>
    %663 = arith.addf %647, %662 : vector<16x128xf32>
    %664 = vector.extract_strided_slice %586 {offsets = [2, 0], sizes = [16, 128], strides = [1, 1]} : vector<24x128xf32> to vector<16x128xf32>
    %665 = vector.broadcast %68 : f32 to vector<16x128xf32>
    %666 = arith.mulf %665, %664 : vector<16x128xf32>
    %667 = arith.addf %651, %666 : vector<16x128xf32>
    %668 = vector.extract_strided_slice %587 {offsets = [2, 0], sizes = [16, 128], strides = [1, 1]} : vector<24x128xf32> to vector<16x128xf32>
    %669 = vector.broadcast %69 : f32 to vector<16x128xf32>
    %670 = arith.mulf %669, %668 : vector<16x128xf32>
    %671 = arith.addf %655, %670 : vector<16x128xf32>
    %672 = vector.extract_strided_slice %582 {offsets = [3, 0], sizes = [16, 128], strides = [1, 1]} : vector<24x128xf32> to vector<16x128xf32>
    %673 = vector.broadcast %70 : f32 to vector<16x128xf32>
    %674 = arith.mulf %673, %672 : vector<16x128xf32>
    %675 = arith.addf %659, %674 : vector<16x128xf32>
    %676 = vector.extract_strided_slice %583 {offsets = [3, 0], sizes = [16, 128], strides = [1, 1]} : vector<24x128xf32> to vector<16x128xf32>
    %677 = vector.broadcast %71 : f32 to vector<16x128xf32>
    %678 = arith.mulf %677, %676 : vector<16x128xf32>
    %679 = arith.addf %663, %678 : vector<16x128xf32>
    %680 = vector.extract_strided_slice %584 {offsets = [3, 0], sizes = [16, 128], strides = [1, 1]} : vector<24x128xf32> to vector<16x128xf32>
    %681 = vector.broadcast %72 : f32 to vector<16x128xf32>
    %682 = arith.mulf %681, %680 : vector<16x128xf32>
    %683 = arith.addf %667, %682 : vector<16x128xf32>
    %684 = vector.extract_strided_slice %581 {offsets = [3, 0], sizes = [16, 128], strides = [1, 1]} : vector<24x128xf32> to vector<16x128xf32>
    %685 = vector.broadcast %73 : f32 to vector<16x128xf32>
    %686 = arith.mulf %685, %684 : vector<16x128xf32>
    %687 = arith.addf %671, %686 : vector<16x128xf32>
    %688 = vector.extract_strided_slice %585 {offsets = [3, 0], sizes = [16, 128], strides = [1, 1]} : vector<24x128xf32> to vector<16x128xf32>
    %689 = vector.broadcast %74 : f32 to vector<16x128xf32>
    %690 = arith.mulf %689, %688 : vector<16x128xf32>
    %691 = arith.addf %675, %690 : vector<16x128xf32>
    %692 = vector.extract_strided_slice %586 {offsets = [3, 0], sizes = [16, 128], strides = [1, 1]} : vector<24x128xf32> to vector<16x128xf32>
    %693 = vector.broadcast %75 : f32 to vector<16x128xf32>
    %694 = arith.mulf %693, %692 : vector<16x128xf32>
    %695 = arith.addf %679, %694 : vector<16x128xf32>
    %696 = vector.extract_strided_slice %587 {offsets = [3, 0], sizes = [16, 128], strides = [1, 1]} : vector<24x128xf32> to vector<16x128xf32>
    %697 = vector.broadcast %76 : f32 to vector<16x128xf32>
    %698 = arith.mulf %697, %696 : vector<16x128xf32>
    %699 = arith.addf %683, %698 : vector<16x128xf32>
    %700 = vector.extract_strided_slice %582 {offsets = [4, 0], sizes = [16, 128], strides = [1, 1]} : vector<24x128xf32> to vector<16x128xf32>
    %701 = vector.broadcast %77 : f32 to vector<16x128xf32>
    %702 = arith.mulf %701, %700 : vector<16x128xf32>
    %703 = arith.addf %687, %702 : vector<16x128xf32>
    %704 = vector.extract_strided_slice %583 {offsets = [4, 0], sizes = [16, 128], strides = [1, 1]} : vector<24x128xf32> to vector<16x128xf32>
    %705 = vector.broadcast %78 : f32 to vector<16x128xf32>
    %706 = arith.mulf %705, %704 : vector<16x128xf32>
    %707 = arith.addf %691, %706 : vector<16x128xf32>
    %708 = vector.extract_strided_slice %584 {offsets = [4, 0], sizes = [16, 128], strides = [1, 1]} : vector<24x128xf32> to vector<16x128xf32>
    %709 = vector.broadcast %79 : f32 to vector<16x128xf32>
    %710 = arith.mulf %709, %708 : vector<16x128xf32>
    %711 = arith.addf %695, %710 : vector<16x128xf32>
    %712 = vector.extract_strided_slice %581 {offsets = [4, 0], sizes = [16, 128], strides = [1, 1]} : vector<24x128xf32> to vector<16x128xf32>
    %713 = vector.broadcast %80 : f32 to vector<16x128xf32>
    %714 = arith.mulf %713, %712 : vector<16x128xf32>
    %715 = arith.addf %699, %714 : vector<16x128xf32>
    %716 = vector.extract_strided_slice %585 {offsets = [4, 0], sizes = [16, 128], strides = [1, 1]} : vector<24x128xf32> to vector<16x128xf32>
    %717 = vector.broadcast %81 : f32 to vector<16x128xf32>
    %718 = arith.mulf %717, %716 : vector<16x128xf32>
    %719 = arith.addf %703, %718 : vector<16x128xf32>
    %720 = vector.extract_strided_slice %586 {offsets = [4, 0], sizes = [16, 128], strides = [1, 1]} : vector<24x128xf32> to vector<16x128xf32>
    %721 = vector.broadcast %82 : f32 to vector<16x128xf32>
    %722 = arith.mulf %721, %720 : vector<16x128xf32>
    %723 = arith.addf %707, %722 : vector<16x128xf32>
    %724 = vector.extract_strided_slice %587 {offsets = [4, 0], sizes = [16, 128], strides = [1, 1]} : vector<24x128xf32> to vector<16x128xf32>
    %725 = vector.broadcast %83 : f32 to vector<16x128xf32>
    %726 = arith.mulf %725, %724 : vector<16x128xf32>
    %727 = arith.addf %711, %726 : vector<16x128xf32>
    %728 = vector.extract_strided_slice %582 {offsets = [5, 0], sizes = [16, 128], strides = [1, 1]} : vector<24x128xf32> to vector<16x128xf32>
    %729 = vector.broadcast %84 : f32 to vector<16x128xf32>
    %730 = arith.mulf %729, %728 : vector<16x128xf32>
    %731 = arith.addf %715, %730 : vector<16x128xf32>
    %732 = vector.extract_strided_slice %583 {offsets = [5, 0], sizes = [16, 128], strides = [1, 1]} : vector<24x128xf32> to vector<16x128xf32>
    %733 = vector.broadcast %85 : f32 to vector<16x128xf32>
    %734 = arith.mulf %733, %732 : vector<16x128xf32>
    %735 = arith.addf %719, %734 : vector<16x128xf32>
    %736 = vector.extract_strided_slice %584 {offsets = [5, 0], sizes = [16, 128], strides = [1, 1]} : vector<24x128xf32> to vector<16x128xf32>
    %737 = vector.broadcast %86 : f32 to vector<16x128xf32>
    %738 = arith.mulf %737, %736 : vector<16x128xf32>
    %739 = arith.addf %723, %738 : vector<16x128xf32>
    %740 = vector.extract_strided_slice %581 {offsets = [5, 0], sizes = [16, 128], strides = [1, 1]} : vector<24x128xf32> to vector<16x128xf32>
    %741 = vector.broadcast %87 : f32 to vector<16x128xf32>
    %742 = arith.mulf %741, %740 : vector<16x128xf32>
    %743 = arith.addf %727, %742 : vector<16x128xf32>
    %744 = vector.extract_strided_slice %585 {offsets = [5, 0], sizes = [16, 128], strides = [1, 1]} : vector<24x128xf32> to vector<16x128xf32>
    %745 = vector.broadcast %88 : f32 to vector<16x128xf32>
    %746 = arith.mulf %745, %744 : vector<16x128xf32>
    %747 = arith.addf %731, %746 : vector<16x128xf32>
    %748 = vector.extract_strided_slice %586 {offsets = [5, 0], sizes = [16, 128], strides = [1, 1]} : vector<24x128xf32> to vector<16x128xf32>
    %749 = vector.broadcast %89 : f32 to vector<16x128xf32>
    %750 = arith.mulf %749, %748 : vector<16x128xf32>
    %751 = arith.addf %735, %750 : vector<16x128xf32>
    %752 = vector.extract_strided_slice %587 {offsets = [5, 0], sizes = [16, 128], strides = [1, 1]} : vector<24x128xf32> to vector<16x128xf32>
    %753 = vector.broadcast %90 : f32 to vector<16x128xf32>
    %754 = arith.mulf %753, %752 : vector<16x128xf32>
    %755 = arith.addf %739, %754 : vector<16x128xf32>
    %756 = vector.extract_strided_slice %582 {offsets = [6, 0], sizes = [16, 128], strides = [1, 1]} : vector<24x128xf32> to vector<16x128xf32>
    %757 = vector.broadcast %91 : f32 to vector<16x128xf32>
    %758 = arith.mulf %757, %756 : vector<16x128xf32>
    %759 = arith.addf %743, %758 : vector<16x128xf32>
    %760 = vector.extract_strided_slice %583 {offsets = [6, 0], sizes = [16, 128], strides = [1, 1]} : vector<24x128xf32> to vector<16x128xf32>
    %761 = vector.broadcast %92 : f32 to vector<16x128xf32>
    %762 = arith.mulf %761, %760 : vector<16x128xf32>
    %763 = arith.addf %747, %762 : vector<16x128xf32>
    %764 = vector.extract_strided_slice %584 {offsets = [6, 0], sizes = [16, 128], strides = [1, 1]} : vector<24x128xf32> to vector<16x128xf32>
    %765 = vector.broadcast %93 : f32 to vector<16x128xf32>
    %766 = arith.mulf %765, %764 : vector<16x128xf32>
    %767 = arith.addf %751, %766 : vector<16x128xf32>
    %768 = vector.extract_strided_slice %581 {offsets = [6, 0], sizes = [16, 128], strides = [1, 1]} : vector<24x128xf32> to vector<16x128xf32>
    %769 = vector.broadcast %94 : f32 to vector<16x128xf32>
    %770 = arith.mulf %769, %768 : vector<16x128xf32>
    %771 = arith.addf %755, %770 : vector<16x128xf32>
    %772 = vector.extract_strided_slice %585 {offsets = [6, 0], sizes = [16, 128], strides = [1, 1]} : vector<24x128xf32> to vector<16x128xf32>
    %773 = vector.broadcast %95 : f32 to vector<16x128xf32>
    %774 = arith.mulf %773, %772 : vector<16x128xf32>
    %775 = arith.addf %759, %774 : vector<16x128xf32>
    %776 = vector.extract_strided_slice %586 {offsets = [6, 0], sizes = [16, 128], strides = [1, 1]} : vector<24x128xf32> to vector<16x128xf32>
    %777 = vector.broadcast %96 : f32 to vector<16x128xf32>
    %778 = arith.mulf %777, %776 : vector<16x128xf32>
    %779 = arith.addf %763, %778 : vector<16x128xf32>
    %780 = vector.extract_strided_slice %587 {offsets = [6, 0], sizes = [16, 128], strides = [1, 1]} : vector<24x128xf32> to vector<16x128xf32>
    %781 = vector.broadcast %97 : f32 to vector<16x128xf32>
    %782 = arith.mulf %781, %780 : vector<16x128xf32>
    %783 = arith.addf %767, %782 : vector<16x128xf32>
    %784 = arith.addf %783, %771 : vector<16x128xf32>
    %785 = arith.addf %775, %779 : vector<16x128xf32>
    %786 = arith.addf %784, %785 : vector<16x128xf32>
    %cst_223 = arith.constant 0.000000e+00 : f32
    %787 = vector.broadcast %cst_223 : f32 to vector<16x128xf32>
    %788 = arith.subf %787, %786 : vector<16x128xf32>
    %789 = math.exp %788 : vector<16x128xf32>
    %cst_224 = arith.constant 1.000000e+00 : f32
    %790 = vector.broadcast %cst_224 : f32 to vector<16x128xf32>
    %791 = arith.addf %790, %789 : vector<16x128xf32>
    %792 = tpu.reciprocal %791 : vector<16x128xf32> -> vector<16x128xf32>
    %793 = vector.extract_strided_slice %792 {offsets = [0, 3], sizes = [16, 16], strides = [1, 1]} : vector<16x128xf32> to vector<16x16xf32>
    %c0_225 = arith.constant 0 : index
    %c0_226 = arith.constant 0 : index
    %c0_227 = arith.constant 0 : index
    %c0_228 = arith.constant 0 : index
    %794 = vector.load %arg3[%c0_225, %c0_226, %c0_227, %c0_228] : memref<2x1x16x16xf32, #tpu.memory_space<vmem>>, vector<1x1x16x16xf32>
    %795 = vector.shape_cast %794 : vector<1x1x16x16xf32> to vector<16x16xf32>
    %796 = vector.shape_cast %793 : vector<16x16xf32> to vector<1x1x16x16xf32>
    tpu.vector_store %arg3[%c0_225, %c0_226, %c0_227, %c0_228], %796 {strides = array<i32>} : memref<2x1x16x16xf32, #tpu.memory_space<vmem>>, vector<1x1x16x16xf32>,
    %797 = vector.extract_strided_slice %792 {offsets = [0, 25], sizes = [16, 16], strides = [1, 1]} : vector<16x128xf32> to vector<16x16xf32>
    %c1_229 = arith.constant 1 : index
    %c0_230 = arith.constant 0 : index
    %c0_231 = arith.constant 0 : index
    %c0_232 = arith.constant 0 : index
    %798 = vector.load %arg3[%c1_229, %c0_230, %c0_231, %c0_232] : memref<2x1x16x16xf32, #tpu.memory_space<vmem>>, vector<1x1x16x16xf32>
    %799 = vector.shape_cast %798 : vector<1x1x16x16xf32> to vector<16x16xf32>
    %800 = vector.shape_cast %797 : vector<16x16xf32> to vector<1x1x16x16xf32>
    tpu.vector_store %arg3[%c1_229, %c0_230, %c0_231, %c0_232], %800 {strides = array<i32>} : memref<2x1x16x16xf32, #tpu.memory_space<vmem>>, vector<1x1x16x16xf32>,
    return
  }
  func.func @transform_0(%arg0: i32) -> (i32, i32, i32) {
    %c0_i32 = arith.constant 0 : i32
    %c0_i32_0 = arith.constant 0 : i32
    %c0_i32_1 = arith.constant 0 : i32
    return %arg0, %c0_i32, %c0_i32_0 : i32, i32, i32
  }
  func.func @transform_1(%arg0: i32) -> i32 {
    %c0_i32 = arith.constant 0 : i32
    %c0_i32_0 = arith.constant 0 : i32
    return %c0_i32 : i32
  }
  func.func @transform_2(%arg0: i32) -> (i32, i32, i32, i32) {
    %c0_i32 = arith.constant 0 : i32
    %c0_i32_0 = arith.constant 0 : i32
    %c0_i32_1 = arith.constant 0 : i32
    %c0_i32_2 = arith.constant 0 : i32
    return %arg0, %c0_i32, %c0_i32_0, %c0_i32_1 : i32, i32, i32, i32
  }
}

</mosaic_0001>

<llo_original>
// kernel: tpu_custom_call.1
$region0: #{tpu_custom_call.1}
  #allocation0 [shape = 'u32[]', space=smem, size = 0x4, offset = 0x4, fixed_abs, tag = 'smem constant byte address 0x4 - core index']
  #allocation1 [shape = 'u32[144,128]{1,0:T(1,128)}', space=vmem, size = 0x12000, scoped, tag = 'internal scratch']
  #allocation2 [shape = 'f32[2,24,128]{2,1,0:T(8,128)}', space=vmem, size = 0x6000, scoped, tag = 'scratch operand']
  %s0 = inlined_call_operand.hbm [shape: f32[4,4,256], index: 0, kind: input, shape index: {}]
  %s1 = inlined_call_operand.vmem [shape: f32[98], index: 1, kind: input, shape index: {}]
  %s2 = inlined_call_operand.hbm [shape: f32[4,1,16,16], index: 2, kind: output, shape index: {}]
  %s3 = sld [smem:[#allocation0]]
  $region49: #{tpu_custom_call.1} parent=0
    _
  %s5 = ssub.s32 1, %s3
  %s6 = scalar_select 0, %s5, %s3
  $region1: #{tpu_custom_call.1} parent=0
    #allocation3 [shape = 'u8[16384]{0}', space=vmem, size = 0x4000, scoped, tag = 'input window, operand 0']
    #allocation4 [shape = 's32[2]{0}', space=sflag, size = 0x8, scoped, tag = 'scoped memory for tpu_custom_call.1']
    #allocation5 [shape = 's32[2]{0}', space=sflag, size = 0x8, scoped, tag = 'scoped memory for tpu_custom_call.1']
    #allocation6 [shape = 's32[2]{0}', space=sflag, size = 0x8, scoped, tag = 'scoped memory for tpu_custom_call.1']
    #allocation7 [shape = 'u8[512]{0}', space=smem, size = 0x200, scoped, tag = 'input window, operand 1, single buffered']
    #allocation8 [shape = 'u8[32768]{0}', space=vmem, size = 0x8000, scoped, tag = 'output window, operand 0']
    %7 = vsyncpa [#allocation4], 0
    %s8 = scalar_lea.sflag [#allocation4], 1
    %9 = vsyncpa %s8, 0
    %10 = vsyncpa [#allocation6], 0
    %11 = vsyncpa [#allocation5], 0
    %s12 = scalar_lea.sflag [#allocation5], 1
    %13 = vsyncpa %s12, 0
    loop: start=0, step=1, limit=4
    $region2: #{tpu_custom_call.1} parent=1 // loop_pre_header
      _
    $region3: #{tpu_custom_call.1} parent=1 // loop_header
      %s15 = sphi 0, %s19
      %p16 = scmp.ge.s32.totalorder %s15, 4
      %s25 = sphi 0, %s27
      %s28 = sphi 0, %s25
      %s29 = sphi 0, %s28
      %s45 = sphi 0, %s29
      %s49 = sphi 0, %s49
      %s51 = sphi 0, %s49
      %s52 = sphi 0, %s51
      %s66 = sphi 0, %s52
      %s72 = sphi 0, %s74
      %s75 = sphi 0, %s72
      %s76 = sphi 0, %s75
      %s92 = sphi 0, %s76
    $region4: #{tpu_custom_call.1} parent=1 // loop_header_branch
      %18 = sbr.rel (%p16) target = $region8
    $region5: #{tpu_custom_call.1} parent=1 // loop_body
      %s20 = ssub.s32 %s15, 1
      %s21 = ssub.s32 %s15, 2
      %s22 = sadd.s32 %s15, 1
      %s23 = ssub.s32 %s15, %s22
      %p24 = scmp.eq.s32.totalorder %s23, 0
      %s26 = sadd.s32 %s25, 1
      %s27 = scalar_select %p24, %s25, %s26
      %p30 = pneg %p24
      %p31 = scmp.eq.s32.totalorder %s15, 1
      %p32 = por %p30, %p31
      %p33 = scmp.ne.s32.totalorder %s25, %s28
      %p34 = scmp.eq.s32.totalorder %s15, 0
      %p35 = por %p33, %p34
      %p36 = scmp.ne.s32.totalorder %s25, %s28
      %p37 = scmp.eq.s32.totalorder %s20, 1
      %p38 = por %p36, %p37
      %p39 = scmp.ne.s32.totalorder %s28, %s29
      %p40 = scmp.eq.s32.totalorder %s20, 0
      %p41 = por %p39, %p40
      %p42 = scmp.ne.s32.totalorder %s28, %s29
      %p43 = scmp.eq.s32.totalorder %s21, 1
      %p44 = por %p42, %p43
      %p46 = scmp.ne.s32.totalorder %s29, %s45
      %p47 = scmp.eq.s32.totalorder %s21, 0
      %p48 = por %p46, %p47
      %s50 = sadd.s32 %s49, 1
      %p53 = scmp.eq.s32.totalorder %s15, 1
      %p54 = scmp.ne.s32.totalorder %s49, %s51
      %p55 = scmp.eq.s32.totalorder %s15, 0
      %p56 = por %p54, %p55
      %p57 = scmp.ne.s32.totalorder %s49, %s51
      %p58 = scmp.eq.s32.totalorder %s20, 1
      %p59 = por %p57, %p58
      %p60 = scmp.ne.s32.totalorder %s51, %s52
      %p61 = scmp.eq.s32.totalorder %s20, 0
      %p62 = por %p60, %p61
      %p63 = scmp.ne.s32.totalorder %s51, %s52
      %p64 = scmp.eq.s32.totalorder %s21, 1
      %p65 = por %p63, %p64
      %p67 = scmp.ne.s32.totalorder %s52, %s66
      %p68 = scmp.eq.s32.totalorder %s21, 0
      %p69 = por %p67, %p68
      %s70 = ssub.s32 %s15, %s22
      %p71 = scmp.eq.s32.totalorder %s70, 0
      %s73 = sadd.s32 %s72, 1
      %s74 = scalar_select %p71, %s72, %s73
      %p77 = pneg %p71
      %p78 = scmp.eq.s32.totalorder %s15, 1
      %p79 = por %p77, %p78
      %p80 = scmp.ne.s32.totalorder %s72, %s75
      %p81 = scmp.eq.s32.totalorder %s15, 0
      %p82 = por %p80, %p81
      %p83 = scmp.ne.s32.totalorder %s72, %s75
      %p84 = scmp.eq.s32.totalorder %s20, 1
      %p85 = por %p83, %p84
      %p86 = scmp.ne.s32.totalorder %s75, %s76
      %p87 = scmp.eq.s32.totalorder %s20, 0
      %p88 = por %p86, %p87
      %p89 = scmp.ne.s32.totalorder %s75, %s76
      %p90 = scmp.eq.s32.totalorder %s21, 1
      %p91 = por %p89, %p90
      %p93 = scmp.ne.s32.totalorder %s76, %s92
      %p94 = scmp.eq.s32.totalorder %s21, 0
      %p95 = por %p93, %p94
      %p96 = scmp.le.s32.totalorder 1, %s15
      %p97 = scmp.lt.s32.totalorder %s15, 3
      %p98 = pnand %p96, %p97
      %p99 = pneg %p98
      // Predicated region
      $region9: #{tpu_custom_call.1} parent=5 // pred_check
        _
      $region10: #{tpu_custom_call.1} parent=5 // pred_check_branch
        %101 = sbr.rel (%p98) target = $region12
      $region11: #{tpu_custom_call.1} parent=5 // pred_region
        %s102 = ssub.s32 %s15, 1
        // Predicated region
        $region13: #{tpu_custom_call.1} parent=11 // pred_check
          %p103 = pneg %p62
        $region14: #{tpu_custom_call.1} parent=11 // pred_check_branch
          %105 = sbr.rel (%p103) target = $region16
        $region15: #{tpu_custom_call.1} parent=11 // pred_region
          %s107 = ssub.s32 16, 16
          %108 = vsyncadd [#allocation6], %s107
          %s110 = sshll.u32 %s1, 4
          %s111 = int_to_ptr.vmem [resolvable:$true] %s110
          %113 = dma.vmem_to_smem %s111, 16, [#allocation7], [#allocation6]
        $region16: #{tpu_custom_call.1} parent=11 // pred_fallthru
          _
      $region12: #{tpu_custom_call.1} parent=5 // pred_fallthru
        _
      %p114 = scmp.lt.s32.totalorder %s15, 2
      // Predicated region
      $region17: #{tpu_custom_call.1} parent=5 // pred_check
        %p115 = pneg %p114
      $region18: #{tpu_custom_call.1} parent=5 // pred_check_branch
        %117 = sbr.rel (%p115) target = $region20
      $region19: #{tpu_custom_call.1} parent=5 // pred_region
        // Predicated region
        $region21: #{tpu_custom_call.1} parent=19 // pred_check
          %p118 = pneg %p35
        $region22: #{tpu_custom_call.1} parent=19 // pred_check_branch
          %120 = sbr.rel (%p118) target = $region24
        $region23: #{tpu_custom_call.1} parent=19 // pred_region
          %s121 = sand.u32 %s25, 1
          %s122 = scalar_lea.sflag [#allocation4], %s121
          %s123 = sand.u32 %s25, 1
          %s124 = smul.addr %s123, 16
          %s125 = scalar_lea.vmem [#allocation3], %s124
          %s126 = smul.u32 2, %s15
          %s128 = ssub.s32 256, 256
          %129 = vsyncadd %s122, %s128
          %s130 = smul.addr %s126, 2
          %s131 = smul.addr %s130, 64
          %s132 = scalar_lea.hbm %s0, %s131
          %s133 = sshll.u32 %s125, 4
          %s134 = int_to_ptr.vmem [resolvable:$true] %s133
          %139 = dma.hbm_to_vmem [thread:$0]  %s132, 256, %s134, %s122, 128, 128, 8
        $region24: #{tpu_custom_call.1} parent=19 // pred_fallthru
          _
      $region20: #{tpu_custom_call.1} parent=5 // pred_fallthru
        _
      %p140 = scmp.le.s32.totalorder 1, %s15
      %p141 = scmp.lt.s32.totalorder %s15, 3
      %p142 = pnand %p140, %p141
      %p143 = pneg %p142
      // Predicated region
      $region25: #{tpu_custom_call.1} parent=5 // pred_check
        _
      $region26: #{tpu_custom_call.1} parent=5 // pred_check_branch
        %145 = sbr.rel (%p142) target = $region28
      $region27: #{tpu_custom_call.1} parent=5 // pred_region
        %s146 = ssub.s32 %s15, 1
        %s147 = sand.u32 %s28, 1
        %s148 = scalar_lea.sflag [#allocation4], %s147
        %s149 = sand.u32 %s28, 1
        %s150 = smul.addr %s149, 16
        %s151 = scalar_lea.vmem [#allocation3], %s150
        // Predicated region
        $region29: #{tpu_custom_call.1} parent=27 // pred_check
          %p152 = pneg %p41
        $region30: #{tpu_custom_call.1} parent=27 // pred_check_branch
          %154 = sbr.rel (%p152) target = $region32
        $region31: #{tpu_custom_call.1} parent=27 // pred_region
          %155 = dma.done %s148, 256
        $region32: #{tpu_custom_call.1} parent=27 // pred_fallthru
          _
        // Predicated region
        $region33: #{tpu_custom_call.1} parent=27 // pred_check
          %p156 = pneg %p62
        $region34: #{tpu_custom_call.1} parent=27 // pred_check_branch
          %158 = sbr.rel (%p156) target = $region36
        $region35: #{tpu_custom_call.1} parent=27 // pred_region
          %159 = dma.done [#allocation6], 16
        $region36: #{tpu_custom_call.1} parent=27 // pred_fallthru
          _
        %160 = sfence
        %s161 = sand.u32 %s28, 1
        %s162 = scalar_lea.sflag [#allocation4], %s161
        %s163 = sand.u32 %s28, 1
        %s164 = smul.addr %s163, 16
        %s165 = scalar_lea.vmem [#allocation3], %s164
        %p166 = pneg %p41
        %p167 = pneg %p38
        %p168 = pneg %p62
        %p169 = pneg %p59
        %p170 = pneg %p88
        %p171 = pneg %p85
        %s172 = sand.u32 %s75, 1
        %s173 = scalar_lea.sflag [#allocation5], %s172
        %s174 = sand.u32 %s75, 1
        %s175 = smul.addr %s174, 32
        %s176 = scalar_lea.vmem [#allocation8], %s175
        %s177 = smul.u32 2, %s20
        %s178 = smul.u32 2, %s20
        %s179 = sld [smem:[#allocation7]]
        %s180 = sld [smem:[#allocation7 + $0x1]]
        %s181 = sld [smem:[#allocation7 + $0x2]]
        %s182 = sld [smem:[#allocation7 + $0x3]]
        %s183 = sld [smem:[#allocation7 + $0x4]]
        %s184 = sld [smem:[#allocation7 + $0x5]]
        %s185 = sld [smem:[#allocation7 + $0x6]]
        %s186 = sld [smem:[#allocation7 + $0x7]]
        %s187 = sld [smem:[#allocation7 + $0x8]]
        %s188 = sld [smem:[#allocation7 + $0x9]]
        %s189 = sld [smem:[#allocation7 + $0xa]]
        %s190 = sld [smem:[#allocation7 + $0xb]]
        %s191 = sld [smem:[#allocation7 + $0xc]]
        %s192 = sld [smem:[#allocation7 + $0xd]]
        %s193 = sld [smem:[#allocation7 + $0xe]]
        %s194 = sld [smem:[#allocation7 + $0xf]]
        %s195 = sld [smem:[#allocation7 + $0x10]]
        %s196 = sld [smem:[#allocation7 + $0x11]]
        %s197 = sld [smem:[#allocation7 + $0x12]]
        %s198 = sld [smem:[#allocation7 + $0x13]]
        %s199 = sld [smem:[#allocation7 + $0x14]]
        %s200 = sld [smem:[#allocation7 + $0x15]]
        %s201 = sld [smem:[#allocation7 + $0x16]]
        %s202 = sld [smem:[#allocation7 + $0x17]]
        %s203 = sld [smem:[#allocation7 + $0x18]]
        %s204 = sld [smem:[#allocation7 + $0x19]]
        %s205 = sld [smem:[#allocation7 + $0x1a]]
        %s206 = sld [smem:[#allocation7 + $0x1b]]
        %s207 = sld [smem:[#allocation7 + $0x1c]]
        %s208 = sld [smem:[#allocation7 + $0x1d]]
        %s209 = sld [smem:[#allocation7 + $0x1e]]
        %s210 = sld [smem:[#allocation7 + $0x1f]]
        %s211 = sld [smem:[#allocation7 + $0x20]]
        %s212 = sld [smem:[#allocation7 + $0x21]]
        %s213 = sld [smem:[#allocation7 + $0x22]]
        %s214 = sld [smem:[#allocation7 + $0x23]]
        %s215 = sld [smem:[#allocation7 + $0x24]]
        %s216 = sld [smem:[#allocation7 + $0x25]]
        %s217 = sld [smem:[#allocation7 + $0x26]]
        %s218 = sld [smem:[#allocation7 + $0x27]]
        %s219 = sld [smem:[#allocation7 + $0x28]]
        %s220 = sld [smem:[#allocation7 + $0x29]]
        %s221 = sld [smem:[#allocation7 + $0x2a]]
        %s222 = sld [smem:[#allocation7 + $0x2b]]
        %s223 = sld [smem:[#allocation7 + $0x2c]]
        %s224 = sld [smem:[#allocation7 + $0x2d]]
        %s225 = sld [smem:[#allocation7 + $0x2e]]
        %s226 = sld [smem:[#allocation7 + $0x2f]]
        %s227 = sld [smem:[#allocation7 + $0x30]]
        %s228 = sld [smem:[#allocation7 + $0x31]]
        %s229 = sld [smem:[#allocation7 + $0x32]]
        %s230 = sld [smem:[#allocation7 + $0x33]]
        %s231 = sld [smem:[#allocation7 + $0x34]]
        %s232 = sld [smem:[#allocation7 + $0x35]]
        %s233 = sld [smem:[#allocation7 + $0x36]]
        %s234 = sld [smem:[#allocation7 + $0x37]]
        %s235 = sld [smem:[#allocation7 + $0x38]]
        %s236 = sld [smem:[#allocation7 + $0x39]]
        %s237 = sld [smem:[#allocation7 + $0x3a]]
        %s238 = sld [smem:[#allocation7 + $0x3b]]
        %s239 = sld [smem:[#allocation7 + $0x3c]]
        %s240 = sld [smem:[#allocation7 + $0x3d]]
        %s241 = sld [smem:[#allocation7 + $0x3e]]
        %s242 = sld [smem:[#allocation7 + $0x3f]]
        %s243 = sld [smem:[#allocation7 + $0x40]]
        %s244 = sld [smem:[#allocation7 + $0x41]]
        %s245 = sld [smem:[#allocation7 + $0x42]]
        %s246 = sld [smem:[#allocation7 + $0x43]]
        %s247 = sld [smem:[#allocation7 + $0x44]]
        %s248 = sld [smem:[#allocation7 + $0x45]]
        %s249 = sld [smem:[#allocation7 + $0x46]]
        %s250 = sld [smem:[#allocation7 + $0x47]]
        %s251 = sld [smem:[#allocation7 + $0x48]]
        %s252 = sld [smem:[#allocation7 + $0x49]]
        %s253 = sld [smem:[#allocation7 + $0x4a]]
        %s254 = sld [smem:[#allocation7 + $0x4b]]
        %s255 = sld [smem:[#allocation7 + $0x4c]]
        %s256 = sld [smem:[#allocation7 + $0x4d]]
        %s257 = sld [smem:[#allocation7 + $0x4e]]
        %s258 = sld [smem:[#allocation7 + $0x4f]]
        %s259 = sld [smem:[#allocation7 + $0x50]]
        %s260 = sld [smem:[#allocation7 + $0x51]]
        %s261 = sld [smem:[#allocation7 + $0x52]]
        %s262 = sld [smem:[#allocation7 + $0x53]]
        %s263 = sld [smem:[#allocation7 + $0x54]]
        %s264 = sld [smem:[#allocation7 + $0x55]]
        %s265 = sld [smem:[#allocation7 + $0x56]]
        %s266 = sld [smem:[#allocation7 + $0x57]]
        %s267 = sld [smem:[#allocation7 + $0x58]]
        %s268 = sld [smem:[#allocation7 + $0x59]]
        %s269 = sld [smem:[#allocation7 + $0x5a]]
        %s270 = sld [smem:[#allocation7 + $0x5b]]
        %s271 = sld [smem:[#allocation7 + $0x5c]]
        %s272 = sld [smem:[#allocation7 + $0x5d]]
        %s273 = sld [smem:[#allocation7 + $0x5e]]
        %s274 = sld [smem:[#allocation7 + $0x5f]]
        %s275 = sld [smem:[#allocation7 + $0x60]]
        %s276 = sld [smem:[#allocation7 + $0x61]]
        %277 = vst [vmem:[#allocation2] sm:$0xff] 0.0
        %278 = vst [vmem:[#allocation2 + $0x8] sm:$0xff] 0.0
        %279 = vst [vmem:[#allocation2 + $0x10] sm:$0xff] 0.0
        %280 = vst [vmem:[#allocation2 + $0x18] sm:$0xff] 0.0
        %281 = vst [vmem:[#allocation2 + $0x20] sm:$0xff] 0.0
        %282 = vst [vmem:[#allocation2 + $0x28] sm:$0xff] 0.0
        %v283 = vld [vmem:[%s151] sm:$0xff]
        %v285 = vcombine.high %v283, %v283
        %vm287 = vcmask 1043456
        %v288 = vsel %vm287, %v283, 0.0
        %v289 = vrot.slane %v288, 4
        %v290 = vadd.f32 %v288, %v289
        %v291 = vrot.slane %v290, 2
        %v292 = vadd.f32 %v290, %v291
        %v293 = vrot.slane %v292, 1
        %v294 = vadd.f32 %v292, %v293
        %v295 = vsel %vm287, %v285, 0.0
        %v296 = vrot.slane %v295, 4
        %v297 = vadd.f32 %v295, %v296
        %v298 = vrot.slane %v297, 2
        %v299 = vadd.f32 %v297, %v298
        %v300 = vrot.slane %v299, 1
        %v301 = vadd.f32 %v299, %v300
        %v302 = vsel %vm287, %v283, -inf
        %v303 = vrot.slane %v302, 4
        %v304 = vmax.f32 %v302, %v303
        %v305 = vrot.slane %v304, 2
        %v306 = vmax.f32 %v304, %v305
        %v307 = vrot.slane %v306, 1
        %v308 = vmax.f32 %v306, %v307
        %v309 = vsel %vm287, %v285, -inf
        %v310 = vrot.slane %v309, 4
        %v311 = vmax.f32 %v309, %v310
        %v312 = vrot.slane %v311, 2
        %v313 = vmax.f32 %v311, %v312
        %v314 = vrot.slane %v313, 1
        %v315 = vmax.f32 %v313, %v314
        %v316 = vmul.f32 %v294, 0.25
        %v317 = vmul.f32 %v301, 0.25
        %319 = vrot.lane.b32.xlu0 %v316, 3
        %v320 = vpop.permute.xlu0 %319
        %vm322 = vcmask 147480
        %323 = vst.msk [vmem:[#allocation2 + $0x3] sm:$0x1] %vm322, %v320
        %325 = vrot.lane.b32.xlu0 %v308, 3
        %v326 = vpop.permute.xlu0 %325
        %s328 = scalar_lea.vmem [#allocation2], 24
        %329 = vst.msk [vmem:[%s328 + $0x3] sm:$0x1] %vm322, %v326
        %330 = vrot.lane.b32.xlu0 %v316, 115
        %v331 = vpop.permute.xlu0 %330
        %333 = vst.msk [vmem:[#allocation2 + $0x4] sm:$0x1] %vm322, %v331
        %334 = vrot.lane.b32.xlu0 %v308, 115
        %v335 = vpop.permute.xlu0 %334
        %337 = vst.msk [vmem:[%s328 + $0x4] sm:$0x1] %vm322, %v335
        %338 = vrot.lane.b32.xlu0 %v316, 99
        %v339 = vpop.permute.xlu0 %338
        %341 = vst.msk [vmem:[#allocation2 + $0x5] sm:$0x1] %vm322, %v339
        %342 = vrot.lane.b32.xlu0 %v308, 99
        %v343 = vpop.permute.xlu0 %342
        %345 = vst.msk [vmem:[%s328 + $0x5] sm:$0x1] %vm322, %v343
        %346 = vrot.lane.b32.xlu0 %v316, 83
        %v347 = vpop.permute.xlu0 %346
        %349 = vst.msk [vmem:[#allocation2 + $0x6] sm:$0x1] %vm322, %v347
        %350 = vrot.lane.b32.xlu0 %v308, 83
        %v351 = vpop.permute.xlu0 %350
        %353 = vst.msk [vmem:[%s328 + $0x6] sm:$0x1] %vm322, %v351
        %354 = vrot.lane.b32.xlu0 %v316, 67
        %v355 = vpop.permute.xlu0 %354
        %357 = vst.msk [vmem:[#allocation2 + $0x7] sm:$0x1] %vm322, %v355
        %358 = vrot.lane.b32.xlu0 %v308, 67
        %v359 = vpop.permute.xlu0 %358
        %361 = vst.msk [vmem:[%s328 + $0x7] sm:$0x1] %vm322, %v359
        %362 = vrot.lane.b32.xlu0 %v316, 51
        %v363 = vpop.permute.xlu0 %362
        %365 = vst.msk [vmem:[#allocation2 + $0x8] sm:$0x1] %vm322, %v363
        %366 = vrot.lane.b32.xlu0 %v308, 51
        %v367 = vpop.permute.xlu0 %366
        %369 = vst.msk [vmem:[%s328 + $0x8] sm:$0x1] %vm322, %v367
        %370 = vrot.lane.b32.xlu0 %v316, 35
        %v371 = vpop.permute.xlu0 %370
        %373 = vst.msk [vmem:[#allocation2 + $0x9] sm:$0x1] %vm322, %v371
        %374 = vrot.lane.b32.xlu0 %v308, 35
        %v375 = vpop.permute.xlu0 %374
        %377 = vst.msk [vmem:[%s328 + $0x9] sm:$0x1] %vm322, %v375
        %378 = vrot.lane.b32.xlu0 %v316, 19
        %v379 = vpop.permute.xlu0 %378
        %381 = vst.msk [vmem:[#allocation2 + $0xa] sm:$0x1] %vm322, %v379
        %382 = vrot.lane.b32.xlu0 %v308, 19
        %v383 = vpop.permute.xlu0 %382
        %385 = vst.msk [vmem:[%s328 + $0xa] sm:$0x1] %vm322, %v383
        %387 = vrot.lane.b32.xlu0 %v317, 3
        %v388 = vpop.permute.xlu0 %387
        %390 = vst.msk [vmem:[#allocation2 + $0xb] sm:$0x1] %vm322, %v388
        %392 = vrot.lane.b32.xlu0 %v315, 3
        %v393 = vpop.permute.xlu0 %392
        %395 = vst.msk [vmem:[%s328 + $0xb] sm:$0x1] %vm322, %v393
        %396 = vrot.lane.b32.xlu0 %v317, 115
        %v397 = vpop.permute.xlu0 %396
        %399 = vst.msk [vmem:[#allocation2 + $0xc] sm:$0x1] %vm322, %v397
        %400 = vrot.lane.b32.xlu0 %v315, 115
        %v401 = vpop.permute.xlu0 %400
        %403 = vst.msk [vmem:[%s328 + $0xc] sm:$0x1] %vm322, %v401
        %404 = vrot.lane.b32.xlu0 %v317, 99
        %v405 = vpop.permute.xlu0 %404
        %407 = vst.msk [vmem:[#allocation2 + $0xd] sm:$0x1] %vm322, %v405
        %408 = vrot.lane.b32.xlu0 %v315, 99
        %v409 = vpop.permute.xlu0 %408
        %411 = vst.msk [vmem:[%s328 + $0xd] sm:$0x1] %vm322, %v409
        %412 = vrot.lane.b32.xlu0 %v317, 83
        %v413 = vpop.permute.xlu0 %412
        %415 = vst.msk [vmem:[#allocation2 + $0xe] sm:$0x1] %vm322, %v413
        %416 = vrot.lane.b32.xlu0 %v315, 83
        %v417 = vpop.permute.xlu0 %416
        %419 = vst.msk [vmem:[%s328 + $0xe] sm:$0x1] %vm322, %v417
        %420 = vrot.lane.b32.xlu0 %v317, 67
        %v421 = vpop.permute.xlu0 %420
        %423 = vst.msk [vmem:[#allocation2 + $0xf] sm:$0x1] %vm322, %v421
        %424 = vrot.lane.b32.xlu0 %v315, 67
        %v425 = vpop.permute.xlu0 %424
        %427 = vst.msk [vmem:[%s328 + $0xf] sm:$0x1] %vm322, %v425
        %428 = vrot.lane.b32.xlu0 %v317, 51
        %v429 = vpop.permute.xlu0 %428
        %431 = vst.msk [vmem:[#allocation2 + $0x10] sm:$0x1] %vm322, %v429
        %432 = vrot.lane.b32.xlu0 %v315, 51
        %v433 = vpop.permute.xlu0 %432
        %435 = vst.msk [vmem:[%s328 + $0x10] sm:$0x1] %vm322, %v433
        %436 = vrot.lane.b32.xlu0 %v317, 35
        %v437 = vpop.permute.xlu0 %436
        %439 = vst.msk [vmem:[#allocation2 + $0x11] sm:$0x1] %vm322, %v437
        %440 = vrot.lane.b32.xlu0 %v315, 35
        %v441 = vpop.permute.xlu0 %440
        %443 = vst.msk [vmem:[%s328 + $0x11] sm:$0x1] %vm322, %v441
        %444 = vrot.lane.b32.xlu0 %v317, 19
        %v445 = vpop.permute.xlu0 %444
        %447 = vst.msk [vmem:[#allocation2 + $0x12] sm:$0x1] %vm322, %v445
        %448 = vrot.lane.b32.xlu0 %v315, 19
        %v449 = vpop.permute.xlu0 %448
        %451 = vst.msk [vmem:[%s328 + $0x12] sm:$0x1] %vm322, %v449
        %s452 = scalar_lea.vmem %s151, 8 [#allocation3]
        %v453 = vld [vmem:[%s452] sm:$0xff]
        %v455 = vcombine.high %v453, %v453
        %v457 = vsel %vm287, %v453, 0.0
        %v458 = vrot.slane %v457, 4
        %v459 = vadd.f32 %v457, %v458
        %v460 = vrot.slane %v459, 2
        %v461 = vadd.f32 %v459, %v460
        %v462 = vrot.slane %v461, 1
        %v463 = vadd.f32 %v461, %v462
        %v464 = vsel %vm287, %v455, 0.0
        %v465 = vrot.slane %v464, 4
        %v466 = vadd.f32 %v464, %v465
        %v467 = vrot.slane %v466, 2
        %v468 = vadd.f32 %v466, %v467
        %v469 = vrot.slane %v468, 1
        %v470 = vadd.f32 %v468, %v469
        %v471 = vsel %vm287, %v453, -inf
        %v472 = vrot.slane %v471, 4
        %v473 = vmax.f32 %v471, %v472
        %v474 = vrot.slane %v473, 2
        %v475 = vmax.f32 %v473, %v474
        %v476 = vrot.slane %v475, 1
        %v477 = vmax.f32 %v475, %v476
        %v478 = vsel %vm287, %v455, -inf
        %v479 = vrot.slane %v478, 4
        %v480 = vmax.f32 %v478, %v479
        %v481 = vrot.slane %v480, 2
        %v482 = vmax.f32 %v480, %v481
        %v483 = vrot.slane %v482, 1
        %v484 = vmax.f32 %v482, %v483
        %v485 = vmul.f32 %v463, 0.25
        %v486 = vmul.f32 %v470, 0.25
        %488 = vrot.lane.b32.xlu0 %v485, 25
        %v489 = vpop.permute.xlu0 %488
        %vm491 = vcmask 327880
        %492 = vst.msk [vmem:[#allocation2 + $0x3] sm:$0x1] %vm491, %v489
        %494 = vrot.lane.b32.xlu0 %v477, 25
        %v495 = vpop.permute.xlu0 %494
        %497 = vst.msk [vmem:[%s328 + $0x3] sm:$0x1] %vm491, %v495
        %498 = vrot.lane.b32.xlu0 %v485, 9
        %v499 = vpop.permute.xlu0 %498
        %501 = vst.msk [vmem:[#allocation2 + $0x4] sm:$0x1] %vm491, %v499
        %502 = vrot.lane.b32.xlu0 %v477, 9
        %v503 = vpop.permute.xlu0 %502
        %505 = vst.msk [vmem:[%s328 + $0x4] sm:$0x1] %vm491, %v503
        %506 = vrot.lane.b32.xlu0 %v485, 121
        %v507 = vpop.permute.xlu0 %506
        %509 = vst.msk [vmem:[#allocation2 + $0x5] sm:$0x1] %vm491, %v507
        %510 = vrot.lane.b32.xlu0 %v477, 121
        %v511 = vpop.permute.xlu0 %510
        %513 = vst.msk [vmem:[%s328 + $0x5] sm:$0x1] %vm491, %v511
        %514 = vrot.lane.b32.xlu0 %v485, 105
        %v515 = vpop.permute.xlu0 %514
        %517 = vst.msk [vmem:[#allocation2 + $0x6] sm:$0x1] %vm491, %v515
        %518 = vrot.lane.b32.xlu0 %v477, 105
        %v519 = vpop.permute.xlu0 %518
        %521 = vst.msk [vmem:[%s328 + $0x6] sm:$0x1] %vm491, %v519
        %522 = vrot.lane.b32.xlu0 %v485, 89
        %v523 = vpop.permute.xlu0 %522
        %525 = vst.msk [vmem:[#allocation2 + $0x7] sm:$0x1] %vm491, %v523
        %526 = vrot.lane.b32.xlu0 %v477, 89
        %v527 = vpop.permute.xlu0 %526
        %529 = vst.msk [vmem:[%s328 + $0x7] sm:$0x1] %vm491, %v527
        %530 = vrot.lane.b32.xlu0 %v485, 73
        %v531 = vpop.permute.xlu0 %530
        %533 = vst.msk [vmem:[#allocation2 + $0x8] sm:$0x1] %vm491, %v531
        %534 = vrot.lane.b32.xlu0 %v477, 73
        %v535 = vpop.permute.xlu0 %534
        %537 = vst.msk [vmem:[%s328 + $0x8] sm:$0x1] %vm491, %v535
        %538 = vrot.lane.b32.xlu0 %v485, 57
        %v539 = vpop.permute.xlu0 %538
        %541 = vst.msk [vmem:[#allocation2 + $0x9] sm:$0x1] %vm491, %v539
        %542 = vrot.lane.b32.xlu0 %v477, 57
        %v543 = vpop.permute.xlu0 %542
        %545 = vst.msk [vmem:[%s328 + $0x9] sm:$0x1] %vm491, %v543
        %546 = vrot.lane.b32.xlu0 %v485, 41
        %v547 = vpop.permute.xlu0 %546
        %549 = vst.msk [vmem:[#allocation2 + $0xa] sm:$0x1] %vm491, %v547
        %550 = vrot.lane.b32.xlu0 %v477, 41
        %v551 = vpop.permute.xlu0 %550
        %553 = vst.msk [vmem:[%s328 + $0xa] sm:$0x1] %vm491, %v551
        %555 = vrot.lane.b32.xlu0 %v486, 25
        %v556 = vpop.permute.xlu0 %555
        %558 = vst.msk [vmem:[#allocation2 + $0xb] sm:$0x1] %vm491, %v556
        %560 = vrot.lane.b32.xlu0 %v484, 25
        %v561 = vpop.permute.xlu0 %560
        %563 = vst.msk [vmem:[%s328 + $0xb] sm:$0x1] %vm491, %v561
        %564 = vrot.lane.b32.xlu0 %v486, 9
        %v565 = vpop.permute.xlu0 %564
        %567 = vst.msk [vmem:[#allocation2 + $0xc] sm:$0x1] %vm491, %v565
        %568 = vrot.lane.b32.xlu0 %v484, 9
        %v569 = vpop.permute.xlu0 %568
        %571 = vst.msk [vmem:[%s328 + $0xc] sm:$0x1] %vm491, %v569
        %572 = vrot.lane.b32.xlu0 %v486, 121
        %v573 = vpop.permute.xlu0 %572
        %575 = vst.msk [vmem:[#allocation2 + $0xd] sm:$0x1] %vm491, %v573
        %576 = vrot.lane.b32.xlu0 %v484, 121
        %v577 = vpop.permute.xlu0 %576
        %579 = vst.msk [vmem:[%s328 + $0xd] sm:$0x1] %vm491, %v577
        %580 = vrot.lane.b32.xlu0 %v486, 105
        %v581 = vpop.permute.xlu0 %580
        %583 = vst.msk [vmem:[#allocation2 + $0xe] sm:$0x1] %vm491, %v581
        %584 = vrot.lane.b32.xlu0 %v484, 105
        %v585 = vpop.permute.xlu0 %584
        %587 = vst.msk [vmem:[%s328 + $0xe] sm:$0x1] %vm491, %v585
        %588 = vrot.lane.b32.xlu0 %v486, 89
        %v589 = vpop.permute.xlu0 %588
        %591 = vst.msk [vmem:[#allocation2 + $0xf] sm:$0x1] %vm491, %v589
        %592 = vrot.lane.b32.xlu0 %v484, 89
        %v593 = vpop.permute.xlu0 %592
        %595 = vst.msk [vmem:[%s328 + $0xf] sm:$0x1] %vm491, %v593
        %596 = vrot.lane.b32.xlu0 %v486, 73
        %v597 = vpop.permute.xlu0 %596
        %599 = vst.msk [vmem:[#allocation2 + $0x10] sm:$0x1] %vm491, %v597
        %600 = vrot.lane.b32.xlu0 %v484, 73
        %v601 = vpop.permute.xlu0 %600
        %603 = vst.msk [vmem:[%s328 + $0x10] sm:$0x1] %vm491, %v601
        %604 = vrot.lane.b32.xlu0 %v486, 57
        %v605 = vpop.permute.xlu0 %604
        %607 = vst.msk [vmem:[#allocation2 + $0x11] sm:$0x1] %vm491, %v605
        %608 = vrot.lane.b32.xlu0 %v484, 57
        %v609 = vpop.permute.xlu0 %608
        %611 = vst.msk [vmem:[%s328 + $0x11] sm:$0x1] %vm491, %v609
        %612 = vrot.lane.b32.xlu0 %v486, 41
        %v613 = vpop.permute.xlu0 %612
        %615 = vst.msk [vmem:[#allocation2 + $0x12] sm:$0x1] %vm491, %v613
        %616 = vrot.lane.b32.xlu0 %v484, 41
        %v617 = vpop.permute.xlu0 %616
        %619 = vst.msk [vmem:[%s328 + $0x12] sm:$0x1] %vm491, %v617
        %v620 = vld [vmem:[#allocation2] sm:$0xff]
        %v621 = vld [vmem:[#allocation2 + $0x8] sm:$0xff]
        %v622 = vld [vmem:[#allocation2 + $0x10] sm:$0xff]
        %623 = vrot.lane.b32.xlu0 %v620, 3
        %v624 = vpop.permute.xlu0 %623
        %625 = vrot.lane.b32.xlu0 %v621, 3
        %v626 = vpop.permute.xlu0 %625
        %627 = vrot.lane.b32.xlu0 %v622, 3
        %v628 = vpop.permute.xlu0 %627
        %629 = vrot.lane.b32.xlu0 %v620, 2
        %v630 = vpop.permute.xlu0 %629
        %631 = vrot.lane.b32.xlu0 %v621, 2
        %v632 = vpop.permute.xlu0 %631
        %633 = vrot.lane.b32.xlu0 %v622, 2
        %v634 = vpop.permute.xlu0 %633
        %635 = vrot.lane.b32.xlu0 %v620, 1
        %v636 = vpop.permute.xlu0 %635
        %637 = vrot.lane.b32.xlu0 %v621, 1
        %v638 = vpop.permute.xlu0 %637
        %639 = vrot.lane.b32.xlu0 %v622, 1
        %v640 = vpop.permute.xlu0 %639
        %641 = vrot.lane.b32.xlu0 %v620, 127
        %v642 = vpop.permute.xlu0 %641
        %643 = vrot.lane.b32.xlu0 %v621, 127
        %v644 = vpop.permute.xlu0 %643
        %645 = vrot.lane.b32.xlu0 %v622, 127
        %v646 = vpop.permute.xlu0 %645
        %647 = vrot.lane.b32.xlu0 %v620, 126
        %v648 = vpop.permute.xlu0 %647
        %649 = vrot.lane.b32.xlu0 %v621, 126
        %v650 = vpop.permute.xlu0 %649
        %651 = vrot.lane.b32.xlu0 %v622, 126
        %v652 = vpop.permute.xlu0 %651
        %653 = vrot.lane.b32.xlu0 %v620, 125
        %v654 = vpop.permute.xlu0 %653
        %655 = vrot.lane.b32.xlu0 %v621, 125
        %v656 = vpop.permute.xlu0 %655
        %657 = vrot.lane.b32.xlu0 %v622, 125
        %v658 = vpop.permute.xlu0 %657
        %v659 = vstv %s179
        %v660 = vmul.f32 %v659, %v624
        %v661 = vmul.f32 %v659, %v626
        %v662 = vadd.f32 %v660, 0.0
        %v663 = vadd.f32 %v661, 0.0
        %v664 = vstv %s180
        %v665 = vmul.f32 %v664, %v630
        %v666 = vmul.f32 %v664, %v632
        %v667 = vadd.f32 %v665, 0.0
        %v668 = vadd.f32 %v666, 0.0
        %v669 = vstv %s181
        %v670 = vmul.f32 %v669, %v636
        %v671 = vmul.f32 %v669, %v638
        %v672 = vadd.f32 %v670, 0.0
        %v673 = vadd.f32 %v671, 0.0
        %v674 = vstv %s182
        %v675 = vmul.f32 %v674, %v620
        %v676 = vmul.f32 %v674, %v621
        %v677 = vadd.f32 %v675, 0.0
        %v678 = vadd.f32 %v676, 0.0
        %v679 = vstv %s183
        %v680 = vmul.f32 %v679, %v642
        %v681 = vmul.f32 %v679, %v644
        %v682 = vadd.f32 %v662, %v680
        %v683 = vadd.f32 %v663, %v681
        %v684 = vstv %s184
        %v685 = vmul.f32 %v684, %v648
        %v686 = vmul.f32 %v684, %v650
        %v687 = vadd.f32 %v667, %v685
        %v688 = vadd.f32 %v668, %v686
        %v689 = vstv %s185
        %v690 = vmul.f32 %v689, %v654
        %v691 = vmul.f32 %v689, %v656
        %v692 = vadd.f32 %v672, %v690
        %v693 = vadd.f32 %v673, %v691
        %v694 = vstv %s186
        %v695 = vmul.f32 %v694, %v624
        %v696 = vmul.f32 %v694, %v626
        %v697 = vmul.f32 %v694, %v628
        %vm701 = vcmask 1046528
        %v702 = vrot.slane %v695, 1
        %v703 = vrot.slane %v696, 1
        %v704 = vsel %vm701, %v702, %v703
        %v705 = vrot.slane %v697, 1
        %v706 = vsel %vm701, %v703, %v705
        %v709 = vadd.f32 %v677, %v704
        %v710 = vadd.f32 %v678, %v706
        %v711 = vstv %s187
        %v712 = vmul.f32 %v711, %v630
        %v713 = vmul.f32 %v711, %v632
        %v714 = vmul.f32 %v711, %v634
        %v718 = vrot.slane %v712, 1
        %v719 = vrot.slane %v713, 1
        %v720 = vsel %vm701, %v718, %v719
        %v721 = vrot.slane %v714, 1
        %v722 = vsel %vm701, %v719, %v721
        %v725 = vadd.f32 %v682, %v720
        %v726 = vadd.f32 %v683, %v722
        %v727 = vstv %s188
        %v728 = vmul.f32 %v727, %v636
        %v729 = vmul.f32 %v727, %v638
        %v730 = vmul.f32 %v727, %v640
        %v734 = vrot.slane %v728, 1
        %v735 = vrot.slane %v729, 1
        %v736 = vsel %vm701, %v734, %v735
        %v737 = vrot.slane %v730, 1
        %v738 = vsel %vm701, %v735, %v737
        %v741 = vadd.f32 %v687, %v736
        %v742 = vadd.f32 %v688, %v738
        %v743 = vstv %s189
        %v744 = vmul.f32 %v743, %v620
        %v745 = vmul.f32 %v743, %v621
        %v746 = vmul.f32 %v743, %v622
        %v750 = vrot.slane %v744, 1
        %v751 = vrot.slane %v745, 1
        %v752 = vsel %vm701, %v750, %v751
        %v753 = vrot.slane %v746, 1
        %v754 = vsel %vm701, %v751, %v753
        %v757 = vadd.f32 %v692, %v752
        %v758 = vadd.f32 %v693, %v754
        %v759 = vstv %s190
        %v760 = vmul.f32 %v759, %v642
        %v761 = vmul.f32 %v759, %v644
        %v762 = vmul.f32 %v759, %v646
        %v766 = vrot.slane %v760, 1
        %v767 = vrot.slane %v761, 1
        %v768 = vsel %vm701, %v766, %v767
        %v769 = vrot.slane %v762, 1
        %v770 = vsel %vm701, %v767, %v769
        %v773 = vadd.f32 %v709, %v768
        %v774 = vadd.f32 %v710, %v770
        %v775 = vstv %s191
        %v776 = vmul.f32 %v775, %v648
        %v777 = vmul.f32 %v775, %v650
        %v778 = vmul.f32 %v775, %v652
        %v782 = vrot.slane %v776, 1
        %v783 = vrot.slane %v777, 1
        %v784 = vsel %vm701, %v782, %v783
        %v785 = vrot.slane %v778, 1
        %v786 = vsel %vm701, %v783, %v785
        %v789 = vadd.f32 %v725, %v784
        %v790 = vadd.f32 %v726, %v786
        %v791 = vstv %s192
        %v792 = vmul.f32 %v791, %v654
        %v793 = vmul.f32 %v791, %v656
        %v794 = vmul.f32 %v791, %v658
        %v798 = vrot.slane %v792, 1
        %v799 = vrot.slane %v793, 1
        %v800 = vsel %vm701, %v798, %v799
        %v801 = vrot.slane %v794, 1
        %v802 = vsel %vm701, %v799, %v801
        %v805 = vadd.f32 %v741, %v800
        %v806 = vadd.f32 %v742, %v802
        %v807 = vstv %s193
        %v808 = vmul.f32 %v807, %v624
        %v809 = vmul.f32 %v807, %v626
        %v810 = vmul.f32 %v807, %v628
        %vm814 = vcmask 1045504
        %v815 = vrot.slane %v808, 2
        %v816 = vrot.slane %v809, 2
        %v817 = vsel %vm814, %v815, %v816
        %v818 = vrot.slane %v810, 2
        %v819 = vsel %vm814, %v816, %v818
        %v822 = vadd.f32 %v757, %v817
        %v823 = vadd.f32 %v758, %v819
        %v824 = vstv %s194
        %v825 = vmul.f32 %v824, %v630
        %v826 = vmul.f32 %v824, %v632
        %v827 = vmul.f32 %v824, %v634
        %v831 = vrot.slane %v825, 2
        %v832 = vrot.slane %v826, 2
        %v833 = vsel %vm814, %v831, %v832
        %v834 = vrot.slane %v827, 2
        %v835 = vsel %vm814, %v832, %v834
        %v838 = vadd.f32 %v773, %v833
        %v839 = vadd.f32 %v774, %v835
        %v840 = vstv %s195
        %v841 = vmul.f32 %v840, %v636
        %v842 = vmul.f32 %v840, %v638
        %v843 = vmul.f32 %v840, %v640
        %v847 = vrot.slane %v841, 2
        %v848 = vrot.slane %v842, 2
        %v849 = vsel %vm814, %v847, %v848
        %v850 = vrot.slane %v843, 2
        %v851 = vsel %vm814, %v848, %v850
        %v854 = vadd.f32 %v789, %v849
        %v855 = vadd.f32 %v790, %v851
        %v856 = vstv %s196
        %v857 = vmul.f32 %v856, %v620
        %v858 = vmul.f32 %v856, %v621
        %v859 = vmul.f32 %v856, %v622
        %v863 = vrot.slane %v857, 2
        %v864 = vrot.slane %v858, 2
        %v865 = vsel %vm814, %v863, %v864
        %v866 = vrot.slane %v859, 2
        %v867 = vsel %vm814, %v864, %v866
        %v870 = vadd.f32 %v805, %v865
        %v871 = vadd.f32 %v806, %v867
        %v872 = vstv %s197
        %v873 = vmul.f32 %v872, %v642
        %v874 = vmul.f32 %v872, %v644
        %v875 = vmul.f32 %v872, %v646
        %v879 = vrot.slane %v873, 2
        %v880 = vrot.slane %v874, 2
        %v881 = vsel %vm814, %v879, %v880
        %v882 = vrot.slane %v875, 2
        %v883 = vsel %vm814, %v880, %v882
        %v886 = vadd.f32 %v822, %v881
        %v887 = vadd.f32 %v823, %v883
        %v888 = vstv %s198
        %v889 = vmul.f32 %v888, %v648
        %v890 = vmul.f32 %v888, %v650
        %v891 = vmul.f32 %v888, %v652
        %v895 = vrot.slane %v889, 2
        %v896 = vrot.slane %v890, 2
        %v897 = vsel %vm814, %v895, %v896
        %v898 = vrot.slane %v891, 2
        %v899 = vsel %vm814, %v896, %v898
        %v902 = vadd.f32 %v838, %v897
        %v903 = vadd.f32 %v839, %v899
        %v904 = vstv %s199
        %v905 = vmul.f32 %v904, %v654
        %v906 = vmul.f32 %v904, %v656
        %v907 = vmul.f32 %v904, %v658
        %v911 = vrot.slane %v905, 2
        %v912 = vrot.slane %v906, 2
        %v913 = vsel %vm814, %v911, %v912
        %v914 = vrot.slane %v907, 2
        %v915 = vsel %vm814, %v912, %v914
        %v918 = vadd.f32 %v854, %v913
        %v919 = vadd.f32 %v855, %v915
        %v920 = vstv %s200
        %v921 = vmul.f32 %v920, %v624
        %v922 = vmul.f32 %v920, %v626
        %v923 = vmul.f32 %v920, %v628
        %vm927 = vcmask 1044480
        %v928 = vrot.slane %v921, 3
        %v929 = vrot.slane %v922, 3
        %v930 = vsel %vm927, %v928, %v929
        %v931 = vrot.slane %v923, 3
        %v932 = vsel %vm927, %v929, %v931
        %v935 = vadd.f32 %v870, %v930
        %v936 = vadd.f32 %v871, %v932
        %v937 = vstv %s201
        %v938 = vmul.f32 %v937, %v630
        %v939 = vmul.f32 %v937, %v632
        %v940 = vmul.f32 %v937, %v634
        %v944 = vrot.slane %v938, 3
        %v945 = vrot.slane %v939, 3
        %v946 = vsel %vm927, %v944, %v945
        %v947 = vrot.slane %v940, 3
        %v948 = vsel %vm927, %v945, %v947
        %v951 = vadd.f32 %v886, %v946
        %v952 = vadd.f32 %v887, %v948
        %v953 = vstv %s202
        %v954 = vmul.f32 %v953, %v636
        %v955 = vmul.f32 %v953, %v638
        %v956 = vmul.f32 %v953, %v640
        %v960 = vrot.slane %v954, 3
        %v961 = vrot.slane %v955, 3
        %v962 = vsel %vm927, %v960, %v961
        %v963 = vrot.slane %v956, 3
        %v964 = vsel %vm927, %v961, %v963
        %v967 = vadd.f32 %v902, %v962
        %v968 = vadd.f32 %v903, %v964
        %v969 = vstv %s203
        %v970 = vmul.f32 %v969, %v620
        %v971 = vmul.f32 %v969, %v621
        %v972 = vmul.f32 %v969, %v622
        %v976 = vrot.slane %v970, 3
        %v977 = vrot.slane %v971, 3
        %v978 = vsel %vm927, %v976, %v977
        %v979 = vrot.slane %v972, 3
        %v980 = vsel %vm927, %v977, %v979
        %v983 = vadd.f32 %v918, %v978
        %v984 = vadd.f32 %v919, %v980
        %v985 = vstv %s204
        %v986 = vmul.f32 %v985, %v642
        %v987 = vmul.f32 %v985, %v644
        %v988 = vmul.f32 %v985, %v646
        %v992 = vrot.slane %v986, 3
        %v993 = vrot.slane %v987, 3
        %v994 = vsel %vm927, %v992, %v993
        %v995 = vrot.slane %v988, 3
        %v996 = vsel %vm927, %v993, %v995
        %v999 = vadd.f32 %v935, %v994
        %v1000 = vadd.f32 %v936, %v996
        %v1001 = vstv %s205
        %v1002 = vmul.f32 %v1001, %v648
        %v1003 = vmul.f32 %v1001, %v650
        %v1004 = vmul.f32 %v1001, %v652
        %v1008 = vrot.slane %v1002, 3
        %v1009 = vrot.slane %v1003, 3
        %v1010 = vsel %vm927, %v1008, %v1009
        %v1011 = vrot.slane %v1004, 3
        %v1012 = vsel %vm927, %v1009, %v1011
        %v1015 = vadd.f32 %v951, %v1010
        %v1016 = vadd.f32 %v952, %v1012
        %v1017 = vstv %s206
        %v1018 = vmul.f32 %v1017, %v654
        %v1019 = vmul.f32 %v1017, %v656
        %v1020 = vmul.f32 %v1017, %v658
        %v1024 = vrot.slane %v1018, 3
        %v1025 = vrot.slane %v1019, 3
        %v1026 = vsel %vm927, %v1024, %v1025
        %v1027 = vrot.slane %v1020, 3
        %v1028 = vsel %vm927, %v1025, %v1027
        %v1031 = vadd.f32 %v967, %v1026
        %v1032 = vadd.f32 %v968, %v1028
        %v1033 = vstv %s207
        %v1034 = vmul.f32 %v1033, %v624
        %v1035 = vmul.f32 %v1033, %v626
        %v1036 = vmul.f32 %v1033, %v628
        %v1040 = vrot.slane %v1034, 4
        %v1041 = vrot.slane %v1035, 4
        %v1042 = vsel %vm287, %v1040, %v1041
        %v1043 = vrot.slane %v1036, 4
        %v1044 = vsel %vm287, %v1041, %v1043
        %v1047 = vadd.f32 %v983, %v1042
        %v1048 = vadd.f32 %v984, %v1044
        %v1049 = vstv %s208
        %v1050 = vmul.f32 %v1049, %v630
        %v1051 = vmul.f32 %v1049, %v632
        %v1052 = vmul.f32 %v1049, %v634
        %v1056 = vrot.slane %v1050, 4
        %v1057 = vrot.slane %v1051, 4
        %v1058 = vsel %vm287, %v1056, %v1057
        %v1059 = vrot.slane %v1052, 4
        %v1060 = vsel %vm287, %v1057, %v1059
        %v1063 = vadd.f32 %v999, %v1058
        %v1064 = vadd.f32 %v1000, %v1060
        %v1065 = vstv %s209
        %v1066 = vmul.f32 %v1065, %v636
        %v1067 = vmul.f32 %v1065, %v638
        %v1068 = vmul.f32 %v1065, %v640
        %v1072 = vrot.slane %v1066, 4
        %v1073 = vrot.slane %v1067, 4
        %v1074 = vsel %vm287, %v1072, %v1073
        %v1075 = vrot.slane %v1068, 4
        %v1076 = vsel %vm287, %v1073, %v1075
        %v1079 = vadd.f32 %v1015, %v1074
        %v1080 = vadd.f32 %v1016, %v1076
        %v1081 = vstv %s210
        %v1082 = vmul.f32 %v1081, %v620
        %v1083 = vmul.f32 %v1081, %v621
        %v1084 = vmul.f32 %v1081, %v622
        %v1088 = vrot.slane %v1082, 4
        %v1089 = vrot.slane %v1083, 4
        %v1090 = vsel %vm287, %v1088, %v1089
        %v1091 = vrot.slane %v1084, 4
        %v1092 = vsel %vm287, %v1089, %v1091
        %v1095 = vadd.f32 %v1031, %v1090
        %v1096 = vadd.f32 %v1032, %v1092
        %v1097 = vstv %s211
        %v1098 = vmul.f32 %v1097, %v642
        %v1099 = vmul.f32 %v1097, %v644
        %v1100 = vmul.f32 %v1097, %v646
        %v1104 = vrot.slane %v1098, 4
        %v1105 = vrot.slane %v1099, 4
        %v1106 = vsel %vm287, %v1104, %v1105
        %v1107 = vrot.slane %v1100, 4
        %v1108 = vsel %vm287, %v1105, %v1107
        %v1111 = vadd.f32 %v1047, %v1106
        %v1112 = vadd.f32 %v1048, %v1108
        %v1113 = vstv %s212
        %v1114 = vmul.f32 %v1113, %v648
        %v1115 = vmul.f32 %v1113, %v650
        %v1116 = vmul.f32 %v1113, %v652
        %v1120 = vrot.slane %v1114, 4
        %v1121 = vrot.slane %v1115, 4
        %v1122 = vsel %vm287, %v1120, %v1121
        %v1123 = vrot.slane %v1116, 4
        %v1124 = vsel %vm287, %v1121, %v1123
        %v1127 = vadd.f32 %v1063, %v1122
        %v1128 = vadd.f32 %v1064, %v1124
        %v1129 = vstv %s213
        %v1130 = vmul.f32 %v1129, %v654
        %v1131 = vmul.f32 %v1129, %v656
        %v1132 = vmul.f32 %v1129, %v658
        %v1136 = vrot.slane %v1130, 4
        %v1137 = vrot.slane %v1131, 4
        %v1138 = vsel %vm287, %v1136, %v1137
        %v1139 = vrot.slane %v1132, 4
        %v1140 = vsel %vm287, %v1137, %v1139
        %v1143 = vadd.f32 %v1079, %v1138
        %v1144 = vadd.f32 %v1080, %v1140
        %v1145 = vstv %s214
        %v1146 = vmul.f32 %v1145, %v624
        %v1147 = vmul.f32 %v1145, %v626
        %v1148 = vmul.f32 %v1145, %v628
        %vm1152 = vcmask 1042432
        %v1153 = vrot.slane %v1146, 5
        %v1154 = vrot.slane %v1147, 5
        %v1155 = vsel %vm1152, %v1153, %v1154
        %v1156 = vrot.slane %v1148, 5
        %v1157 = vsel %vm1152, %v1154, %v1156
        %v1160 = vadd.f32 %v1095, %v1155
        %v1161 = vadd.f32 %v1096, %v1157
        %v1162 = vstv %s215
        %v1163 = vmul.f32 %v1162, %v630
        %v1164 = vmul.f32 %v1162, %v632
        %v1165 = vmul.f32 %v1162, %v634
        %v1169 = vrot.slane %v1163, 5
        %v1170 = vrot.slane %v1164, 5
        %v1171 = vsel %vm1152, %v1169, %v1170
        %v1172 = vrot.slane %v1165, 5
        %v1173 = vsel %vm1152, %v1170, %v1172
        %v1176 = vadd.f32 %v1111, %v1171
        %v1177 = vadd.f32 %v1112, %v1173
        %v1178 = vstv %s216
        %v1179 = vmul.f32 %v1178, %v636
        %v1180 = vmul.f32 %v1178, %v638
        %v1181 = vmul.f32 %v1178, %v640
        %v1185 = vrot.slane %v1179, 5
        %v1186 = vrot.slane %v1180, 5
        %v1187 = vsel %vm1152, %v1185, %v1186
        %v1188 = vrot.slane %v1181, 5
        %v1189 = vsel %vm1152, %v1186, %v1188
        %v1192 = vadd.f32 %v1127, %v1187
        %v1193 = vadd.f32 %v1128, %v1189
        %v1194 = vstv %s217
        %v1195 = vmul.f32 %v1194, %v620
        %v1196 = vmul.f32 %v1194, %v621
        %v1197 = vmul.f32 %v1194, %v622
        %v1201 = vrot.slane %v1195, 5
        %v1202 = vrot.slane %v1196, 5
        %v1203 = vsel %vm1152, %v1201, %v1202
        %v1204 = vrot.slane %v1197, 5
        %v1205 = vsel %vm1152, %v1202, %v1204
        %v1208 = vadd.f32 %v1143, %v1203
        %v1209 = vadd.f32 %v1144, %v1205
        %v1210 = vstv %s218
        %v1211 = vmul.f32 %v1210, %v642
        %v1212 = vmul.f32 %v1210, %v644
        %v1213 = vmul.f32 %v1210, %v646
        %v1217 = vrot.slane %v1211, 5
        %v1218 = vrot.slane %v1212, 5
        %v1219 = vsel %vm1152, %v1217, %v1218
        %v1220 = vrot.slane %v1213, 5
        %v1221 = vsel %vm1152, %v1218, %v1220
        %v1224 = vadd.f32 %v1160, %v1219
        %v1225 = vadd.f32 %v1161, %v1221
        %v1226 = vstv %s219
        %v1227 = vmul.f32 %v1226, %v648
        %v1228 = vmul.f32 %v1226, %v650
        %v1229 = vmul.f32 %v1226, %v652
        %v1233 = vrot.slane %v1227, 5
        %v1234 = vrot.slane %v1228, 5
        %v1235 = vsel %vm1152, %v1233, %v1234
        %v1236 = vrot.slane %v1229, 5
        %v1237 = vsel %vm1152, %v1234, %v1236
        %v1240 = vadd.f32 %v1176, %v1235
        %v1241 = vadd.f32 %v1177, %v1237
        %v1242 = vstv %s220
        %v1243 = vmul.f32 %v1242, %v654
        %v1244 = vmul.f32 %v1242, %v656
        %v1245 = vmul.f32 %v1242, %v658
        %v1249 = vrot.slane %v1243, 5
        %v1250 = vrot.slane %v1244, 5
        %v1251 = vsel %vm1152, %v1249, %v1250
        %v1252 = vrot.slane %v1245, 5
        %v1253 = vsel %vm1152, %v1250, %v1252
        %v1256 = vadd.f32 %v1192, %v1251
        %v1257 = vadd.f32 %v1193, %v1253
        %v1258 = vstv %s221
        %v1259 = vmul.f32 %v1258, %v624
        %v1260 = vmul.f32 %v1258, %v626
        %v1261 = vmul.f32 %v1258, %v628
        %vm1265 = vcmask 1041408
        %v1266 = vrot.slane %v1259, 6
        %v1267 = vrot.slane %v1260, 6
        %v1268 = vsel %vm1265, %v1266, %v1267
        %v1269 = vrot.slane %v1261, 6
        %v1270 = vsel %vm1265, %v1267, %v1269
        %v1273 = vadd.f32 %v1208, %v1268
        %v1274 = vadd.f32 %v1209, %v1270
        %v1275 = vstv %s222
        %v1276 = vmul.f32 %v1275, %v630
        %v1277 = vmul.f32 %v1275, %v632
        %v1278 = vmul.f32 %v1275, %v634
        %v1282 = vrot.slane %v1276, 6
        %v1283 = vrot.slane %v1277, 6
        %v1284 = vsel %vm1265, %v1282, %v1283
        %v1285 = vrot.slane %v1278, 6
        %v1286 = vsel %vm1265, %v1283, %v1285
        %v1289 = vadd.f32 %v1224, %v1284
        %v1290 = vadd.f32 %v1225, %v1286
        %v1291 = vstv %s223
        %v1292 = vmul.f32 %v1291, %v636
        %v1293 = vmul.f32 %v1291, %v638
        %v1294 = vmul.f32 %v1291, %v640
        %v1298 = vrot.slane %v1292, 6
        %v1299 = vrot.slane %v1293, 6
        %v1300 = vsel %vm1265, %v1298, %v1299
        %v1301 = vrot.slane %v1294, 6
        %v1302 = vsel %vm1265, %v1299, %v1301
        %v1305 = vadd.f32 %v1240, %v1300
        %v1306 = vadd.f32 %v1241, %v1302
        %v1307 = vstv %s224
        %v1308 = vmul.f32 %v1307, %v620
        %v1309 = vmul.f32 %v1307, %v621
        %v1310 = vmul.f32 %v1307, %v622
        %v1314 = vrot.slane %v1308, 6
        %v1315 = vrot.slane %v1309, 6
        %v1316 = vsel %vm1265, %v1314, %v1315
        %v1317 = vrot.slane %v1310, 6
        %v1318 = vsel %vm1265, %v1315, %v1317
        %v1321 = vadd.f32 %v1256, %v1316
        %v1322 = vadd.f32 %v1257, %v1318
        %v1323 = vstv %s225
        %v1324 = vmul.f32 %v1323, %v642
        %v1325 = vmul.f32 %v1323, %v644
        %v1326 = vmul.f32 %v1323, %v646
        %v1330 = vrot.slane %v1324, 6
        %v1331 = vrot.slane %v1325, 6
        %v1332 = vsel %vm1265, %v1330, %v1331
        %v1333 = vrot.slane %v1326, 6
        %v1334 = vsel %vm1265, %v1331, %v1333
        %v1337 = vadd.f32 %v1273, %v1332
        %v1338 = vadd.f32 %v1274, %v1334
        %v1339 = vstv %s226
        %v1340 = vmul.f32 %v1339, %v648
        %v1341 = vmul.f32 %v1339, %v650
        %v1342 = vmul.f32 %v1339, %v652
        %v1346 = vrot.slane %v1340, 6
        %v1347 = vrot.slane %v1341, 6
        %v1348 = vsel %vm1265, %v1346, %v1347
        %v1349 = vrot.slane %v1342, 6
        %v1350 = vsel %vm1265, %v1347, %v1349
        %v1353 = vadd.f32 %v1289, %v1348
        %v1354 = vadd.f32 %v1290, %v1350
        %v1355 = vstv %s227
        %v1356 = vmul.f32 %v1355, %v654
        %v1357 = vmul.f32 %v1355, %v656
        %v1358 = vmul.f32 %v1355, %v658
        %v1362 = vrot.slane %v1356, 6
        %v1363 = vrot.slane %v1357, 6
        %v1364 = vsel %vm1265, %v1362, %v1363
        %v1365 = vrot.slane %v1358, 6
        %v1366 = vsel %vm1265, %v1363, %v1365
        %v1369 = vadd.f32 %v1305, %v1364
        %v1370 = vadd.f32 %v1306, %v1366
        %v1371 = vld [vmem:[%s328] sm:$0xff]
        %v1372 = vld [vmem:[%s328 + $0x8] sm:$0xff]
        %v1373 = vld [vmem:[%s328 + $0x10] sm:$0xff]
        %1374 = vrot.lane.b32.xlu0 %v1371, 3
        %v1375 = vpop.permute.xlu0 %1374
        %1376 = vrot.lane.b32.xlu0 %v1372, 3
        %v1377 = vpop.permute.xlu0 %1376
        %1378 = vrot.lane.b32.xlu0 %v1373, 3
        %v1379 = vpop.permute.xlu0 %1378
        %1380 = vrot.lane.b32.xlu0 %v1371, 2
        %v1381 = vpop.permute.xlu0 %1380
        %1382 = vrot.lane.b32.xlu0 %v1372, 2
        %v1383 = vpop.permute.xlu0 %1382
        %1384 = vrot.lane.b32.xlu0 %v1373, 2
        %v1385 = vpop.permute.xlu0 %1384
        %1386 = vrot.lane.b32.xlu0 %v1371, 1
        %v1387 = vpop.permute.xlu0 %1386
        %1388 = vrot.lane.b32.xlu0 %v1372, 1
        %v1389 = vpop.permute.xlu0 %1388
        %1390 = vrot.lane.b32.xlu0 %v1373, 1
        %v1391 = vpop.permute.xlu0 %1390
        %1392 = vrot.lane.b32.xlu0 %v1371, 127
        %v1393 = vpop.permute.xlu0 %1392
        %1394 = vrot.lane.b32.xlu0 %v1372, 127
        %v1395 = vpop.permute.xlu0 %1394
        %1396 = vrot.lane.b32.xlu0 %v1373, 127
        %v1397 = vpop.permute.xlu0 %1396
        %1398 = vrot.lane.b32.xlu0 %v1371, 126
        %v1399 = vpop.permute.xlu0 %1398
        %1400 = vrot.lane.b32.xlu0 %v1372, 126
        %v1401 = vpop.permute.xlu0 %1400
        %1402 = vrot.lane.b32.xlu0 %v1373, 126
        %v1403 = vpop.permute.xlu0 %1402
        %1404 = vrot.lane.b32.xlu0 %v1371, 125
        %v1405 = vpop.permute.xlu0 %1404
        %1406 = vrot.lane.b32.xlu0 %v1372, 125
        %v1407 = vpop.permute.xlu0 %1406
        %1408 = vrot.lane.b32.xlu0 %v1373, 125
        %v1409 = vpop.permute.xlu0 %1408
        %v1410 = vstv %s228
        %v1411 = vmul.f32 %v1410, %v1375
        %v1412 = vmul.f32 %v1410, %v1377
        %v1413 = vadd.f32 %v1369, %v1411
        %v1414 = vadd.f32 %v1370, %v1412
        %v1415 = vstv %s229
        %v1416 = vmul.f32 %v1415, %v1381
        %v1417 = vmul.f32 %v1415, %v1383
        %v1418 = vadd.f32 %v1321, %v1416
        %v1419 = vadd.f32 %v1322, %v1417
        %v1420 = vstv %s230
        %v1421 = vmul.f32 %v1420, %v1387
        %v1422 = vmul.f32 %v1420, %v1389
        %v1423 = vadd.f32 %v1337, %v1421
        %v1424 = vadd.f32 %v1338, %v1422
        %v1425 = vstv %s231
        %v1426 = vmul.f32 %v1425, %v1371
        %v1427 = vmul.f32 %v1425, %v1372
        %v1428 = vadd.f32 %v1353, %v1426
        %v1429 = vadd.f32 %v1354, %v1427
        %v1430 = vstv %s232
        %v1431 = vmul.f32 %v1430, %v1393
        %v1432 = vmul.f32 %v1430, %v1395
        %v1433 = vadd.f32 %v1413, %v1431
        %v1434 = vadd.f32 %v1414, %v1432
        %v1435 = vstv %s233
        %v1436 = vmul.f32 %v1435, %v1399
        %v1437 = vmul.f32 %v1435, %v1401
        %v1438 = vadd.f32 %v1418, %v1436
        %v1439 = vadd.f32 %v1419, %v1437
        %v1440 = vstv %s234
        %v1441 = vmul.f32 %v1440, %v1405
        %v1442 = vmul.f32 %v1440, %v1407
        %v1443 = vadd.f32 %v1423, %v1441
        %v1444 = vadd.f32 %v1424, %v1442
        %v1445 = vstv %s235
        %v1446 = vmul.f32 %v1445, %v1375
        %v1447 = vmul.f32 %v1445, %v1377
        %v1448 = vmul.f32 %v1445, %v1379
        %v1452 = vrot.slane %v1446, 1
        %v1453 = vrot.slane %v1447, 1
        %v1454 = vsel %vm701, %v1452, %v1453
        %v1455 = vrot.slane %v1448, 1
        %v1456 = vsel %vm701, %v1453, %v1455
        %v1459 = vadd.f32 %v1428, %v1454
        %v1460 = vadd.f32 %v1429, %v1456
        %v1461 = vstv %s236
        %v1462 = vmul.f32 %v1461, %v1381
        %v1463 = vmul.f32 %v1461, %v1383
        %v1464 = vmul.f32 %v1461, %v1385
        %v1468 = vrot.slane %v1462, 1
        %v1469 = vrot.slane %v1463, 1
        %v1470 = vsel %vm701, %v1468, %v1469
        %v1471 = vrot.slane %v1464, 1
        %v1472 = vsel %vm701, %v1469, %v1471
        %v1475 = vadd.f32 %v1433, %v1470
        %v1476 = vadd.f32 %v1434, %v1472
        %v1477 = vstv %s237
        %v1478 = vmul.f32 %v1477, %v1387
        %v1479 = vmul.f32 %v1477, %v1389
        %v1480 = vmul.f32 %v1477, %v1391
        %v1484 = vrot.slane %v1478, 1
        %v1485 = vrot.slane %v1479, 1
        %v1486 = vsel %vm701, %v1484, %v1485
        %v1487 = vrot.slane %v1480, 1
        %v1488 = vsel %vm701, %v1485, %v1487
        %v1491 = vadd.f32 %v1438, %v1486
        %v1492 = vadd.f32 %v1439, %v1488
        %v1493 = vstv %s238
        %v1494 = vmul.f32 %v1493, %v1371
        %v1495 = vmul.f32 %v1493, %v1372
        %v1496 = vmul.f32 %v1493, %v1373
        %v1500 = vrot.slane %v1494, 1
        %v1501 = vrot.slane %v1495, 1
        %v1502 = vsel %vm701, %v1500, %v1501
        %v1503 = vrot.slane %v1496, 1
        %v1504 = vsel %vm701, %v1501, %v1503
        %v1507 = vadd.f32 %v1443, %v1502
        %v1508 = vadd.f32 %v1444, %v1504
        %v1509 = vstv %s239
        %v1510 = vmul.f32 %v1509, %v1393
        %v1511 = vmul.f32 %v1509, %v1395
        %v1512 = vmul.f32 %v1509, %v1397
        %v1516 = vrot.slane %v1510, 1
        %v1517 = vrot.slane %v1511, 1
        %v1518 = vsel %vm701, %v1516, %v1517
        %v1519 = vrot.slane %v1512, 1
        %v1520 = vsel %vm701, %v1517, %v1519
        %v1523 = vadd.f32 %v1459, %v1518
        %v1524 = vadd.f32 %v1460, %v1520
        %v1525 = vstv %s240
        %v1526 = vmul.f32 %v1525, %v1399
        %v1527 = vmul.f32 %v1525, %v1401
        %v1528 = vmul.f32 %v1525, %v1403
        %v1532 = vrot.slane %v1526, 1
        %v1533 = vrot.slane %v1527, 1
        %v1534 = vsel %vm701, %v1532, %v1533
        %v1535 = vrot.slane %v1528, 1
        %v1536 = vsel %vm701, %v1533, %v1535
        %v1539 = vadd.f32 %v1475, %v1534
        %v1540 = vadd.f32 %v1476, %v1536
        %v1541 = vstv %s241
        %v1542 = vmul.f32 %v1541, %v1405
        %v1543 = vmul.f32 %v1541, %v1407
        %v1544 = vmul.f32 %v1541, %v1409
        %v1548 = vrot.slane %v1542, 1
        %v1549 = vrot.slane %v1543, 1
        %v1550 = vsel %vm701, %v1548, %v1549
        %v1551 = vrot.slane %v1544, 1
        %v1552 = vsel %vm701, %v1549, %v1551
        %v1555 = vadd.f32 %v1491, %v1550
        %v1556 = vadd.f32 %v1492, %v1552
        %v1557 = vstv %s242
        %v1558 = vmul.f32 %v1557, %v1375
        %v1559 = vmul.f32 %v1557, %v1377
        %v1560 = vmul.f32 %v1557, %v1379
        %v1564 = vrot.slane %v1558, 2
        %v1565 = vrot.slane %v1559, 2
        %v1566 = vsel %vm814, %v1564, %v1565
        %v1567 = vrot.slane %v1560, 2
        %v1568 = vsel %vm814, %v1565, %v1567
        %v1571 = vadd.f32 %v1507, %v1566
        %v1572 = vadd.f32 %v1508, %v1568
        %v1573 = vstv %s243
        %v1574 = vmul.f32 %v1573, %v1381
        %v1575 = vmul.f32 %v1573, %v1383
        %v1576 = vmul.f32 %v1573, %v1385
        %v1580 = vrot.slane %v1574, 2
        %v1581 = vrot.slane %v1575, 2
        %v1582 = vsel %vm814, %v1580, %v1581
        %v1583 = vrot.slane %v1576, 2
        %v1584 = vsel %vm814, %v1581, %v1583
        %v1587 = vadd.f32 %v1523, %v1582
        %v1588 = vadd.f32 %v1524, %v1584
        %v1589 = vstv %s244
        %v1590 = vmul.f32 %v1589, %v1387
        %v1591 = vmul.f32 %v1589, %v1389
        %v1592 = vmul.f32 %v1589, %v1391
        %v1596 = vrot.slane %v1590, 2
        %v1597 = vrot.slane %v1591, 2
        %v1598 = vsel %vm814, %v1596, %v1597
        %v1599 = vrot.slane %v1592, 2
        %v1600 = vsel %vm814, %v1597, %v1599
        %v1603 = vadd.f32 %v1539, %v1598
        %v1604 = vadd.f32 %v1540, %v1600
        %v1605 = vstv %s245
        %v1606 = vmul.f32 %v1605, %v1371
        %v1607 = vmul.f32 %v1605, %v1372
        %v1608 = vmul.f32 %v1605, %v1373
        %v1612 = vrot.slane %v1606, 2
        %v1613 = vrot.slane %v1607, 2
        %v1614 = vsel %vm814, %v1612, %v1613
        %v1615 = vrot.slane %v1608, 2
        %v1616 = vsel %vm814, %v1613, %v1615
        %v1619 = vadd.f32 %v1555, %v1614
        %v1620 = vadd.f32 %v1556, %v1616
        %v1621 = vstv %s246
        %v1622 = vmul.f32 %v1621, %v1393
        %v1623 = vmul.f32 %v1621, %v1395
        %v1624 = vmul.f32 %v1621, %v1397
        %v1628 = vrot.slane %v1622, 2
        %v1629 = vrot.slane %v1623, 2
        %v1630 = vsel %vm814, %v1628, %v1629
        %v1631 = vrot.slane %v1624, 2
        %v1632 = vsel %vm814, %v1629, %v1631
        %v1635 = vadd.f32 %v1571, %v1630
        %v1636 = vadd.f32 %v1572, %v1632
        %v1637 = vstv %s247
        %v1638 = vmul.f32 %v1637, %v1399
        %v1639 = vmul.f32 %v1637, %v1401
        %v1640 = vmul.f32 %v1637, %v1403
        %v1644 = vrot.slane %v1638, 2
        %v1645 = vrot.slane %v1639, 2
        %v1646 = vsel %vm814, %v1644, %v1645
        %v1647 = vrot.slane %v1640, 2
        %v1648 = vsel %vm814, %v1645, %v1647
        %v1651 = vadd.f32 %v1587, %v1646
        %v1652 = vadd.f32 %v1588, %v1648
        %v1653 = vstv %s248
        %v1654 = vmul.f32 %v1653, %v1405
        %v1655 = vmul.f32 %v1653, %v1407
        %v1656 = vmul.f32 %v1653, %v1409
        %v1660 = vrot.slane %v1654, 2
        %v1661 = vrot.slane %v1655, 2
        %v1662 = vsel %vm814, %v1660, %v1661
        %v1663 = vrot.slane %v1656, 2
        %v1664 = vsel %vm814, %v1661, %v1663
        %v1667 = vadd.f32 %v1603, %v1662
        %v1668 = vadd.f32 %v1604, %v1664
        %v1669 = vstv %s249
        %v1670 = vmul.f32 %v1669, %v1375
        %v1671 = vmul.f32 %v1669, %v1377
        %v1672 = vmul.f32 %v1669, %v1379
        %v1676 = vrot.slane %v1670, 3
        %v1677 = vrot.slane %v1671, 3
        %v1678 = vsel %vm927, %v1676, %v1677
        %v1679 = vrot.slane %v1672, 3
        %v1680 = vsel %vm927, %v1677, %v1679
        %v1683 = vadd.f32 %v1619, %v1678
        %v1684 = vadd.f32 %v1620, %v1680
        %v1685 = vstv %s250
        %v1686 = vmul.f32 %v1685, %v1381
        %v1687 = vmul.f32 %v1685, %v1383
        %v1688 = vmul.f32 %v1685, %v1385
        %v1692 = vrot.slane %v1686, 3
        %v1693 = vrot.slane %v1687, 3
        %v1694 = vsel %vm927, %v1692, %v1693
        %v1695 = vrot.slane %v1688, 3
        %v1696 = vsel %vm927, %v1693, %v1695
        %v1699 = vadd.f32 %v1635, %v1694
        %v1700 = vadd.f32 %v1636, %v1696
        %v1701 = vstv %s251
        %v1702 = vmul.f32 %v1701, %v1387
        %v1703 = vmul.f32 %v1701, %v1389
        %v1704 = vmul.f32 %v1701, %v1391
        %v1708 = vrot.slane %v1702, 3
        %v1709 = vrot.slane %v1703, 3
        %v1710 = vsel %vm927, %v1708, %v1709
        %v1711 = vrot.slane %v1704, 3
        %v1712 = vsel %vm927, %v1709, %v1711
        %v1715 = vadd.f32 %v1651, %v1710
        %v1716 = vadd.f32 %v1652, %v1712
        %v1717 = vstv %s252
        %v1718 = vmul.f32 %v1717, %v1371
        %v1719 = vmul.f32 %v1717, %v1372
        %v1720 = vmul.f32 %v1717, %v1373
        %v1724 = vrot.slane %v1718, 3
        %v1725 = vrot.slane %v1719, 3
        %v1726 = vsel %vm927, %v1724, %v1725
        %v1727 = vrot.slane %v1720, 3
        %v1728 = vsel %vm927, %v1725, %v1727
        %v1731 = vadd.f32 %v1667, %v1726
        %v1732 = vadd.f32 %v1668, %v1728
        %v1733 = vstv %s253
        %v1734 = vmul.f32 %v1733, %v1393
        %v1735 = vmul.f32 %v1733, %v1395
        %v1736 = vmul.f32 %v1733, %v1397
        %v1740 = vrot.slane %v1734, 3
        %v1741 = vrot.slane %v1735, 3
        %v1742 = vsel %vm927, %v1740, %v1741
        %v1743 = vrot.slane %v1736, 3
        %v1744 = vsel %vm927, %v1741, %v1743
        %v1747 = vadd.f32 %v1683, %v1742
        %v1748 = vadd.f32 %v1684, %v1744
        %v1749 = vstv %s254
        %v1750 = vmul.f32 %v1749, %v1399
        %v1751 = vmul.f32 %v1749, %v1401
        %v1752 = vmul.f32 %v1749, %v1403
        %v1756 = vrot.slane %v1750, 3
        %v1757 = vrot.slane %v1751, 3
        %v1758 = vsel %vm927, %v1756, %v1757
        %v1759 = vrot.slane %v1752, 3
        %v1760 = vsel %vm927, %v1757, %v1759
        %v1763 = vadd.f32 %v1699, %v1758
        %v1764 = vadd.f32 %v1700, %v1760
        %v1765 = vstv %s255
        %v1766 = vmul.f32 %v1765, %v1405
        %v1767 = vmul.f32 %v1765, %v1407
        %v1768 = vmul.f32 %v1765, %v1409
        %v1772 = vrot.slane %v1766, 3
        %v1773 = vrot.slane %v1767, 3
        %v1774 = vsel %vm927, %v1772, %v1773
        %v1775 = vrot.slane %v1768, 3
        %v1776 = vsel %vm927, %v1773, %v1775
        %v1779 = vadd.f32 %v1715, %v1774
        %v1780 = vadd.f32 %v1716, %v1776
        %v1781 = vstv %s256
        %v1782 = vmul.f32 %v1781, %v1375
        %v1783 = vmul.f32 %v1781, %v1377
        %v1784 = vmul.f32 %v1781, %v1379
        %v1788 = vrot.slane %v1782, 4
        %v1789 = vrot.slane %v1783, 4
        %v1790 = vsel %vm287, %v1788, %v1789
        %v1791 = vrot.slane %v1784, 4
        %v1792 = vsel %vm287, %v1789, %v1791
        %v1795 = vadd.f32 %v1731, %v1790
        %v1796 = vadd.f32 %v1732, %v1792
        %v1797 = vstv %s257
        %v1798 = vmul.f32 %v1797, %v1381
        %v1799 = vmul.f32 %v1797, %v1383
        %v1800 = vmul.f32 %v1797, %v1385
        %v1804 = vrot.slane %v1798, 4
        %v1805 = vrot.slane %v1799, 4
        %v1806 = vsel %vm287, %v1804, %v1805
        %v1807 = vrot.slane %v1800, 4
        %v1808 = vsel %vm287, %v1805, %v1807
        %v1811 = vadd.f32 %v1747, %v1806
        %v1812 = vadd.f32 %v1748, %v1808
        %v1813 = vstv %s258
        %v1814 = vmul.f32 %v1813, %v1387
        %v1815 = vmul.f32 %v1813, %v1389
        %v1816 = vmul.f32 %v1813, %v1391
        %v1820 = vrot.slane %v1814, 4
        %v1821 = vrot.slane %v1815, 4
        %v1822 = vsel %vm287, %v1820, %v1821
        %v1823 = vrot.slane %v1816, 4
        %v1824 = vsel %vm287, %v1821, %v1823
        %v1827 = vadd.f32 %v1763, %v1822
        %v1828 = vadd.f32 %v1764, %v1824
        %v1829 = vstv %s259
        %v1830 = vmul.f32 %v1829, %v1371
        %v1831 = vmul.f32 %v1829, %v1372
        %v1832 = vmul.f32 %v1829, %v1373
        %v1836 = vrot.slane %v1830, 4
        %v1837 = vrot.slane %v1831, 4
        %v1838 = vsel %vm287, %v1836, %v1837
        %v1839 = vrot.slane %v1832, 4
        %v1840 = vsel %vm287, %v1837, %v1839
        %v1843 = vadd.f32 %v1779, %v1838
        %v1844 = vadd.f32 %v1780, %v1840
        %v1845 = vstv %s260
        %v1846 = vmul.f32 %v1845, %v1393
        %v1847 = vmul.f32 %v1845, %v1395
        %v1848 = vmul.f32 %v1845, %v1397
        %v1852 = vrot.slane %v1846, 4
        %v1853 = vrot.slane %v1847, 4
        %v1854 = vsel %vm287, %v1852, %v1853
        %v1855 = vrot.slane %v1848, 4
        %v1856 = vsel %vm287, %v1853, %v1855
        %v1859 = vadd.f32 %v1795, %v1854
        %v1860 = vadd.f32 %v1796, %v1856
        %v1861 = vstv %s261
        %v1862 = vmul.f32 %v1861, %v1399
        %v1863 = vmul.f32 %v1861, %v1401
        %v1864 = vmul.f32 %v1861, %v1403
        %v1868 = vrot.slane %v1862, 4
        %v1869 = vrot.slane %v1863, 4
        %v1870 = vsel %vm287, %v1868, %v1869
        %v1871 = vrot.slane %v1864, 4
        %v1872 = vsel %vm287, %v1869, %v1871
        %v1875 = vadd.f32 %v1811, %v1870
        %v1876 = vadd.f32 %v1812, %v1872
        %v1877 = vstv %s262
        %v1878 = vmul.f32 %v1877, %v1405
        %v1879 = vmul.f32 %v1877, %v1407
        %v1880 = vmul.f32 %v1877, %v1409
        %v1884 = vrot.slane %v1878, 4
        %v1885 = vrot.slane %v1879, 4
        %v1886 = vsel %vm287, %v1884, %v1885
        %v1887 = vrot.slane %v1880, 4
        %v1888 = vsel %vm287, %v1885, %v1887
        %v1891 = vadd.f32 %v1827, %v1886
        %v1892 = vadd.f32 %v1828, %v1888
        %v1893 = vstv %s263
        %v1894 = vmul.f32 %v1893, %v1375
        %v1895 = vmul.f32 %v1893, %v1377
        %v1896 = vmul.f32 %v1893, %v1379
        %v1900 = vrot.slane %v1894, 5
        %v1901 = vrot.slane %v1895, 5
        %v1902 = vsel %vm1152, %v1900, %v1901
        %v1903 = vrot.slane %v1896, 5
        %v1904 = vsel %vm1152, %v1901, %v1903
        %v1907 = vadd.f32 %v1843, %v1902
        %v1908 = vadd.f32 %v1844, %v1904
        %v1909 = vstv %s264
        %v1910 = vmul.f32 %v1909, %v1381
        %v1911 = vmul.f32 %v1909, %v1383
        %v1912 = vmul.f32 %v1909, %v1385
        %v1916 = vrot.slane %v1910, 5
        %v1917 = vrot.slane %v1911, 5
        %v1918 = vsel %vm1152, %v1916, %v1917
        %v1919 = vrot.slane %v1912, 5
        %v1920 = vsel %vm1152, %v1917, %v1919
        %v1923 = vadd.f32 %v1859, %v1918
        %v1924 = vadd.f32 %v1860, %v1920
        %v1925 = vstv %s265
        %v1926 = vmul.f32 %v1925, %v1387
        %v1927 = vmul.f32 %v1925, %v1389
        %v1928 = vmul.f32 %v1925, %v1391
        %v1932 = vrot.slane %v1926, 5
        %v1933 = vrot.slane %v1927, 5
        %v1934 = vsel %vm1152, %v1932, %v1933
        %v1935 = vrot.slane %v1928, 5
        %v1936 = vsel %vm1152, %v1933, %v1935
        %v1939 = vadd.f32 %v1875, %v1934
        %v1940 = vadd.f32 %v1876, %v1936
        %v1941 = vstv %s266
        %v1942 = vmul.f32 %v1941, %v1371
        %v1943 = vmul.f32 %v1941, %v1372
        %v1944 = vmul.f32 %v1941, %v1373
        %v1948 = vrot.slane %v1942, 5
        %v1949 = vrot.slane %v1943, 5
        %v1950 = vsel %vm1152, %v1948, %v1949
        %v1951 = vrot.slane %v1944, 5
        %v1952 = vsel %vm1152, %v1949, %v1951
        %v1955 = vadd.f32 %v1891, %v1950
        %v1956 = vadd.f32 %v1892, %v1952
        %v1957 = vstv %s267
        %v1958 = vmul.f32 %v1957, %v1393
        %v1959 = vmul.f32 %v1957, %v1395
        %v1960 = vmul.f32 %v1957, %v1397
        %v1964 = vrot.slane %v1958, 5
        %v1965 = vrot.slane %v1959, 5
        %v1966 = vsel %vm1152, %v1964, %v1965
        %v1967 = vrot.slane %v1960, 5
        %v1968 = vsel %vm1152, %v1965, %v1967
        %v1971 = vadd.f32 %v1907, %v1966
        %v1972 = vadd.f32 %v1908, %v1968
        %v1973 = vstv %s268
        %v1974 = vmul.f32 %v1973, %v1399
        %v1975 = vmul.f32 %v1973, %v1401
        %v1976 = vmul.f32 %v1973, %v1403
        %v1980 = vrot.slane %v1974, 5
        %v1981 = vrot.slane %v1975, 5
        %v1982 = vsel %vm1152, %v1980, %v1981
        %v1983 = vrot.slane %v1976, 5
        %v1984 = vsel %vm1152, %v1981, %v1983
        %v1987 = vadd.f32 %v1923, %v1982
        %v1988 = vadd.f32 %v1924, %v1984
        %v1989 = vstv %s269
        %v1990 = vmul.f32 %v1989, %v1405
        %v1991 = vmul.f32 %v1989, %v1407
        %v1992 = vmul.f32 %v1989, %v1409
        %v1996 = vrot.slane %v1990, 5
        %v1997 = vrot.slane %v1991, 5
        %v1998 = vsel %vm1152, %v1996, %v1997
        %v1999 = vrot.slane %v1992, 5
        %v2000 = vsel %vm1152, %v1997, %v1999
        %v2003 = vadd.f32 %v1939, %v1998
        %v2004 = vadd.f32 %v1940, %v2000
        %v2005 = vstv %s270
        %v2006 = vmul.f32 %v2005, %v1375
        %v2007 = vmul.f32 %v2005, %v1377
        %v2008 = vmul.f32 %v2005, %v1379
        %v2012 = vrot.slane %v2006, 6
        %v2013 = vrot.slane %v2007, 6
        %v2014 = vsel %vm1265, %v2012, %v2013
        %v2015 = vrot.slane %v2008, 6
        %v2016 = vsel %vm1265, %v2013, %v2015
        %v2019 = vadd.f32 %v1955, %v2014
        %v2020 = vadd.f32 %v1956, %v2016
        %v2021 = vstv %s271
        %v2022 = vmul.f32 %v2021, %v1381
        %v2023 = vmul.f32 %v2021, %v1383
        %v2024 = vmul.f32 %v2021, %v1385
        %v2028 = vrot.slane %v2022, 6
        %v2029 = vrot.slane %v2023, 6
        %v2030 = vsel %vm1265, %v2028, %v2029
        %v2031 = vrot.slane %v2024, 6
        %v2032 = vsel %vm1265, %v2029, %v2031
        %v2035 = vadd.f32 %v1971, %v2030
        %v2036 = vadd.f32 %v1972, %v2032
        %v2037 = vstv %s272
        %v2038 = vmul.f32 %v2037, %v1387
        %v2039 = vmul.f32 %v2037, %v1389
        %v2040 = vmul.f32 %v2037, %v1391
        %v2044 = vrot.slane %v2038, 6
        %v2045 = vrot.slane %v2039, 6
        %v2046 = vsel %vm1265, %v2044, %v2045
        %v2047 = vrot.slane %v2040, 6
        %v2048 = vsel %vm1265, %v2045, %v2047
        %v2051 = vadd.f32 %v1987, %v2046
        %v2052 = vadd.f32 %v1988, %v2048
        %v2053 = vstv %s273
        %v2054 = vmul.f32 %v2053, %v1371
        %v2055 = vmul.f32 %v2053, %v1372
        %v2056 = vmul.f32 %v2053, %v1373
        %v2060 = vrot.slane %v2054, 6
        %v2061 = vrot.slane %v2055, 6
        %v2062 = vsel %vm1265, %v2060, %v2061
        %v2063 = vrot.slane %v2056, 6
        %v2064 = vsel %vm1265, %v2061, %v2063
        %v2067 = vadd.f32 %v2003, %v2062
        %v2068 = vadd.f32 %v2004, %v2064
        %v2069 = vstv %s274
        %v2070 = vmul.f32 %v2069, %v1393
        %v2071 = vmul.f32 %v2069, %v1395
        %v2072 = vmul.f32 %v2069, %v1397
        %v2076 = vrot.slane %v2070, 6
        %v2077 = vrot.slane %v2071, 6
        %v2078 = vsel %vm1265, %v2076, %v2077
        %v2079 = vrot.slane %v2072, 6
        %v2080 = vsel %vm1265, %v2077, %v2079
        %v2083 = vadd.f32 %v2019, %v2078
        %v2084 = vadd.f32 %v2020, %v2080
        %v2085 = vstv %s275
        %v2086 = vmul.f32 %v2085, %v1399
        %v2087 = vmul.f32 %v2085, %v1401
        %v2088 = vmul.f32 %v2085, %v1403
        %v2092 = vrot.slane %v2086, 6
        %v2093 = vrot.slane %v2087, 6
        %v2094 = vsel %vm1265, %v2092, %v2093
        %v2095 = vrot.slane %v2088, 6
        %v2096 = vsel %vm1265, %v2093, %v2095
        %v2099 = vadd.f32 %v2035, %v2094
        %v2100 = vadd.f32 %v2036, %v2096
        %v2101 = vstv %s276
        %v2102 = vmul.f32 %v2101, %v1405
        %v2103 = vmul.f32 %v2101, %v1407
        %v2104 = vmul.f32 %v2101, %v1409
        %v2108 = vrot.slane %v2102, 6
        %v2109 = vrot.slane %v2103, 6
        %v2110 = vsel %vm1265, %v2108, %v2109
        %v2111 = vrot.slane %v2104, 6
        %v2112 = vsel %vm1265, %v2109, %v2111
        %v2115 = vadd.f32 %v2051, %v2110
        %v2116 = vadd.f32 %v2052, %v2112
        %v2117 = vadd.f32 %v2115, %v2067
        %v2118 = vadd.f32 %v2116, %v2068
        %v2119 = vadd.f32 %v2083, %v2099
        %v2120 = vadd.f32 %v2084, %v2100
        %v2121 = vadd.f32 %v2117, %v2119
        %v2122 = vadd.f32 %v2118, %v2120
        %v2123 = vsub.f32 0.0, %v2121
        %v2124 = vsub.f32 0.0, %v2122
        %v2125 = vmul.f32 %v2123, 1.442695
        %v2126 = vpow.pop %v2125
        %v2127 = vmul.f32 %v2124, 1.442695
        %v2128 = vpow.pop %v2127
        %v2129 = vadd.f32 %v2126, 1.0
        %v2130 = vadd.f32 %v2128, 1.0
        %v2131 = vrcp.pop %v2129
        %v2132 = vrcp.pop %v2130
        %2135 = vrot.lane.b32.xlu0 %v2131, 125
        %v2136 = vpop.permute.xlu0 %2135
        %2137 = vrot.lane.b32.xlu0 %v2132, 125
        %v2138 = vpop.permute.xlu0 %2137
        %vm2141 = vcmask 130048
        %2142 = vst.msk [vmem:[%s176] sm:$0xff] %vm2141, %v2136
        %2143 = vst.msk [vmem:[%s176 + $0x8] sm:$0xff] %vm2141, %v2138
        %2144 = vrot.lane.b32.xlu0 %v2131, 103
        %v2145 = vpop.permute.xlu0 %2144
        %2146 = vrot.lane.b32.xlu0 %v2132, 103
        %v2147 = vpop.permute.xlu0 %2146
        %s2150 = scalar_lea.vmem %s176, 16 [#allocation8]
        %2151 = vst.msk [vmem:[%s2150] sm:$0xff] %vm2141, %v2145
        %2152 = vst.msk [vmem:[%s2150 + $0x8] sm:$0xff] %vm2141, %v2147
        %s2153 = sand.u32 %s75, 1
        %s2154 = scalar_lea.sflag [#allocation5], %s2153
        %s2155 = sand.u32 %s75, 1
        %s2156 = smul.addr %s2155, 32
        %s2157 = scalar_lea.vmem [#allocation8], %s2156
        // Predicated region
        $region37: #{tpu_custom_call.1} parent=27 // pred_check
          %p2158 = pneg %p85
        $region38: #{tpu_custom_call.1} parent=27 // pred_check_branch
          %2160 = sbr.rel (%p2158) target = $region40
        $region39: #{tpu_custom_call.1} parent=27 // pred_region
          %s2161 = smul.u32 2, %s20
          %s2163 = ssub.s32 512, 512
          %2164 = vsyncadd %s2154, %s2163
          %s2165 = smul.addr %s2161, 2
          %s2166 = smul.addr %s2165, 128
          %s2167 = scalar_lea.hbm %s2, %s2166
          %s2168 = sshll.u32 %s2157, 4
          %s2169 = int_to_ptr.vmem [resolvable:$true] %s2168
          %2174 = dma.vmem_to_hbm [thread:$0]  %s2169, 512, %s2167, %s2154, 128, 128, 8
        $region40: #{tpu_custom_call.1} parent=27 // pred_fallthru
          _
      $region28: #{tpu_custom_call.1} parent=5 // pred_fallthru
        _
      %p2175 = scmp.le.s32.totalorder 2, %s15
      // Predicated region
      $region41: #{tpu_custom_call.1} parent=5 // pred_check
        %p2176 = pneg %p2175
      $region42: #{tpu_custom_call.1} parent=5 // pred_check_branch
        %2178 = sbr.rel (%p2176) target = $region44
      $region43: #{tpu_custom_call.1} parent=5 // pred_region
        %s2179 = ssub.s32 %s15, 2
        // Predicated region
        $region45: #{tpu_custom_call.1} parent=43 // pred_check
          %p2180 = pneg %p91
        $region46: #{tpu_custom_call.1} parent=43 // pred_check_branch
          %2182 = sbr.rel (%p2180) target = $region48
        $region47: #{tpu_custom_call.1} parent=43 // pred_region
          %s2183 = sand.u32 %s76, 1
          %s2184 = scalar_lea.sflag [#allocation5], %s2183
          %s2185 = sand.u32 %s76, 1
          %s2186 = smul.addr %s2185, 32
          %s2187 = scalar_lea.vmem [#allocation8], %s2186
          %2188 = dma.done %s2184, 512
        $region48: #{tpu_custom_call.1} parent=43 // pred_fallthru
          _
      $region44: #{tpu_custom_call.1} parent=5 // pred_fallthru
        _
    $region6: #{tpu_custom_call.1} parent=1 // loop_footer
      %s19 = sadd.s32 1, %s15
    $region7: #{tpu_custom_call.1} parent=1 // loop_footer_branch
      %14 = sbr.rel target = $region3
    $region8: #{tpu_custom_call.1} parent=1 // loop_exit
      _
    %2189 = vsyncpa [#allocation4], 1
    %s2190 = scalar_lea.sflag [#allocation4], 1
    %2191 = vsyncpa %s2190, 1
    %2192 = vsyncpa [#allocation5], 1
    %s2193 = scalar_lea.sflag [#allocation5], 1
    %2194 = vsyncpa %s2193, 1
    %2195 = vsyncpa [#allocation6], 1
    %s2196 = scalar_lea.sflag [#allocation6], 1
    %2197 = vsyncpa %s2196, 1

</llo_original>
